<compile_context>
chip_gen: v7x
topology: tpu7x:2x2x1
jax: 0.10.0
libtpu: 0.0.40
codegen_flags: <defaults>
</compile_context>

<pallas_src>
import functools

import jax
import jax.numpy as jnp
from jax.experimental import pallas as pl
from jax.experimental.pallas import tpu as pltpu

_FC_PAD_N = 128                  # lane-dense FC output width
_VMEM_LIMIT = 32 * 1024 * 1024   # safe on v5e / v6e / v7x; actual use is ~1 MiB


# ----------------------------------------------------------------------------
# Fused kernel: one image per grid step
# ----------------------------------------------------------------------------
def _fused_cnn_kernel(x_ref, w1_ref, b1_ref, w2_ref, b2_ref, w3_ref, b3_ref,
                      fcw_ref, fcb_ref, o_ref,
                      nb2_ref, nb3_ref, t1_ref, t2_ref, t3_ref, *, H, W):
    # x_ref:   ((H+2)*W, 9)   bf16  K-folded, zero-padded layer-1 input
    # wN_ref:  (3, 3*Cin, Cout) bf16 folded conv weights; bN_ref: (1, Cout) f32
    # fcw_ref: (S, 64, 128)   bf16  per-spatial-position FC weights (S = Hf*Wf)
    # fcb_ref: (1, 128) f32;  o_ref: (1, 128) f32 (lane-dense output block)
    # nb2/nb3: K-folded VMEM buffers for layer-2/3 inputs; t1..t3: pool scratch

    def conv_relu(read, w_ref, b_ref):
        # 3 MXU matmuls (horizontal taps folded into K), f32 accumulation.
        acc = jnp.dot(read(0), w_ref[0], preferred_element_type=jnp.float32)
        acc = acc + jnp.dot(read(1), w_ref[1], preferred_element_type=jnp.float32)
        acc = acc + jnp.dot(read(2), w_ref[2], preferred_element_type=jnp.float32)
        return jnp.maximum(acc + b_ref[...], 0.0)            # (Hin*Win, Cout) f32

    def pool2x2(acc, t_ref, hin, win):
        # acc rows are (i, j) with j fastest.  Horizontal pool via stride-2
        # reads from VMEM scratch, vertical pool via one shifted max.
        # Returns rows (i, q); valid pooled rows are i = 0, 2, 4, ...
        wout = win // 2
        t_ref[...] = acc
        n = hin * wout
        hp = jnp.maximum(t_ref[pl.ds(0, n, stride=2), :],
                         t_ref[pl.ds(1, n, stride=2), :])      # (hin*wout, C)
        return jnp.maximum(hp[:(hin - 1) * wout, :], hp[wout:, :])

    def scatter_folded(vall, dst_ref, hout, wout, cout):
        # Write pooled row p into the next layer's K-folded input buffer:
        # channel block dj holds the activation shifted by (dj - 1) columns,
        # borders stay zero (buffer was zero-filled).
        for p in range(hout):
            v = vall[2 * p * wout:(2 * p + 1) * wout, :].astype(dst_ref.dtype)
            base = (p + 1) * wout
            dst_ref[base:base + wout, cout:2 * cout] = v              # dj = 1
            dst_ref[base + 1:base + wout, 0:cout] = v[:wout - 1, :]   # dj = 0
            dst_ref[base:base + wout - 1, 2 * cout:3 * cout] = v[1:, :]  # dj = 2

    # zero-fill the folded buffers every step (padding rows/cols must be 0;
    # done per step so megacore sharding on v7x stays correct)
    nb2_ref[...] = jnp.zeros_like(nb2_ref)
    nb3_ref[...] = jnp.zeros_like(nb3_ref)

    h1, w1 = H, W
    h2, w2 = H // 2, W // 2
    h3, w3 = H // 4, W // 4
    hf, wf = H // 8, W // 8

    # ---- layer 1: conv(3->16) + bias + ReLU + pool -------------------------
    acc1 = conv_relu(lambda di: x_ref[pl.ds(di * w1, h1 * w1), :], w1_ref, b1_ref)
    vall1 = pool2x2(acc1, t1_ref, h1, w1)
    scatter_folded(vall1, nb2_ref, h2, w2, 16)

    # ---- layer 2: conv(16->32) + bias + ReLU + pool ------------------------
    acc2 = conv_relu(lambda di: nb2_ref[pl.ds(di * w2, h2 * w2), :], w2_ref, b2_ref)
    vall2 = pool2x2(acc2, t2_ref, h2, w2)
    scatter_folded(vall2, nb3_ref, h3, w3, 32)

    # ---- layer 3: conv(32->64) + bias + ReLU + pool ------------------------
    acc3 = conv_relu(lambda di: nb3_ref[pl.ds(di * w3, h3 * w3), :], w3_ref, b3_ref)
    vall3 = pool2x2(acc3, t3_ref, h3, w3)

    # ---- FC + sigmoid (output lanes padded to 128 -> lane-dense store) -----
    acc_fc = jnp.zeros((1, _FC_PAD_N), jnp.float32)
    for p in range(hf):
        v = vall3[2 * p * wf:(2 * p + 1) * wf, :].astype(jnp.bfloat16)  # (wf, 64)
        for q in range(wf):
            acc_fc = acc_fc + jnp.dot(v[q:q + 1, :], fcw_ref[p * wf + q],
                                      preferred_element_type=jnp.float32)
    o_ref[...] = jax.nn.sigmoid(acc_fc + fcb_ref[...])


# ----------------------------------------------------------------------------
# Forward wrapper
# ----------------------------------------------------------------------------
def simple_cnn_forward(x_nchw, kparams, *, num_outputs):
    n, cin, h, w = x_nchw.shape
    assert cin == 3, "SimpleCNN expects 3 input channels"
    assert h % 8 == 0 and w % 8 == 0, "image dims must be divisible by 8"

    # Layout plumbing (pure XLA, cheap): NCHW -> NHWC, pad spatially, fold the
    # 3 horizontal taps into the channel axis, flatten rows.
    x = jnp.transpose(x_nchw, (0, 2, 3, 1))
    xp = jnp.pad(x, ((0, 0), (1, 1), (1, 1), (0, 0)))
    buf1 = jnp.concatenate([xp[:, :, dj:dj + w, :] for dj in range(3)], axis=-1)
    buf1 = buf1.reshape(n, (h + 2) * w, 3 * cin).astype(jnp.bfloat16)

    h2, w2, h3, w3 = h // 2, w // 2, h // 4, w // 4
    s = (h // 8) * (w // 8)
    l1 = (h + 2) * w

    kern = functools.partial(_fused_cnn_kernel, H=h, W=w)
    out = pl.pallas_call(
        kern,
        out_shape=jax.ShapeDtypeStruct((n, 1, _FC_PAD_N), jnp.float32),
        grid=(n,),
        in_specs=[
            pl.BlockSpec((None, l1, 3 * cin), lambda i: (i, 0, 0)),
            pl.BlockSpec((3, 9, 16), lambda i: (0, 0, 0)),
            pl.BlockSpec((1, 16), lambda i: (0, 0)),
            pl.BlockSpec((3, 48, 32), lambda i: (0, 0, 0)),
            pl.BlockSpec((1, 32), lambda i: (0, 0)),
            pl.BlockSpec((3, 96, 64), lambda i: (0, 0, 0)),
            pl.BlockSpec((1, 64), lambda i: (0, 0)),
            pl.BlockSpec((s, 64, _FC_PAD_N), lambda i: (0, 0, 0)),
            pl.BlockSpec((1, _FC_PAD_N), lambda i: (0, 0)),
        ],
        out_specs=pl.BlockSpec((None, 1, _FC_PAD_N), lambda i: (i, 0, 0)),
        scratch_shapes=[
            pltpu.VMEM(((h2 + 2) * w2, 3 * 16), jnp.bfloat16),   # layer-2 input
            pltpu.VMEM(((h3 + 2) * w3, 3 * 32), jnp.bfloat16),   # layer-3 input
            pltpu.VMEM((h * w, 16), jnp.float32),                # pool scratch 1
            pltpu.VMEM((h2 * w2, 32), jnp.float32),              # pool scratch 2
            pltpu.VMEM((h3 * w3, 64), jnp.float32),              # pool scratch 3
        ],
        compiler_params=pltpu.CompilerParams(
            dimension_semantics=("parallel",),
            vmem_limit_bytes=_VMEM_LIMIT,
        ),
    )(buf1, kparams["w1"], kparams["b1"], kparams["w2"], kparams["b2"],
      kparams["w3"], kparams["b3"], kparams["fc_w"], kparams["fc_b"])
    return out.reshape(n, _FC_PAD_N)[:, :num_outputs]


# ----------------------------------------------------------------------------
# Parameters: canonical (PyTorch-layout, f32) + kernel-layout preparation
# ----------------------------------------------------------------------------
def init_params(key, num_outputs, image_size):
    h, w = image_size
    ks = jax.random.split(key, 8)
    return {
        "conv1_w": jax.random.normal(ks[0], (16, 3, 3, 3), jnp.float32) * 0.1,
        "conv1_b": jax.random.normal(ks[1], (16,), jnp.float32) * 0.1,
        "conv2_w": jax.random.normal(ks[2], (32, 16, 3, 3), jnp.float32) * 0.1,
        "conv2_b": jax.random.normal(ks[3], (32,), jnp.float32) * 0.1,
        "conv3_w": jax.random.normal(ks[4], (64, 32, 3, 3), jnp.float32) * 0.1,
        "conv3_b": jax.random.normal(ks[5], (64,), jnp.float32) * 0.1,
        "fc_w": jax.random.normal(
            ks[6], (num_outputs, 64 * (h // 8) * (w // 8)), jnp.float32) * 0.05,
        "fc_b": jax.random.normal(ks[7], (num_outputs,), jnp.float32) * 0.1,
    }


def _fold_conv_weight(w_oihw):
    # (Cout, Cin, 3, 3) torch layout -> (ki, 3*Cin, Cout), rows ordered (kj, c)
    cout, cin = w_oihw.shape[0], w_oihw.shape[1]
    w = jnp.transpose(w_oihw, (2, 3, 1, 0))            # (ki, kj, Cin, Cout)
    return w.reshape(3, 3 * cin, cout).astype(jnp.bfloat16)


def prepare_kernel_params(p, num_outputs, image_size):
    assert num_outputs <= _FC_PAD_N
    h, w = image_size
    hf, wf = h // 8, w // 8
    s = hf * wf
    # fc.weight is (num_out, 64*hf*wf) over NCHW flatten (c, p, q); re-index to
    # per-spatial-position blocks fcw[s = p*wf + q, c, n], pad n to 128 lanes.
    fcw = p["fc_w"].reshape(num_outputs, 64, hf, wf)
    fcw = jnp.transpose(fcw, (2, 3, 1, 0)).reshape(s, 64, num_outputs)
    fcw = jnp.pad(fcw, ((0, 0), (0, 0), (0, _FC_PAD_N - num_outputs)))
    fcb = jnp.pad(p["fc_b"], (0, _FC_PAD_N - num_outputs)).reshape(1, _FC_PAD_N)
    return {
        "w1": _fold_conv_weight(p["conv1_w"]),
        "b1": p["conv1_b"].reshape(1, 16).astype(jnp.float32),
        "w2": _fold_conv_weight(p["conv2_w"]),
        "b2": p["conv2_b"].reshape(1, 32).astype(jnp.float32),
        "w3": _fold_conv_weight(p["conv3_w"]),
        "b3": p["conv3_b"].reshape(1, 64).astype(jnp.float32),
        "fc_w": fcw.astype(jnp.bfloat16),
        "fc_b": fcb.astype(jnp.float32),
    }


# ----------------------------------------------------------------------------
# Pure-XLA f32 reference (mirrors the PyTorch module) for correctness check
# ----------------------------------------------------------------------------
def reference_forward(x_nchw, p, num_outputs):
    x = x_nchw
    for i in (1, 2, 3):
        x = jax.lax.conv_general_dilated(
            x, p[f"conv{i}_w"], window_strides=(1, 1),
            padding=((1, 1), (1, 1)),
            dimension_numbers=("NCHW", "OIHW", "NCHW"))
        x = jnp.maximum(x + p[f"conv{i}_b"][None, :, None, None], 0.0)
        x = jax.lax.reduce_window(x, -jnp.inf, jax.lax.max,
                                  (1, 1, 2, 2), (1, 1, 2, 2), "VALID")
    x = x.reshape(x.shape[0], -1)
    return jax.nn.sigmoid(x @ p["fc_w"].T + p["fc_b"])


if __name__ == "__main__":
    batch = 2
    image_size = (16, 16)   # must be divisible by 8 (three 2x2 pools)
    num_outputs = 4

    key = jax.random.PRNGKey(0)
    k_x, k_p = jax.random.split(key)
    x = jax.random.normal(k_x, (batch, 3, image_size[0], image_size[1]),
                          jnp.float32)
    params = init_params(k_p, num_outputs, image_size)
    kparams = prepare_kernel_params(params, num_outputs, image_size)

    fwd = jax.jit(functools.partial(simple_cnn_forward, num_outputs=num_outputs))
    out = jax.block_until_ready(fwd(x, kparams))
    assert out.shape == (batch, num_outputs)

    ref = jax.block_until_ready(reference_forward(x, params, num_outputs))
    max_err = float(jnp.max(jnp.abs(out.astype(jnp.float32) - ref)))
    assert max_err < 2e-2, f"max |pallas - reference| = {max_err}"
    assert bool(jnp.all((out >= 0.0) & (out <= 1.0)))
    print("KERNEL_OK")
</pallas_src>

<mosaic_0001>
module attributes {stable_mosaic.version = 11 : i64} {
  func.func @_fused_cnn_kernel(%arg0: i32, %arg1: memref<1x288x9xbf16, #tpu.memory_space<vmem>>, %arg2: memref<3x9x16xbf16, #tpu.memory_space<vmem>>, %arg3: memref<1x16xf32, #tpu.memory_space<vmem>>, %arg4: memref<3x48x32xbf16, #tpu.memory_space<vmem>>, %arg5: memref<1x32xf32, #tpu.memory_space<vmem>>, %arg6: memref<3x96x64xbf16, #tpu.memory_space<vmem>>, %arg7: memref<1x64xf32, #tpu.memory_space<vmem>>, %arg8: memref<4x64x128xbf16, #tpu.memory_space<vmem>>, %arg9: memref<1x128xf32, #tpu.memory_space<vmem>>, %arg10: memref<1x1x128xf32, #tpu.memory_space<vmem>>, %arg11: memref<80x48xbf16, #tpu.memory_space<vmem>>, %arg12: memref<24x96xbf16, #tpu.memory_space<vmem>>, %arg13: memref<256x16xf32, #tpu.memory_space<vmem>>, %arg14: memref<64x32xf32, #tpu.memory_space<vmem>>, %arg15: memref<16x64xf32, #tpu.memory_space<vmem>>) attributes {dimension_semantics = [#tpu.dimension_semantics<parallel>], iteration_bounds = array<i64: 2>, scalar_prefetch = 0 : i64, scratch_operands = 5 : i64, tpu.core_type = #tpu.core_type<tc>, window_params = [{transform_indices = @transform_0, window_bounds = array<i64: 1, 288, 9>}, {pipeline_mode = #tpu.pipeline_mode<synchronous>, transform_indices = @transform_1, window_bounds = array<i64: 3, 9, 16>}, {pipeline_mode = #tpu.pipeline_mode<synchronous>, transform_indices = @transform_2, window_bounds = array<i64: 1, 16>}, {pipeline_mode = #tpu.pipeline_mode<synchronous>, transform_indices = @transform_3, window_bounds = array<i64: 3, 48, 32>}, {pipeline_mode = #tpu.pipeline_mode<synchronous>, transform_indices = @transform_4, window_bounds = array<i64: 1, 32>}, {pipeline_mode = #tpu.pipeline_mode<synchronous>, transform_indices = @transform_5, window_bounds = array<i64: 3, 96, 64>}, {pipeline_mode = #tpu.pipeline_mode<synchronous>, transform_indices = @transform_6, window_bounds = array<i64: 1, 64>}, {pipeline_mode = #tpu.pipeline_mode<synchronous>, transform_indices = @transform_7, window_bounds = array<i64: 4, 64, 128>}, {pipeline_mode = #tpu.pipeline_mode<synchronous>, transform_indices = @transform_8, window_bounds = array<i64: 1, 128>}, {transform_indices = @transform_9, window_bounds = array<i64: 1, 1, 128>}]} {
    %cst = arith.constant 0.000000e+00 : bf16
    %0 = vector.broadcast %cst : bf16 to vector<80x48xbf16>
    %c0 = arith.constant 0 : index
    %c0_0 = arith.constant 0 : index
    %1 = vector.load %arg11[%c0, %c0_0] : memref<80x48xbf16, #tpu.memory_space<vmem>>, vector<80x48xbf16>
    tpu.vector_store %arg11[%c0, %c0_0], %0 {strides = array<i32>} : memref<80x48xbf16, #tpu.memory_space<vmem>>, vector<80x48xbf16>,
    %cst_1 = arith.constant 0.000000e+00 : bf16
    %2 = vector.broadcast %cst_1 : bf16 to vector<24x96xbf16>
    %c0_2 = arith.constant 0 : index
    %c0_3 = arith.constant 0 : index
    %3 = vector.load %arg12[%c0_2, %c0_3] : memref<24x96xbf16, #tpu.memory_space<vmem>>, vector<24x96xbf16>
    tpu.vector_store %arg12[%c0_2, %c0_3], %2 {strides = array<i32>} : memref<24x96xbf16, #tpu.memory_space<vmem>>, vector<24x96xbf16>,
    %c0_4 = arith.constant 0 : index
    %c0_5 = arith.constant 0 : index
    %c0_6 = arith.constant 0 : index
    %4 = vector.load %arg1[%c0_4, %c0_5, %c0_6] : memref<1x288x9xbf16, #tpu.memory_space<vmem>>, vector<1x256x9xbf16>
    %5 = vector.shape_cast %4 : vector<1x256x9xbf16> to vector<256x9xbf16>
    %c0_7 = arith.constant 0 : index
    %c0_8 = arith.constant 0 : index
    %c0_9 = arith.constant 0 : index
    %6 = vector.load %arg2[%c0_7, %c0_8, %c0_9] : memref<3x9x16xbf16, #tpu.memory_space<vmem>>, vector<1x9x16xbf16>
    %7 = vector.shape_cast %6 : vector<1x9x16xbf16> to vector<9x16xbf16>
    %cst_10 = arith.constant dense<0.000000e+00> : vector<256x16xf32>
    %8 = tpu.matmul %5, %7, %cst_10 {dimension_numbers = #tpu.dot_dimension_numbers<[1], [0], [0], [1], [0, 0, 1, 1], [], []>} : vector<256x9xbf16>, vector<9x16xbf16>, vector<256x16xf32> -> vector<256x16xf32>
    %c0_11 = arith.constant 0 : index
    %c16 = arith.constant 16 : index
    %c0_12 = arith.constant 0 : index
    %9 = vector.load %arg1[%c0_11, %c16, %c0_12] : memref<1x288x9xbf16, #tpu.memory_space<vmem>>, vector<1x256x9xbf16>
    %10 = vector.shape_cast %9 : vector<1x256x9xbf16> to vector<256x9xbf16>
    %c1 = arith.constant 1 : index
    %c0_13 = arith.constant 0 : index
    %c0_14 = arith.constant 0 : index
    %11 = vector.load %arg2[%c1, %c0_13, %c0_14] : memref<3x9x16xbf16, #tpu.memory_space<vmem>>, vector<1x9x16xbf16>
    %12 = vector.shape_cast %11 : vector<1x9x16xbf16> to vector<9x16xbf16>
    %cst_15 = arith.constant dense<0.000000e+00> : vector<256x16xf32>
    %13 = tpu.matmul %10, %12, %cst_15 {dimension_numbers = #tpu.dot_dimension_numbers<[1], [0], [0], [1], [0, 0, 1, 1], [], []>} : vector<256x9xbf16>, vector<9x16xbf16>, vector<256x16xf32> -> vector<256x16xf32>
    %14 = arith.addf %8, %13 : vector<256x16xf32>
    %c0_16 = arith.constant 0 : index
    %c32 = arith.constant 32 : index
    %c0_17 = arith.constant 0 : index
    %15 = vector.load %arg1[%c0_16, %c32, %c0_17] : memref<1x288x9xbf16, #tpu.memory_space<vmem>>, vector<1x256x9xbf16>
    %16 = vector.shape_cast %15 : vector<1x256x9xbf16> to vector<256x9xbf16>
    %c2 = arith.constant 2 : index
    %c0_18 = arith.constant 0 : index
    %c0_19 = arith.constant 0 : index
    %17 = vector.load %arg2[%c2, %c0_18, %c0_19] : memref<3x9x16xbf16, #tpu.memory_space<vmem>>, vector<1x9x16xbf16>
    %18 = vector.shape_cast %17 : vector<1x9x16xbf16> to vector<9x16xbf16>
    %cst_20 = arith.constant dense<0.000000e+00> : vector<256x16xf32>
    %19 = tpu.matmul %16, %18, %cst_20 {dimension_numbers = #tpu.dot_dimension_numbers<[1], [0], [0], [1], [0, 0, 1, 1], [], []>} : vector<256x9xbf16>, vector<9x16xbf16>, vector<256x16xf32> -> vector<256x16xf32>
    %20 = arith.addf %14, %19 : vector<256x16xf32>
    %c0_21 = arith.constant 0 : index
    %c0_22 = arith.constant 0 : index
    %21 = vector.load %arg3[%c0_21, %c0_22] : memref<1x16xf32, #tpu.memory_space<vmem>>, vector<1x16xf32>
    %22 = vector.broadcast %21 : vector<1x16xf32> to vector<256x16xf32>
    %23 = arith.addf %20, %22 : vector<256x16xf32>
    %cst_23 = arith.constant 0.000000e+00 : f32
    %24 = vector.broadcast %cst_23 : f32 to vector<256x16xf32>
    %25 = arith.maximumf %23, %24 : vector<256x16xf32>
    %c0_24 = arith.constant 0 : index
    %c0_25 = arith.constant 0 : index
    %26 = vector.load %arg13[%c0_24, %c0_25] : memref<256x16xf32, #tpu.memory_space<vmem>>, vector<256x16xf32>
    tpu.vector_store %arg13[%c0_24, %c0_25], %25 {strides = array<i32>} : memref<256x16xf32, #tpu.memory_space<vmem>>, vector<256x16xf32>,
    %c0_26 = arith.constant 0 : index
    %c0_27 = arith.constant 0 : index
    %27 = tpu.strided_load %arg13[%c0_26, %c0_27] {strides = array<i32: 2, 1>} : memref<256x16xf32, #tpu.memory_space<vmem>>, vector<128x16xf32>
    %c1_28 = arith.constant 1 : index
    %c0_29 = arith.constant 0 : index
    %28 = tpu.strided_load %arg13[%c1_28, %c0_29] {strides = array<i32: 2, 1>} : memref<256x16xf32, #tpu.memory_space<vmem>>, vector<128x16xf32>
    %29 = arith.maximumf %27, %28 : vector<128x16xf32>
    %30 = vector.extract_strided_slice %29 {offsets = [0, 0], sizes = [120, 16], strides = [1, 1]} : vector<128x16xf32> to vector<120x16xf32>
    %31 = vector.extract_strided_slice %29 {offsets = [8, 0], sizes = [120, 16], strides = [1, 1]} : vector<128x16xf32> to vector<120x16xf32>
    %32 = arith.maximumf %30, %31 : vector<120x16xf32>
    %33 = vector.extract_strided_slice %32 {offsets = [0, 0], sizes = [8, 16], strides = [1, 1]} : vector<120x16xf32> to vector<8x16xf32>
    %34 = arith.truncf %33 : vector<8x16xf32> to vector<8x16xbf16>
    %c8 = arith.constant 8 : index
    %c16_30 = arith.constant 16 : index
    %35 = vector.load %arg11[%c8, %c16_30] : memref<80x48xbf16, #tpu.memory_space<vmem>>, vector<8x16xbf16>
    tpu.vector_store %arg11[%c8, %c16_30], %34 {strides = array<i32>} : memref<80x48xbf16, #tpu.memory_space<vmem>>, vector<8x16xbf16>,
    %36 = vector.extract_strided_slice %34 {offsets = [0, 0], sizes = [7, 16], strides = [1, 1]} : vector<8x16xbf16> to vector<7x16xbf16>
    %c9 = arith.constant 9 : index
    %c0_31 = arith.constant 0 : index
    %37 = vector.load %arg11[%c9, %c0_31] : memref<80x48xbf16, #tpu.memory_space<vmem>>, vector<7x16xbf16>
    tpu.vector_store %arg11[%c9, %c0_31], %36 {strides = array<i32>} : memref<80x48xbf16, #tpu.memory_space<vmem>>, vector<7x16xbf16>,
    %38 = vector.extract_strided_slice %34 {offsets = [1, 0], sizes = [7, 16], strides = [1, 1]} : vector<8x16xbf16> to vector<7x16xbf16>
    %c8_32 = arith.constant 8 : index
    %c32_33 = arith.constant 32 : index
    %39 = vector.load %arg11[%c8_32, %c32_33] : memref<80x48xbf16, #tpu.memory_space<vmem>>, vector<7x16xbf16>
    tpu.vector_store %arg11[%c8_32, %c32_33], %38 {strides = array<i32>} : memref<80x48xbf16, #tpu.memory_space<vmem>>, vector<7x16xbf16>,
    %40 = vector.extract_strided_slice %32 {offsets = [16, 0], sizes = [8, 16], strides = [1, 1]} : vector<120x16xf32> to vector<8x16xf32>
    %41 = arith.truncf %40 : vector<8x16xf32> to vector<8x16xbf16>
    %c16_34 = arith.constant 16 : index
    %c16_35 = arith.constant 16 : index
    %42 = vector.load %arg11[%c16_34, %c16_35] : memref<80x48xbf16, #tpu.memory_space<vmem>>, vector<8x16xbf16>
    tpu.vector_store %arg11[%c16_34, %c16_35], %41 {strides = array<i32>} : memref<80x48xbf16, #tpu.memory_space<vmem>>, vector<8x16xbf16>,
    %43 = vector.extract_strided_slice %41 {offsets = [0, 0], sizes = [7, 16], strides = [1, 1]} : vector<8x16xbf16> to vector<7x16xbf16>
    %c17 = arith.constant 17 : index
    %c0_36 = arith.constant 0 : index
    %44 = vector.load %arg11[%c17, %c0_36] : memref<80x48xbf16, #tpu.memory_space<vmem>>, vector<7x16xbf16>
    tpu.vector_store %arg11[%c17, %c0_36], %43 {strides = array<i32>} : memref<80x48xbf16, #tpu.memory_space<vmem>>, vector<7x16xbf16>,
    %45 = vector.extract_strided_slice %41 {offsets = [1, 0], sizes = [7, 16], strides = [1, 1]} : vector<8x16xbf16> to vector<7x16xbf16>
    %c16_37 = arith.constant 16 : index
    %c32_38 = arith.constant 32 : index
    %46 = vector.load %arg11[%c16_37, %c32_38] : memref<80x48xbf16, #tpu.memory_space<vmem>>, vector<7x16xbf16>
    tpu.vector_store %arg11[%c16_37, %c32_38], %45 {strides = array<i32>} : memref<80x48xbf16, #tpu.memory_space<vmem>>, vector<7x16xbf16>,
    %47 = vector.extract_strided_slice %32 {offsets = [32, 0], sizes = [8, 16], strides = [1, 1]} : vector<120x16xf32> to vector<8x16xf32>
    %48 = arith.truncf %47 : vector<8x16xf32> to vector<8x16xbf16>
    %c24 = arith.constant 24 : index
    %c16_39 = arith.constant 16 : index
    %49 = vector.load %arg11[%c24, %c16_39] : memref<80x48xbf16, #tpu.memory_space<vmem>>, vector<8x16xbf16>
    tpu.vector_store %arg11[%c24, %c16_39], %48 {strides = array<i32>} : memref<80x48xbf16, #tpu.memory_space<vmem>>, vector<8x16xbf16>,
    %50 = vector.extract_strided_slice %48 {offsets = [0, 0], sizes = [7, 16], strides = [1, 1]} : vector<8x16xbf16> to vector<7x16xbf16>
    %c25 = arith.constant 25 : index
    %c0_40 = arith.constant 0 : index
    %51 = vector.load %arg11[%c25, %c0_40] : memref<80x48xbf16, #tpu.memory_space<vmem>>, vector<7x16xbf16>
    tpu.vector_store %arg11[%c25, %c0_40], %50 {strides = array<i32>} : memref<80x48xbf16, #tpu.memory_space<vmem>>, vector<7x16xbf16>,
    %52 = vector.extract_strided_slice %48 {offsets = [1, 0], sizes = [7, 16], strides = [1, 1]} : vector<8x16xbf16> to vector<7x16xbf16>
    %c24_41 = arith.constant 24 : index
    %c32_42 = arith.constant 32 : index
    %53 = vector.load %arg11[%c24_41, %c32_42] : memref<80x48xbf16, #tpu.memory_space<vmem>>, vector<7x16xbf16>
    tpu.vector_store %arg11[%c24_41, %c32_42], %52 {strides = array<i32>} : memref<80x48xbf16, #tpu.memory_space<vmem>>, vector<7x16xbf16>,
    %54 = vector.extract_strided_slice %32 {offsets = [48, 0], sizes = [8, 16], strides = [1, 1]} : vector<120x16xf32> to vector<8x16xf32>
    %55 = arith.truncf %54 : vector<8x16xf32> to vector<8x16xbf16>
    %c32_43 = arith.constant 32 : index
    %c16_44 = arith.constant 16 : index
    %56 = vector.load %arg11[%c32_43, %c16_44] : memref<80x48xbf16, #tpu.memory_space<vmem>>, vector<8x16xbf16>
    tpu.vector_store %arg11[%c32_43, %c16_44], %55 {strides = array<i32>} : memref<80x48xbf16, #tpu.memory_space<vmem>>, vector<8x16xbf16>,
    %57 = vector.extract_strided_slice %55 {offsets = [0, 0], sizes = [7, 16], strides = [1, 1]} : vector<8x16xbf16> to vector<7x16xbf16>
    %c33 = arith.constant 33 : index
    %c0_45 = arith.constant 0 : index
    %58 = vector.load %arg11[%c33, %c0_45] : memref<80x48xbf16, #tpu.memory_space<vmem>>, vector<7x16xbf16>
    tpu.vector_store %arg11[%c33, %c0_45], %57 {strides = array<i32>} : memref<80x48xbf16, #tpu.memory_space<vmem>>, vector<7x16xbf16>,
    %59 = vector.extract_strided_slice %55 {offsets = [1, 0], sizes = [7, 16], strides = [1, 1]} : vector<8x16xbf16> to vector<7x16xbf16>
    %c32_46 = arith.constant 32 : index
    %c32_47 = arith.constant 32 : index
    %60 = vector.load %arg11[%c32_46, %c32_47] : memref<80x48xbf16, #tpu.memory_space<vmem>>, vector<7x16xbf16>
    tpu.vector_store %arg11[%c32_46, %c32_47], %59 {strides = array<i32>} : memref<80x48xbf16, #tpu.memory_space<vmem>>, vector<7x16xbf16>,
    %61 = vector.extract_strided_slice %32 {offsets = [64, 0], sizes = [8, 16], strides = [1, 1]} : vector<120x16xf32> to vector<8x16xf32>
    %62 = arith.truncf %61 : vector<8x16xf32> to vector<8x16xbf16>
    %c40 = arith.constant 40 : index
    %c16_48 = arith.constant 16 : index
    %63 = vector.load %arg11[%c40, %c16_48] : memref<80x48xbf16, #tpu.memory_space<vmem>>, vector<8x16xbf16>
    tpu.vector_store %arg11[%c40, %c16_48], %62 {strides = array<i32>} : memref<80x48xbf16, #tpu.memory_space<vmem>>, vector<8x16xbf16>,
    %64 = vector.extract_strided_slice %62 {offsets = [0, 0], sizes = [7, 16], strides = [1, 1]} : vector<8x16xbf16> to vector<7x16xbf16>
    %c41 = arith.constant 41 : index
    %c0_49 = arith.constant 0 : index
    %65 = vector.load %arg11[%c41, %c0_49] : memref<80x48xbf16, #tpu.memory_space<vmem>>, vector<7x16xbf16>
    tpu.vector_store %arg11[%c41, %c0_49], %64 {strides = array<i32>} : memref<80x48xbf16, #tpu.memory_space<vmem>>, vector<7x16xbf16>,
    %66 = vector.extract_strided_slice %62 {offsets = [1, 0], sizes = [7, 16], strides = [1, 1]} : vector<8x16xbf16> to vector<7x16xbf16>
    %c40_50 = arith.constant 40 : index
    %c32_51 = arith.constant 32 : index
    %67 = vector.load %arg11[%c40_50, %c32_51] : memref<80x48xbf16, #tpu.memory_space<vmem>>, vector<7x16xbf16>
    tpu.vector_store %arg11[%c40_50, %c32_51], %66 {strides = array<i32>} : memref<80x48xbf16, #tpu.memory_space<vmem>>, vector<7x16xbf16>,
    %68 = vector.extract_strided_slice %32 {offsets = [80, 0], sizes = [8, 16], strides = [1, 1]} : vector<120x16xf32> to vector<8x16xf32>
    %69 = arith.truncf %68 : vector<8x16xf32> to vector<8x16xbf16>
    %c48 = arith.constant 48 : index
    %c16_52 = arith.constant 16 : index
    %70 = vector.load %arg11[%c48, %c16_52] : memref<80x48xbf16, #tpu.memory_space<vmem>>, vector<8x16xbf16>
    tpu.vector_store %arg11[%c48, %c16_52], %69 {strides = array<i32>} : memref<80x48xbf16, #tpu.memory_space<vmem>>, vector<8x16xbf16>,
    %71 = vector.extract_strided_slice %69 {offsets = [0, 0], sizes = [7, 16], strides = [1, 1]} : vector<8x16xbf16> to vector<7x16xbf16>
    %c49 = arith.constant 49 : index
    %c0_53 = arith.constant 0 : index
    %72 = vector.load %arg11[%c49, %c0_53] : memref<80x48xbf16, #tpu.memory_space<vmem>>, vector<7x16xbf16>
    tpu.vector_store %arg11[%c49, %c0_53], %71 {strides = array<i32>} : memref<80x48xbf16, #tpu.memory_space<vmem>>, vector<7x16xbf16>,
    %73 = vector.extract_strided_slice %69 {offsets = [1, 0], sizes = [7, 16], strides = [1, 1]} : vector<8x16xbf16> to vector<7x16xbf16>
    %c48_54 = arith.constant 48 : index
    %c32_55 = arith.constant 32 : index
    %74 = vector.load %arg11[%c48_54, %c32_55] : memref<80x48xbf16, #tpu.memory_space<vmem>>, vector<7x16xbf16>
    tpu.vector_store %arg11[%c48_54, %c32_55], %73 {strides = array<i32>} : memref<80x48xbf16, #tpu.memory_space<vmem>>, vector<7x16xbf16>,
    %75 = vector.extract_strided_slice %32 {offsets = [96, 0], sizes = [8, 16], strides = [1, 1]} : vector<120x16xf32> to vector<8x16xf32>
    %76 = arith.truncf %75 : vector<8x16xf32> to vector<8x16xbf16>
    %c56 = arith.constant 56 : index
    %c16_56 = arith.constant 16 : index
    %77 = vector.load %arg11[%c56, %c16_56] : memref<80x48xbf16, #tpu.memory_space<vmem>>, vector<8x16xbf16>
    tpu.vector_store %arg11[%c56, %c16_56], %76 {strides = array<i32>} : memref<80x48xbf16, #tpu.memory_space<vmem>>, vector<8x16xbf16>,
    %78 = vector.extract_strided_slice %76 {offsets = [0, 0], sizes = [7, 16], strides = [1, 1]} : vector<8x16xbf16> to vector<7x16xbf16>
    %c57 = arith.constant 57 : index
    %c0_57 = arith.constant 0 : index
    %79 = vector.load %arg11[%c57, %c0_57] : memref<80x48xbf16, #tpu.memory_space<vmem>>, vector<7x16xbf16>
    tpu.vector_store %arg11[%c57, %c0_57], %78 {strides = array<i32>} : memref<80x48xbf16, #tpu.memory_space<vmem>>, vector<7x16xbf16>,
    %80 = vector.extract_strided_slice %76 {offsets = [1, 0], sizes = [7, 16], strides = [1, 1]} : vector<8x16xbf16> to vector<7x16xbf16>
    %c56_58 = arith.constant 56 : index
    %c32_59 = arith.constant 32 : index
    %81 = vector.load %arg11[%c56_58, %c32_59] : memref<80x48xbf16, #tpu.memory_space<vmem>>, vector<7x16xbf16>
    tpu.vector_store %arg11[%c56_58, %c32_59], %80 {strides = array<i32>} : memref<80x48xbf16, #tpu.memory_space<vmem>>, vector<7x16xbf16>,
    %82 = vector.extract_strided_slice %32 {offsets = [112, 0], sizes = [8, 16], strides = [1, 1]} : vector<120x16xf32> to vector<8x16xf32>
    %83 = arith.truncf %82 : vector<8x16xf32> to vector<8x16xbf16>
    %c64 = arith.constant 64 : index
    %c16_60 = arith.constant 16 : index
    %84 = vector.load %arg11[%c64, %c16_60] : memref<80x48xbf16, #tpu.memory_space<vmem>>, vector<8x16xbf16>
    tpu.vector_store %arg11[%c64, %c16_60], %83 {strides = array<i32>} : memref<80x48xbf16, #tpu.memory_space<vmem>>, vector<8x16xbf16>,
    %85 = vector.extract_strided_slice %83 {offsets = [0, 0], sizes = [7, 16], strides = [1, 1]} : vector<8x16xbf16> to vector<7x16xbf16>
    %c65 = arith.constant 65 : index
    %c0_61 = arith.constant 0 : index
    %86 = vector.load %arg11[%c65, %c0_61] : memref<80x48xbf16, #tpu.memory_space<vmem>>, vector<7x16xbf16>
    tpu.vector_store %arg11[%c65, %c0_61], %85 {strides = array<i32>} : memref<80x48xbf16, #tpu.memory_space<vmem>>, vector<7x16xbf16>,
    %87 = vector.extract_strided_slice %83 {offsets = [1, 0], sizes = [7, 16], strides = [1, 1]} : vector<8x16xbf16> to vector<7x16xbf16>
    %c64_62 = arith.constant 64 : index
    %c32_63 = arith.constant 32 : index
    %88 = vector.load %arg11[%c64_62, %c32_63] : memref<80x48xbf16, #tpu.memory_space<vmem>>, vector<7x16xbf16>
    tpu.vector_store %arg11[%c64_62, %c32_63], %87 {strides = array<i32>} : memref<80x48xbf16, #tpu.memory_space<vmem>>, vector<7x16xbf16>,
    %c0_64 = arith.constant 0 : index
    %c0_65 = arith.constant 0 : index
    %89 = vector.load %arg11[%c0_64, %c0_65] : memref<80x48xbf16, #tpu.memory_space<vmem>>, vector<64x48xbf16>
    %c0_66 = arith.constant 0 : index
    %c0_67 = arith.constant 0 : index
    %c0_68 = arith.constant 0 : index
    %90 = vector.load %arg4[%c0_66, %c0_67, %c0_68] : memref<3x48x32xbf16, #tpu.memory_space<vmem>>, vector<1x48x32xbf16>
    %91 = vector.shape_cast %90 : vector<1x48x32xbf16> to vector<48x32xbf16>
    %cst_69 = arith.constant dense<0.000000e+00> : vector<64x32xf32>
    %92 = tpu.matmul %89, %91, %cst_69 {dimension_numbers = #tpu.dot_dimension_numbers<[1], [0], [0], [1], [0, 0, 1, 1], [], []>} : vector<64x48xbf16>, vector<48x32xbf16>, vector<64x32xf32> -> vector<64x32xf32>
    %c8_70 = arith.constant 8 : index
    %c0_71 = arith.constant 0 : index
    %93 = vector.load %arg11[%c8_70, %c0_71] : memref<80x48xbf16, #tpu.memory_space<vmem>>, vector<64x48xbf16>
    %c1_72 = arith.constant 1 : index
    %c0_73 = arith.constant 0 : index
    %c0_74 = arith.constant 0 : index
    %94 = vector.load %arg4[%c1_72, %c0_73, %c0_74] : memref<3x48x32xbf16, #tpu.memory_space<vmem>>, vector<1x48x32xbf16>
    %95 = vector.shape_cast %94 : vector<1x48x32xbf16> to vector<48x32xbf16>
    %cst_75 = arith.constant dense<0.000000e+00> : vector<64x32xf32>
    %96 = tpu.matmul %93, %95, %cst_75 {dimension_numbers = #tpu.dot_dimension_numbers<[1], [0], [0], [1], [0, 0, 1, 1], [], []>} : vector<64x48xbf16>, vector<48x32xbf16>, vector<64x32xf32> -> vector<64x32xf32>
    %97 = arith.addf %92, %96 : vector<64x32xf32>
    %c16_76 = arith.constant 16 : index
    %c0_77 = arith.constant 0 : index
    %98 = vector.load %arg11[%c16_76, %c0_77] : memref<80x48xbf16, #tpu.memory_space<vmem>>, vector<64x48xbf16>
    %c2_78 = arith.constant 2 : index
    %c0_79 = arith.constant 0 : index
    %c0_80 = arith.constant 0 : index
    %99 = vector.load %arg4[%c2_78, %c0_79, %c0_80] : memref<3x48x32xbf16, #tpu.memory_space<vmem>>, vector<1x48x32xbf16>
    %100 = vector.shape_cast %99 : vector<1x48x32xbf16> to vector<48x32xbf16>
    %cst_81 = arith.constant dense<0.000000e+00> : vector<64x32xf32>
    %101 = tpu.matmul %98, %100, %cst_81 {dimension_numbers = #tpu.dot_dimension_numbers<[1], [0], [0], [1], [0, 0, 1, 1], [], []>} : vector<64x48xbf16>, vector<48x32xbf16>, vector<64x32xf32> -> vector<64x32xf32>
    %102 = arith.addf %97, %101 : vector<64x32xf32>
    %c0_82 = arith.constant 0 : index
    %c0_83 = arith.constant 0 : index
    %103 = vector.load %arg5[%c0_82, %c0_83] : memref<1x32xf32, #tpu.memory_space<vmem>>, vector<1x32xf32>
    %104 = vector.broadcast %103 : vector<1x32xf32> to vector<64x32xf32>
    %105 = arith.addf %102, %104 : vector<64x32xf32>
    %cst_84 = arith.constant 0.000000e+00 : f32
    %106 = vector.broadcast %cst_84 : f32 to vector<64x32xf32>
    %107 = arith.maximumf %105, %106 : vector<64x32xf32>
    %c0_85 = arith.constant 0 : index
    %c0_86 = arith.constant 0 : index
    %108 = vector.load %arg14[%c0_85, %c0_86] : memref<64x32xf32, #tpu.memory_space<vmem>>, vector<64x32xf32>
    tpu.vector_store %arg14[%c0_85, %c0_86], %107 {strides = array<i32>} : memref<64x32xf32, #tpu.memory_space<vmem>>, vector<64x32xf32>,
    %c0_87 = arith.constant 0 : index
    %c0_88 = arith.constant 0 : index
    %109 = tpu.strided_load %arg14[%c0_87, %c0_88] {strides = array<i32: 2, 1>} : memref<64x32xf32, #tpu.memory_space<vmem>>, vector<32x32xf32>
    %c1_89 = arith.constant 1 : index
    %c0_90 = arith.constant 0 : index
    %110 = tpu.strided_load %arg14[%c1_89, %c0_90] {strides = array<i32: 2, 1>} : memref<64x32xf32, #tpu.memory_space<vmem>>, vector<32x32xf32>
    %111 = arith.maximumf %109, %110 : vector<32x32xf32>
    %112 = vector.extract_strided_slice %111 {offsets = [0, 0], sizes = [28, 32], strides = [1, 1]} : vector<32x32xf32> to vector<28x32xf32>
    %113 = vector.extract_strided_slice %111 {offsets = [4, 0], sizes = [28, 32], strides = [1, 1]} : vector<32x32xf32> to vector<28x32xf32>
    %114 = arith.maximumf %112, %113 : vector<28x32xf32>
    %115 = vector.extract_strided_slice %114 {offsets = [0, 0], sizes = [4, 32], strides = [1, 1]} : vector<28x32xf32> to vector<4x32xf32>
    %116 = arith.truncf %115 : vector<4x32xf32> to vector<4x32xbf16>
    %c4 = arith.constant 4 : index
    %c32_91 = arith.constant 32 : index
    %117 = vector.load %arg12[%c4, %c32_91] : memref<24x96xbf16, #tpu.memory_space<vmem>>, vector<4x32xbf16>
    tpu.vector_store %arg12[%c4, %c32_91], %116 {strides = array<i32>} : memref<24x96xbf16, #tpu.memory_space<vmem>>, vector<4x32xbf16>,
    %118 = vector.extract_strided_slice %116 {offsets = [0, 0], sizes = [3, 32], strides = [1, 1]} : vector<4x32xbf16> to vector<3x32xbf16>
    %c5 = arith.constant 5 : index
    %c0_92 = arith.constant 0 : index
    %119 = vector.load %arg12[%c5, %c0_92] : memref<24x96xbf16, #tpu.memory_space<vmem>>, vector<3x32xbf16>
    tpu.vector_store %arg12[%c5, %c0_92], %118 {strides = array<i32>} : memref<24x96xbf16, #tpu.memory_space<vmem>>, vector<3x32xbf16>,
    %120 = vector.extract_strided_slice %116 {offsets = [1, 0], sizes = [3, 32], strides = [1, 1]} : vector<4x32xbf16> to vector<3x32xbf16>
    %c4_93 = arith.constant 4 : index
    %c64_94 = arith.constant 64 : index
    %121 = vector.load %arg12[%c4_93, %c64_94] : memref<24x96xbf16, #tpu.memory_space<vmem>>, vector<3x32xbf16>
    tpu.vector_store %arg12[%c4_93, %c64_94], %120 {strides = array<i32>} : memref<24x96xbf16, #tpu.memory_space<vmem>>, vector<3x32xbf16>,
    %122 = vector.extract_strided_slice %114 {offsets = [8, 0], sizes = [4, 32], strides = [1, 1]} : vector<28x32xf32> to vector<4x32xf32>
    %123 = arith.truncf %122 : vector<4x32xf32> to vector<4x32xbf16>
    %c8_95 = arith.constant 8 : index
    %c32_96 = arith.constant 32 : index
    %124 = vector.load %arg12[%c8_95, %c32_96] : memref<24x96xbf16, #tpu.memory_space<vmem>>, vector<4x32xbf16>
    tpu.vector_store %arg12[%c8_95, %c32_96], %123 {strides = array<i32>} : memref<24x96xbf16, #tpu.memory_space<vmem>>, vector<4x32xbf16>,
    %125 = vector.extract_strided_slice %123 {offsets = [0, 0], sizes = [3, 32], strides = [1, 1]} : vector<4x32xbf16> to vector<3x32xbf16>
    %c9_97 = arith.constant 9 : index
    %c0_98 = arith.constant 0 : index
    %126 = vector.load %arg12[%c9_97, %c0_98] : memref<24x96xbf16, #tpu.memory_space<vmem>>, vector<3x32xbf16>
    tpu.vector_store %arg12[%c9_97, %c0_98], %125 {strides = array<i32>} : memref<24x96xbf16, #tpu.memory_space<vmem>>, vector<3x32xbf16>,
    %127 = vector.extract_strided_slice %123 {offsets = [1, 0], sizes = [3, 32], strides = [1, 1]} : vector<4x32xbf16> to vector<3x32xbf16>
    %c8_99 = arith.constant 8 : index
    %c64_100 = arith.constant 64 : index
    %128 = vector.load %arg12[%c8_99, %c64_100] : memref<24x96xbf16, #tpu.memory_space<vmem>>, vector<3x32xbf16>
    tpu.vector_store %arg12[%c8_99, %c64_100], %127 {strides = array<i32>} : memref<24x96xbf16, #tpu.memory_space<vmem>>, vector<3x32xbf16>,
    %129 = vector.extract_strided_slice %114 {offsets = [16, 0], sizes = [4, 32], strides = [1, 1]} : vector<28x32xf32> to vector<4x32xf32>
    %130 = arith.truncf %129 : vector<4x32xf32> to vector<4x32xbf16>
    %c12 = arith.constant 12 : index
    %c32_101 = arith.constant 32 : index
    %131 = vector.load %arg12[%c12, %c32_101] : memref<24x96xbf16, #tpu.memory_space<vmem>>, vector<4x32xbf16>
    tpu.vector_store %arg12[%c12, %c32_101], %130 {strides = array<i32>} : memref<24x96xbf16, #tpu.memory_space<vmem>>, vector<4x32xbf16>,
    %132 = vector.extract_strided_slice %130 {offsets = [0, 0], sizes = [3, 32], strides = [1, 1]} : vector<4x32xbf16> to vector<3x32xbf16>
    %c13 = arith.constant 13 : index
    %c0_102 = arith.constant 0 : index
    %133 = vector.load %arg12[%c13, %c0_102] : memref<24x96xbf16, #tpu.memory_space<vmem>>, vector<3x32xbf16>
    tpu.vector_store %arg12[%c13, %c0_102], %132 {strides = array<i32>} : memref<24x96xbf16, #tpu.memory_space<vmem>>, vector<3x32xbf16>,
    %134 = vector.extract_strided_slice %130 {offsets = [1, 0], sizes = [3, 32], strides = [1, 1]} : vector<4x32xbf16> to vector<3x32xbf16>
    %c12_103 = arith.constant 12 : index
    %c64_104 = arith.constant 64 : index
    %135 = vector.load %arg12[%c12_103, %c64_104] : memref<24x96xbf16, #tpu.memory_space<vmem>>, vector<3x32xbf16>
    tpu.vector_store %arg12[%c12_103, %c64_104], %134 {strides = array<i32>} : memref<24x96xbf16, #tpu.memory_space<vmem>>, vector<3x32xbf16>,
    %136 = vector.extract_strided_slice %114 {offsets = [24, 0], sizes = [4, 32], strides = [1, 1]} : vector<28x32xf32> to vector<4x32xf32>
    %137 = arith.truncf %136 : vector<4x32xf32> to vector<4x32xbf16>
    %c16_105 = arith.constant 16 : index
    %c32_106 = arith.constant 32 : index
    %138 = vector.load %arg12[%c16_105, %c32_106] : memref<24x96xbf16, #tpu.memory_space<vmem>>, vector<4x32xbf16>
    tpu.vector_store %arg12[%c16_105, %c32_106], %137 {strides = array<i32>} : memref<24x96xbf16, #tpu.memory_space<vmem>>, vector<4x32xbf16>,
    %139 = vector.extract_strided_slice %137 {offsets = [0, 0], sizes = [3, 32], strides = [1, 1]} : vector<4x32xbf16> to vector<3x32xbf16>
    %c17_107 = arith.constant 17 : index
    %c0_108 = arith.constant 0 : index
    %140 = vector.load %arg12[%c17_107, %c0_108] : memref<24x96xbf16, #tpu.memory_space<vmem>>, vector<3x32xbf16>
    tpu.vector_store %arg12[%c17_107, %c0_108], %139 {strides = array<i32>} : memref<24x96xbf16, #tpu.memory_space<vmem>>, vector<3x32xbf16>,
    %141 = vector.extract_strided_slice %137 {offsets = [1, 0], sizes = [3, 32], strides = [1, 1]} : vector<4x32xbf16> to vector<3x32xbf16>
    %c16_109 = arith.constant 16 : index
    %c64_110 = arith.constant 64 : index
    %142 = vector.load %arg12[%c16_109, %c64_110] : memref<24x96xbf16, #tpu.memory_space<vmem>>, vector<3x32xbf16>
    tpu.vector_store %arg12[%c16_109, %c64_110], %141 {strides = array<i32>} : memref<24x96xbf16, #tpu.memory_space<vmem>>, vector<3x32xbf16>,
    %c0_111 = arith.constant 0 : index
    %c0_112 = arith.constant 0 : index
    %143 = vector.load %arg12[%c0_111, %c0_112] : memref<24x96xbf16, #tpu.memory_space<vmem>>, vector<16x96xbf16>
    %c0_113 = arith.constant 0 : index
    %c0_114 = arith.constant 0 : index
    %c0_115 = arith.constant 0 : index
    %144 = vector.load %arg6[%c0_113, %c0_114, %c0_115] : memref<3x96x64xbf16, #tpu.memory_space<vmem>>, vector<1x96x64xbf16>
    %145 = vector.shape_cast %144 : vector<1x96x64xbf16> to vector<96x64xbf16>
    %cst_116 = arith.constant dense<0.000000e+00> : vector<16x64xf32>
    %146 = tpu.matmul %143, %145, %cst_116 {dimension_numbers = #tpu.dot_dimension_numbers<[1], [0], [0], [1], [0, 0, 1, 1], [], []>} : vector<16x96xbf16>, vector<96x64xbf16>, vector<16x64xf32> -> vector<16x64xf32>
    %c4_117 = arith.constant 4 : index
    %c0_118 = arith.constant 0 : index
    %147 = vector.load %arg12[%c4_117, %c0_118] : memref<24x96xbf16, #tpu.memory_space<vmem>>, vector<16x96xbf16>
    %c1_119 = arith.constant 1 : index
    %c0_120 = arith.constant 0 : index
    %c0_121 = arith.constant 0 : index
    %148 = vector.load %arg6[%c1_119, %c0_120, %c0_121] : memref<3x96x64xbf16, #tpu.memory_space<vmem>>, vector<1x96x64xbf16>
    %149 = vector.shape_cast %148 : vector<1x96x64xbf16> to vector<96x64xbf16>
    %cst_122 = arith.constant dense<0.000000e+00> : vector<16x64xf32>
    %150 = tpu.matmul %147, %149, %cst_122 {dimension_numbers = #tpu.dot_dimension_numbers<[1], [0], [0], [1], [0, 0, 1, 1], [], []>} : vector<16x96xbf16>, vector<96x64xbf16>, vector<16x64xf32> -> vector<16x64xf32>
    %151 = arith.addf %146, %150 : vector<16x64xf32>
    %c8_123 = arith.constant 8 : index
    %c0_124 = arith.constant 0 : index
    %152 = vector.load %arg12[%c8_123, %c0_124] : memref<24x96xbf16, #tpu.memory_space<vmem>>, vector<16x96xbf16>
    %c2_125 = arith.constant 2 : index
    %c0_126 = arith.constant 0 : index
    %c0_127 = arith.constant 0 : index
    %153 = vector.load %arg6[%c2_125, %c0_126, %c0_127] : memref<3x96x64xbf16, #tpu.memory_space<vmem>>, vector<1x96x64xbf16>
    %154 = vector.shape_cast %153 : vector<1x96x64xbf16> to vector<96x64xbf16>
    %cst_128 = arith.constant dense<0.000000e+00> : vector<16x64xf32>
    %155 = tpu.matmul %152, %154, %cst_128 {dimension_numbers = #tpu.dot_dimension_numbers<[1], [0], [0], [1], [0, 0, 1, 1], [], []>} : vector<16x96xbf16>, vector<96x64xbf16>, vector<16x64xf32> -> vector<16x64xf32>
    %156 = arith.addf %151, %155 : vector<16x64xf32>
    %c0_129 = arith.constant 0 : index
    %c0_130 = arith.constant 0 : index
    %157 = vector.load %arg7[%c0_129, %c0_130] : memref<1x64xf32, #tpu.memory_space<vmem>>, vector<1x64xf32>
    %158 = vector.broadcast %157 : vector<1x64xf32> to vector<16x64xf32>
    %159 = arith.addf %156, %158 : vector<16x64xf32>
    %cst_131 = arith.constant 0.000000e+00 : f32
    %160 = vector.broadcast %cst_131 : f32 to vector<16x64xf32>
    %161 = arith.maximumf %159, %160 : vector<16x64xf32>
    %c0_132 = arith.constant 0 : index
    %c0_133 = arith.constant 0 : index
    %162 = vector.load %arg15[%c0_132, %c0_133] : memref<16x64xf32, #tpu.memory_space<vmem>>, vector<16x64xf32>
    tpu.vector_store %arg15[%c0_132, %c0_133], %161 {strides = array<i32>} : memref<16x64xf32, #tpu.memory_space<vmem>>, vector<16x64xf32>,
    %c0_134 = arith.constant 0 : index
    %c0_135 = arith.constant 0 : index
    %163 = tpu.strided_load %arg15[%c0_134, %c0_135] {strides = array<i32: 2, 1>} : memref<16x64xf32, #tpu.memory_space<vmem>>, vector<8x64xf32>
    %c1_136 = arith.constant 1 : index
    %c0_137 = arith.constant 0 : index
    %164 = tpu.strided_load %arg15[%c1_136, %c0_137] {strides = array<i32: 2, 1>} : memref<16x64xf32, #tpu.memory_space<vmem>>, vector<8x64xf32>
    %165 = arith.maximumf %163, %164 : vector<8x64xf32>
    %166 = vector.extract_strided_slice %165 {offsets = [0, 0], sizes = [6, 64], strides = [1, 1]} : vector<8x64xf32> to vector<6x64xf32>
    %167 = vector.extract_strided_slice %165 {offsets = [2, 0], sizes = [6, 64], strides = [1, 1]} : vector<8x64xf32> to vector<6x64xf32>
    %168 = arith.maximumf %166, %167 : vector<6x64xf32>
    %cst_138 = arith.constant 0.000000e+00 : f32
    %169 = vector.broadcast %cst_138 : f32 to vector<1x128xf32>
    %170 = vector.extract_strided_slice %168 {offsets = [0, 0], sizes = [2, 64], strides = [1, 1]} : vector<6x64xf32> to vector<2x64xf32>
    %171 = arith.truncf %170 : vector<2x64xf32> to vector<2x64xbf16>
    %172 = vector.extract_strided_slice %171 {offsets = [0, 0], sizes = [1, 64], strides = [1, 1]} : vector<2x64xbf16> to vector<1x64xbf16>
    %c0_139 = arith.constant 0 : index
    %c0_140 = arith.constant 0 : index
    %c0_141 = arith.constant 0 : index
    %173 = vector.load %arg8[%c0_139, %c0_140, %c0_141] : memref<4x64x128xbf16, #tpu.memory_space<vmem>>, vector<1x64x128xbf16>
    %174 = vector.shape_cast %173 : vector<1x64x128xbf16> to vector<64x128xbf16>
    %cst_142 = arith.constant dense<0.000000e+00> : vector<1x128xf32>
    %175 = tpu.matmul %172, %174, %cst_142 {dimension_numbers = #tpu.dot_dimension_numbers<[1], [0], [0], [1], [0, 0, 1, 1], [], []>} : vector<1x64xbf16>, vector<64x128xbf16>, vector<1x128xf32> -> vector<1x128xf32>
    %176 = arith.addf %169, %175 : vector<1x128xf32>
    %177 = vector.extract_strided_slice %171 {offsets = [1, 0], sizes = [1, 64], strides = [1, 1]} : vector<2x64xbf16> to vector<1x64xbf16>
    %c1_143 = arith.constant 1 : index
    %c0_144 = arith.constant 0 : index
    %c0_145 = arith.constant 0 : index
    %178 = vector.load %arg8[%c1_143, %c0_144, %c0_145] : memref<4x64x128xbf16, #tpu.memory_space<vmem>>, vector<1x64x128xbf16>
    %179 = vector.shape_cast %178 : vector<1x64x128xbf16> to vector<64x128xbf16>
    %cst_146 = arith.constant dense<0.000000e+00> : vector<1x128xf32>
    %180 = tpu.matmul %177, %179, %cst_146 {dimension_numbers = #tpu.dot_dimension_numbers<[1], [0], [0], [1], [0, 0, 1, 1], [], []>} : vector<1x64xbf16>, vector<64x128xbf16>, vector<1x128xf32> -> vector<1x128xf32>
    %181 = arith.addf %176, %180 : vector<1x128xf32>
    %182 = vector.extract_strided_slice %168 {offsets = [4, 0], sizes = [2, 64], strides = [1, 1]} : vector<6x64xf32> to vector<2x64xf32>
    %183 = arith.truncf %182 : vector<2x64xf32> to vector<2x64xbf16>
    %184 = vector.extract_strided_slice %183 {offsets = [0, 0], sizes = [1, 64], strides = [1, 1]} : vector<2x64xbf16> to vector<1x64xbf16>
    %c2_147 = arith.constant 2 : index
    %c0_148 = arith.constant 0 : index
    %c0_149 = arith.constant 0 : index
    %185 = vector.load %arg8[%c2_147, %c0_148, %c0_149] : memref<4x64x128xbf16, #tpu.memory_space<vmem>>, vector<1x64x128xbf16>
    %186 = vector.shape_cast %185 : vector<1x64x128xbf16> to vector<64x128xbf16>
    %cst_150 = arith.constant dense<0.000000e+00> : vector<1x128xf32>
    %187 = tpu.matmul %184, %186, %cst_150 {dimension_numbers = #tpu.dot_dimension_numbers<[1], [0], [0], [1], [0, 0, 1, 1], [], []>} : vector<1x64xbf16>, vector<64x128xbf16>, vector<1x128xf32> -> vector<1x128xf32>
    %188 = arith.addf %181, %187 : vector<1x128xf32>
    %189 = vector.extract_strided_slice %183 {offsets = [1, 0], sizes = [1, 64], strides = [1, 1]} : vector<2x64xbf16> to vector<1x64xbf16>
    %c3 = arith.constant 3 : index
    %c0_151 = arith.constant 0 : index
    %c0_152 = arith.constant 0 : index
    %190 = vector.load %arg8[%c3, %c0_151, %c0_152] : memref<4x64x128xbf16, #tpu.memory_space<vmem>>, vector<1x64x128xbf16>
    %191 = vector.shape_cast %190 : vector<1x64x128xbf16> to vector<64x128xbf16>
    %cst_153 = arith.constant dense<0.000000e+00> : vector<1x128xf32>
    %192 = tpu.matmul %189, %191, %cst_153 {dimension_numbers = #tpu.dot_dimension_numbers<[1], [0], [0], [1], [0, 0, 1, 1], [], []>} : vector<1x64xbf16>, vector<64x128xbf16>, vector<1x128xf32> -> vector<1x128xf32>
    %193 = arith.addf %188, %192 : vector<1x128xf32>
    %c0_154 = arith.constant 0 : index
    %c0_155 = arith.constant 0 : index
    %194 = vector.load %arg9[%c0_154, %c0_155] : memref<1x128xf32, #tpu.memory_space<vmem>>, vector<1x128xf32>
    %195 = arith.addf %193, %194 : vector<1x128xf32>
    %196 = arith.negf %195 : vector<1x128xf32>
    %197 = math.exp %196 : vector<1x128xf32>
    %cst_156 = arith.constant 1.000000e+00 : f32
    %198 = vector.broadcast %cst_156 : f32 to vector<1x128xf32>
    %199 = arith.addf %198, %197 : vector<1x128xf32>
    %200 = arith.divf %198, %199 : vector<1x128xf32>
    %c0_157 = arith.constant 0 : index
    %c0_158 = arith.constant 0 : index
    %c0_159 = arith.constant 0 : index
    %201 = vector.load %arg10[%c0_157, %c0_158, %c0_159] : memref<1x1x128xf32, #tpu.memory_space<vmem>>, vector<1x1x128xf32>
    %202 = vector.shape_cast %201 : vector<1x1x128xf32> to vector<1x128xf32>
    %203 = vector.shape_cast %200 : vector<1x128xf32> to vector<1x1x128xf32>
    tpu.vector_store %arg10[%c0_157, %c0_158, %c0_159], %203 {strides = array<i32>} : memref<1x1x128xf32, #tpu.memory_space<vmem>>, vector<1x1x128xf32>,
    return
  }
  func.func @transform_0(%arg0: i32) -> (i32, i32, i32) {
    %c0_i32 = arith.constant 0 : i32
    %c0_i32_0 = arith.constant 0 : i32
    %c0_i32_1 = arith.constant 0 : i32
    return %arg0, %c0_i32, %c0_i32_0 : i32, i32, i32
  }
  func.func @transform_1(%arg0: i32) -> (i32, i32, i32) {
    %c0_i32 = arith.constant 0 : i32
    %c0_i32_0 = arith.constant 0 : i32
    %c0_i32_1 = arith.constant 0 : i32
    %c0_i32_2 = arith.constant 0 : i32
    return %c0_i32, %c0_i32_0, %c0_i32_1 : i32, i32, i32
  }
  func.func @transform_2(%arg0: i32) -> (i32, i32) {
    %c0_i32 = arith.constant 0 : i32
    %c0_i32_0 = arith.constant 0 : i32
    %c0_i32_1 = arith.constant 0 : i32
    return %c0_i32, %c0_i32_0 : i32, i32
  }
  func.func @transform_3(%arg0: i32) -> (i32, i32, i32) {
    %c0_i32 = arith.constant 0 : i32
    %c0_i32_0 = arith.constant 0 : i32
    %c0_i32_1 = arith.constant 0 : i32
    %c0_i32_2 = arith.constant 0 : i32
    return %c0_i32, %c0_i32_0, %c0_i32_1 : i32, i32, i32
  }
  func.func @transform_4(%arg0: i32) -> (i32, i32) {
    %c0_i32 = arith.constant 0 : i32
    %c0_i32_0 = arith.constant 0 : i32
    %c0_i32_1 = arith.constant 0 : i32
    return %c0_i32, %c0_i32_0 : i32, i32
  }
  func.func @transform_5(%arg0: i32) -> (i32, i32, i32) {
    %c0_i32 = arith.constant 0 : i32
    %c0_i32_0 = arith.constant 0 : i32
    %c0_i32_1 = arith.constant 0 : i32
    %c0_i32_2 = arith.constant 0 : i32
    return %c0_i32, %c0_i32_0, %c0_i32_1 : i32, i32, i32
  }
  func.func @transform_6(%arg0: i32) -> (i32, i32) {
    %c0_i32 = arith.constant 0 : i32
    %c0_i32_0 = arith.constant 0 : i32
    %c0_i32_1 = arith.constant 0 : i32
    return %c0_i32, %c0_i32_0 : i32, i32
  }
  func.func @transform_7(%arg0: i32) -> (i32, i32, i32) {
    %c0_i32 = arith.constant 0 : i32
    %c0_i32_0 = arith.constant 0 : i32
    %c0_i32_1 = arith.constant 0 : i32
    %c0_i32_2 = arith.constant 0 : i32
    return %c0_i32, %c0_i32_0, %c0_i32_1 : i32, i32, i32
  }
  func.func @transform_8(%arg0: i32) -> (i32, i32) {
    %c0_i32 = arith.constant 0 : i32
    %c0_i32_0 = arith.constant 0 : i32
    %c0_i32_1 = arith.constant 0 : i32
    return %c0_i32, %c0_i32_0 : i32, i32
  }
  func.func @transform_9(%arg0: i32) -> (i32, i32, i32) {
    %c0_i32 = arith.constant 0 : i32
    %c0_i32_0 = arith.constant 0 : i32
    %c0_i32_1 = arith.constant 0 : i32
    return %arg0, %c0_i32, %c0_i32_0 : i32, i32, i32
  }
}

</mosaic_0001>

<llo_original>
// kernel: simple_cnn_forward.1
$region0: #{simple_cnn_forward.1}
  #allocation0 [shape = 'u32[]', space=smem, size = 0x4, offset = 0x4, fixed_abs, tag = 'smem constant byte address 0x4 - core index']
  #allocation1 [shape = 'u32[144,128]{1,0:T(1,128)}', space=vmem, size = 0x12000, scoped, tag = 'internal scratch']
  #allocation2 [shape = 'bf16[80,48]{1,0:T(16,128)(2,1)}', space=vmem, size = 0x5000, scoped, tag = 'scratch operand']
  #allocation3 [shape = 'bf16[24,96]{1,0:T(8,128)(2,1)}', space=vmem, size = 0x1800, scoped, tag = 'scratch operand']
  #allocation4 [shape = 'f32[256,16]{1,0:T(8,128)}', space=vmem, size = 0x20000, scoped, tag = 'scratch operand']
  #allocation5 [shape = 'f32[64,32]{1,0:T(8,128)}', space=vmem, size = 0x8000, scoped, tag = 'scratch operand']
  #allocation6 [shape = 'f32[16,64]{1,0:T(8,128)}', space=vmem, size = 0x2000, scoped, tag = 'scratch operand']
  %s0 = inlined_call_operand.vmem [shape: bf16[2,288,9], index: 0, kind: input, shape index: {}]
  %s1 = inlined_call_operand.vmem [shape: bf16[3,9,16], index: 1, kind: input, shape index: {}]
  %s2 = inlined_call_operand.vmem [shape: f32[1,16], index: 2, kind: input, shape index: {}]
  %s3 = inlined_call_operand.vmem [shape: bf16[3,48,32], index: 3, kind: input, shape index: {}]
  %s4 = inlined_call_operand.vmem [shape: f32[1,32], index: 4, kind: input, shape index: {}]
  %s5 = inlined_call_operand.vmem [shape: bf16[3,96,64], index: 5, kind: input, shape index: {}]
  %s6 = inlined_call_operand.vmem [shape: f32[1,64], index: 6, kind: input, shape index: {}]
  %s7 = inlined_call_operand.vmem [shape: bf16[4,64,128], index: 7, kind: input, shape index: {}]
  %s8 = inlined_call_operand.vmem [shape: f32[1,128], index: 8, kind: input, shape index: {}]
  %s9 = inlined_call_operand.hbm [shape: f32[2,1,128], index: 9, kind: output, shape index: {}]
  %s10 = sld [smem:[#allocation0]]
  $region69: #{simple_cnn_forward.1} parent=0
    _
  %s12 = ssub.s32 1, %s10
  %s13 = scalar_select 0, %s12, %s10
  $region1: #{simple_cnn_forward.1} parent=0
    #allocation7 [shape = 'u8[1024]{0}', space=vmem, size = 0x400, scoped, tag = 'output window, operand 0']
    #allocation8 [shape = 's32[2]{0}', space=sflag, size = 0x8, scoped, tag = 'scoped memory for simple_cnn_forward.1']
    %14 = vsyncpa [#allocation8], 0
    %s15 = scalar_lea.sflag [#allocation8], 1
    %16 = vsyncpa %s15, 0
    loop: start=0, step=1, limit=4
    $region2: #{simple_cnn_forward.1} parent=1 // loop_pre_header
      _
    $region3: #{simple_cnn_forward.1} parent=1 // loop_header
      %s18 = sphi 0, %s22
      %p19 = scmp.ge.s32.totalorder %s18, 4
      %s28 = sphi 0, %s30
      %s31 = sphi 0, %s28
      %s32 = sphi 0, %s31
      %s48 = sphi 0, %s32
      %s52 = sphi 0, %s52
      %s54 = sphi 0, %s52
      %s55 = sphi 0, %s54
      %s69 = sphi 0, %s55
      %s73 = sphi 0, %s73
      %s75 = sphi 0, %s73
      %s76 = sphi 0, %s75
      %s90 = sphi 0, %s76
      %s94 = sphi 0, %s94
      %s96 = sphi 0, %s94
      %s97 = sphi 0, %s96
      %s111 = sphi 0, %s97
      %s115 = sphi 0, %s115
      %s117 = sphi 0, %s115
      %s118 = sphi 0, %s117
      %s132 = sphi 0, %s118
      %s136 = sphi 0, %s136
      %s138 = sphi 0, %s136
      %s139 = sphi 0, %s138
      %s153 = sphi 0, %s139
      %s157 = sphi 0, %s157
      %s159 = sphi 0, %s157
      %s160 = sphi 0, %s159
      %s174 = sphi 0, %s160
      %s178 = sphi 0, %s178
      %s180 = sphi 0, %s178
      %s181 = sphi 0, %s180
      %s195 = sphi 0, %s181
      %s199 = sphi 0, %s199
      %s201 = sphi 0, %s199
      %s202 = sphi 0, %s201
      %s216 = sphi 0, %s202
      %s222 = sphi 0, %s224
      %s225 = sphi 0, %s222
      %s226 = sphi 0, %s225
      %s242 = sphi 0, %s226
    $region4: #{simple_cnn_forward.1} parent=1 // loop_header_branch
      %21 = sbr.rel (%p19) target = $region8
    $region5: #{simple_cnn_forward.1} parent=1 // loop_body
      %s23 = ssub.s32 %s18, 1
      %s24 = ssub.s32 %s18, 2
      %s25 = sadd.s32 %s18, 1
      %s26 = ssub.s32 %s18, %s25
      %p27 = scmp.eq.s32.totalorder %s26, 0
      %s29 = sadd.s32 %s28, 1
      %s30 = scalar_select %p27, %s28, %s29
      %p33 = pneg %p27
      %p34 = scmp.eq.s32.totalorder %s18, 1
      %p35 = por %p33, %p34
      %p36 = scmp.ne.s32.totalorder %s28, %s31
      %p37 = scmp.eq.s32.totalorder %s18, 0
      %p38 = por %p36, %p37
      %p39 = scmp.ne.s32.totalorder %s28, %s31
      %p40 = scmp.eq.s32.totalorder %s23, 1
      %p41 = por %p39, %p40
      %p42 = scmp.ne.s32.totalorder %s31, %s32
      %p43 = scmp.eq.s32.totalorder %s23, 0
      %p44 = por %p42, %p43
      %p45 = scmp.ne.s32.totalorder %s31, %s32
      %p46 = scmp.eq.s32.totalorder %s24, 1
      %p47 = por %p45, %p46
      %p49 = scmp.ne.s32.totalorder %s32, %s48
      %p50 = scmp.eq.s32.totalorder %s24, 0
      %p51 = por %p49, %p50
      %s53 = sadd.s32 %s52, 1
      %p56 = scmp.eq.s32.totalorder %s18, 1
      %p57 = scmp.ne.s32.totalorder %s52, %s54
      %p58 = scmp.eq.s32.totalorder %s18, 0
      %p59 = por %p57, %p58
      %p60 = scmp.ne.s32.totalorder %s52, %s54
      %p61 = scmp.eq.s32.totalorder %s23, 1
      %p62 = por %p60, %p61
      %p63 = scmp.ne.s32.totalorder %s54, %s55
      %p64 = scmp.eq.s32.totalorder %s23, 0
      %p65 = por %p63, %p64
      %p66 = scmp.ne.s32.totalorder %s54, %s55
      %p67 = scmp.eq.s32.totalorder %s24, 1
      %p68 = por %p66, %p67
      %p70 = scmp.ne.s32.totalorder %s55, %s69
      %p71 = scmp.eq.s32.totalorder %s24, 0
      %p72 = por %p70, %p71
      %s74 = sadd.s32 %s73, 1
      %p77 = scmp.eq.s32.totalorder %s18, 1
      %p78 = scmp.ne.s32.totalorder %s73, %s75
      %p79 = scmp.eq.s32.totalorder %s18, 0
      %p80 = por %p78, %p79
      %p81 = scmp.ne.s32.totalorder %s73, %s75
      %p82 = scmp.eq.s32.totalorder %s23, 1
      %p83 = por %p81, %p82
      %p84 = scmp.ne.s32.totalorder %s75, %s76
      %p85 = scmp.eq.s32.totalorder %s23, 0
      %p86 = por %p84, %p85
      %p87 = scmp.ne.s32.totalorder %s75, %s76
      %p88 = scmp.eq.s32.totalorder %s24, 1
      %p89 = por %p87, %p88
      %p91 = scmp.ne.s32.totalorder %s76, %s90
      %p92 = scmp.eq.s32.totalorder %s24, 0
      %p93 = por %p91, %p92
      %s95 = sadd.s32 %s94, 1
      %p98 = scmp.eq.s32.totalorder %s18, 1
      %p99 = scmp.ne.s32.totalorder %s94, %s96
      %p100 = scmp.eq.s32.totalorder %s18, 0
      %p101 = por %p99, %p100
      %p102 = scmp.ne.s32.totalorder %s94, %s96
      %p103 = scmp.eq.s32.totalorder %s23, 1
      %p104 = por %p102, %p103
      %p105 = scmp.ne.s32.totalorder %s96, %s97
      %p106 = scmp.eq.s32.totalorder %s23, 0
      %p107 = por %p105, %p106
      %p108 = scmp.ne.s32.totalorder %s96, %s97
      %p109 = scmp.eq.s32.totalorder %s24, 1
      %p110 = por %p108, %p109
      %p112 = scmp.ne.s32.totalorder %s97, %s111
      %p113 = scmp.eq.s32.totalorder %s24, 0
      %p114 = por %p112, %p113
      %s116 = sadd.s32 %s115, 1
      %p119 = scmp.eq.s32.totalorder %s18, 1
      %p120 = scmp.ne.s32.totalorder %s115, %s117
      %p121 = scmp.eq.s32.totalorder %s18, 0
      %p122 = por %p120, %p121
      %p123 = scmp.ne.s32.totalorder %s115, %s117
      %p124 = scmp.eq.s32.totalorder %s23, 1
      %p125 = por %p123, %p124
      %p126 = scmp.ne.s32.totalorder %s117, %s118
      %p127 = scmp.eq.s32.totalorder %s23, 0
      %p128 = por %p126, %p127
      %p129 = scmp.ne.s32.totalorder %s117, %s118
      %p130 = scmp.eq.s32.totalorder %s24, 1
      %p131 = por %p129, %p130
      %p133 = scmp.ne.s32.totalorder %s118, %s132
      %p134 = scmp.eq.s32.totalorder %s24, 0
      %p135 = por %p133, %p134
      %s137 = sadd.s32 %s136, 1
      %p140 = scmp.eq.s32.totalorder %s18, 1
      %p141 = scmp.ne.s32.totalorder %s136, %s138
      %p142 = scmp.eq.s32.totalorder %s18, 0
      %p143 = por %p141, %p142
      %p144 = scmp.ne.s32.totalorder %s136, %s138
      %p145 = scmp.eq.s32.totalorder %s23, 1
      %p146 = por %p144, %p145
      %p147 = scmp.ne.s32.totalorder %s138, %s139
      %p148 = scmp.eq.s32.totalorder %s23, 0
      %p149 = por %p147, %p148
      %p150 = scmp.ne.s32.totalorder %s138, %s139
      %p151 = scmp.eq.s32.totalorder %s24, 1
      %p152 = por %p150, %p151
      %p154 = scmp.ne.s32.totalorder %s139, %s153
      %p155 = scmp.eq.s32.totalorder %s24, 0
      %p156 = por %p154, %p155
      %s158 = sadd.s32 %s157, 1
      %p161 = scmp.eq.s32.totalorder %s18, 1
      %p162 = scmp.ne.s32.totalorder %s157, %s159
      %p163 = scmp.eq.s32.totalorder %s18, 0
      %p164 = por %p162, %p163
      %p165 = scmp.ne.s32.totalorder %s157, %s159
      %p166 = scmp.eq.s32.totalorder %s23, 1
      %p167 = por %p165, %p166
      %p168 = scmp.ne.s32.totalorder %s159, %s160
      %p169 = scmp.eq.s32.totalorder %s23, 0
      %p170 = por %p168, %p169
      %p171 = scmp.ne.s32.totalorder %s159, %s160
      %p172 = scmp.eq.s32.totalorder %s24, 1
      %p173 = por %p171, %p172
      %p175 = scmp.ne.s32.totalorder %s160, %s174
      %p176 = scmp.eq.s32.totalorder %s24, 0
      %p177 = por %p175, %p176
      %s179 = sadd.s32 %s178, 1
      %p182 = scmp.eq.s32.totalorder %s18, 1
      %p183 = scmp.ne.s32.totalorder %s178, %s180
      %p184 = scmp.eq.s32.totalorder %s18, 0
      %p185 = por %p183, %p184
      %p186 = scmp.ne.s32.totalorder %s178, %s180
      %p187 = scmp.eq.s32.totalorder %s23, 1
      %p188 = por %p186, %p187
      %p189 = scmp.ne.s32.totalorder %s180, %s181
      %p190 = scmp.eq.s32.totalorder %s23, 0
      %p191 = por %p189, %p190
      %p192 = scmp.ne.s32.totalorder %s180, %s181
      %p193 = scmp.eq.s32.totalorder %s24, 1
      %p194 = por %p192, %p193
      %p196 = scmp.ne.s32.totalorder %s181, %s195
      %p197 = scmp.eq.s32.totalorder %s24, 0
      %p198 = por %p196, %p197
      %s200 = sadd.s32 %s199, 1
      %p203 = scmp.eq.s32.totalorder %s18, 1
      %p204 = scmp.ne.s32.totalorder %s199, %s201
      %p205 = scmp.eq.s32.totalorder %s18, 0
      %p206 = por %p204, %p205
      %p207 = scmp.ne.s32.totalorder %s199, %s201
      %p208 = scmp.eq.s32.totalorder %s23, 1
      %p209 = por %p207, %p208
      %p210 = scmp.ne.s32.totalorder %s201, %s202
      %p211 = scmp.eq.s32.totalorder %s23, 0
      %p212 = por %p210, %p211
      %p213 = scmp.ne.s32.totalorder %s201, %s202
      %p214 = scmp.eq.s32.totalorder %s24, 1
      %p215 = por %p213, %p214
      %p217 = scmp.ne.s32.totalorder %s202, %s216
      %p218 = scmp.eq.s32.totalorder %s24, 0
      %p219 = por %p217, %p218
      %s220 = ssub.s32 %s18, %s25
      %p221 = scmp.eq.s32.totalorder %s220, 0
      %s223 = sadd.s32 %s222, 1
      %s224 = scalar_select %p221, %s222, %s223
      %p227 = pneg %p221
      %p228 = scmp.eq.s32.totalorder %s18, 1
      %p229 = por %p227, %p228
      %p230 = scmp.ne.s32.totalorder %s222, %s225
      %p231 = scmp.eq.s32.totalorder %s18, 0
      %p232 = por %p230, %p231
      %p233 = scmp.ne.s32.totalorder %s222, %s225
      %p234 = scmp.eq.s32.totalorder %s23, 1
      %p235 = por %p233, %p234
      %p236 = scmp.ne.s32.totalorder %s225, %s226
      %p237 = scmp.eq.s32.totalorder %s23, 0
      %p238 = por %p236, %p237
      %p239 = scmp.ne.s32.totalorder %s225, %s226
      %p240 = scmp.eq.s32.totalorder %s24, 1
      %p241 = por %p239, %p240
      %p243 = scmp.ne.s32.totalorder %s226, %s242
      %p244 = scmp.eq.s32.totalorder %s24, 0
      %p245 = por %p243, %p244
      %p246 = scmp.le.s32.totalorder 1, %s18
      %p247 = scmp.lt.s32.totalorder %s18, 3
      %p248 = pnand %p246, %p247
      %p249 = pneg %p248
      // Predicated region
      $region9: #{simple_cnn_forward.1} parent=5 // pred_check
        _
      $region10: #{simple_cnn_forward.1} parent=5 // pred_check_branch
        %251 = sbr.rel (%p248) target = $region12
      $region11: #{simple_cnn_forward.1} parent=5 // pred_region
        %s252 = ssub.s32 %s18, 1
        // Predicated region
        $region13: #{simple_cnn_forward.1} parent=11 // pred_check
          %p253 = pneg %p65
        $region14: #{simple_cnn_forward.1} parent=11 // pred_check_branch
          %255 = sbr.rel (%p253) target = $region16
        $region15: #{simple_cnn_forward.1} parent=11 // pred_region
          _
        $region16: #{simple_cnn_forward.1} parent=11 // pred_fallthru
          _
        // Predicated region
        $region17: #{simple_cnn_forward.1} parent=11 // pred_check
          %p256 = pneg %p86
        $region18: #{simple_cnn_forward.1} parent=11 // pred_check_branch
          %258 = sbr.rel (%p256) target = $region20
        $region19: #{simple_cnn_forward.1} parent=11 // pred_region
          _
        $region20: #{simple_cnn_forward.1} parent=11 // pred_fallthru
          _
        // Predicated region
        $region21: #{simple_cnn_forward.1} parent=11 // pred_check
          %p259 = pneg %p107
        $region22: #{simple_cnn_forward.1} parent=11 // pred_check_branch
          %261 = sbr.rel (%p259) target = $region24
        $region23: #{simple_cnn_forward.1} parent=11 // pred_region
          _
        $region24: #{simple_cnn_forward.1} parent=11 // pred_fallthru
          _
        // Predicated region
        $region25: #{simple_cnn_forward.1} parent=11 // pred_check
          %p262 = pneg %p128
        $region26: #{simple_cnn_forward.1} parent=11 // pred_check_branch
          %264 = sbr.rel (%p262) target = $region28
        $region27: #{simple_cnn_forward.1} parent=11 // pred_region
          _
        $region28: #{simple_cnn_forward.1} parent=11 // pred_fallthru
          _
        // Predicated region
        $region29: #{simple_cnn_forward.1} parent=11 // pred_check
          %p265 = pneg %p149
        $region30: #{simple_cnn_forward.1} parent=11 // pred_check_branch
          %267 = sbr.rel (%p265) target = $region32
        $region31: #{simple_cnn_forward.1} parent=11 // pred_region
          _
        $region32: #{simple_cnn_forward.1} parent=11 // pred_fallthru
          _
        // Predicated region
        $region33: #{simple_cnn_forward.1} parent=11 // pred_check
          %p268 = pneg %p170
        $region34: #{simple_cnn_forward.1} parent=11 // pred_check_branch
          %270 = sbr.rel (%p268) target = $region36
        $region35: #{simple_cnn_forward.1} parent=11 // pred_region
          _
        $region36: #{simple_cnn_forward.1} parent=11 // pred_fallthru
          _
        // Predicated region
        $region37: #{simple_cnn_forward.1} parent=11 // pred_check
          %p271 = pneg %p191
        $region38: #{simple_cnn_forward.1} parent=11 // pred_check_branch
          %273 = sbr.rel (%p271) target = $region40
        $region39: #{simple_cnn_forward.1} parent=11 // pred_region
          _
        $region40: #{simple_cnn_forward.1} parent=11 // pred_fallthru
          _
        // Predicated region
        $region41: #{simple_cnn_forward.1} parent=11 // pred_check
          %p274 = pneg %p212
        $region42: #{simple_cnn_forward.1} parent=11 // pred_check_branch
          %276 = sbr.rel (%p274) target = $region44
        $region43: #{simple_cnn_forward.1} parent=11 // pred_region
          _
        $region44: #{simple_cnn_forward.1} parent=11 // pred_fallthru
          _
      $region12: #{simple_cnn_forward.1} parent=5 // pred_fallthru
        _
      %p277 = scmp.lt.s32.totalorder %s18, 2
      // Predicated region
      $region45: #{simple_cnn_forward.1} parent=5 // pred_check
        %p278 = pneg %p277
      $region46: #{simple_cnn_forward.1} parent=5 // pred_check_branch
        %280 = sbr.rel (%p278) target = $region48
      $region47: #{simple_cnn_forward.1} parent=5 // pred_region
        // Predicated region
        $region49: #{simple_cnn_forward.1} parent=47 // pred_check
          %p281 = pneg %p38
        $region50: #{simple_cnn_forward.1} parent=47 // pred_check_branch
          %283 = sbr.rel (%p281) target = $region52
        $region51: #{simple_cnn_forward.1} parent=47 // pred_region
          %p284 = scmp.lt.s32.totalorder %s18, 1
          %s285 = scalar_select %p284, %s18, 1
          %s286 = smul.addr %s285, 36
          %s287 = smul.addr %s286, 4
          %s288 = scalar_lea.vmem %s0, %s287
        $region52: #{simple_cnn_forward.1} parent=47 // pred_fallthru
          _
      $region48: #{simple_cnn_forward.1} parent=5 // pred_fallthru
        _
      %p289 = scmp.le.s32.totalorder 1, %s18
      %p290 = scmp.lt.s32.totalorder %s18, 3
      %p291 = pnand %p289, %p290
      %p292 = pneg %p291
      // Predicated region
      $region53: #{simple_cnn_forward.1} parent=5 // pred_check
        _
      $region54: #{simple_cnn_forward.1} parent=5 // pred_check_branch
        %294 = sbr.rel (%p291) target = $region56
      $region55: #{simple_cnn_forward.1} parent=5 // pred_region
        %s295 = ssub.s32 %s18, 1
        %p296 = scmp.lt.s32.totalorder %s23, 1
        %s297 = scalar_select %p296, %s23, 1
        %s298 = smul.addr %s297, 36
        %s299 = smul.addr %s298, 4
        %s300 = scalar_lea.vmem %s0, %s299
        %p301 = pneg %p44
        %p302 = pneg %p41
        %p303 = pneg %p65
        %p304 = pneg %p62
        %p305 = pneg %p86
        %p306 = pneg %p83
        %p307 = pneg %p107
        %p308 = pneg %p104
        %p309 = pneg %p128
        %p310 = pneg %p125
        %p311 = pneg %p149
        %p312 = pneg %p146
        %p313 = pneg %p170
        %p314 = pneg %p167
        %p315 = pneg %p191
        %p316 = pneg %p188
        %p317 = pneg %p212
        %p318 = pneg %p209
        %p319 = pneg %p238
        %p320 = pneg %p235
        %s321 = sand.u32 %s225, 1
        %s322 = scalar_lea.sflag [#allocation8], %s321
        %s323 = sand.u32 %s225, 1
        %s324 = scalar_lea.vmem [#allocation7], %s323
        %p325 = scmp.lt.s32.totalorder %s23, 1
        %s326 = scalar_select %p325, %s23, 1
        %s327 = smul.addr %s326, 36
        %s328 = smul.addr %s327, 4
        %s329 = scalar_lea.vmem %s0, %s328
        %vm331 = vcmask 392192
        %332 = vst.msk [vmem:[#allocation2] sm:$0xff] %vm331, 0
        %333 = vst.msk [vmem:[#allocation2 + $0x8] sm:$0xff] %vm331, 0
        %334 = vst.msk [vmem:[#allocation2 + $0x10] sm:$0xff] %vm331, 0
        %335 = vst.msk [vmem:[#allocation2 + $0x18] sm:$0xff] %vm331, 0
        %336 = vst.msk [vmem:[#allocation2 + $0x20] sm:$0xff] %vm331, 0
        %vm337 = vcmask 781312
        %338 = vst.msk [vmem:[#allocation3] sm:$0xf] %vm337, 0
        %339 = vst.msk [vmem:[#allocation3 + $0x4] sm:$0xf] %vm337, 0
        %340 = vst.msk [vmem:[#allocation3 + $0x8] sm:$0xf] %vm337, 0
        %v341 = vld [vmem:[%s329] sm:$0xf]
        %v342 = vld [vmem:[%s329 + $0x4] sm:$0xf]
        %v343 = vld [vmem:[%s329 + $0x8] sm:$0xf]
        %v344 = vld [vmem:[%s329 + $0xc] sm:$0xf]
        %v345 = vld [vmem:[%s329 + $0x10] sm:$0xf]
        %v346 = vld [vmem:[%s329 + $0x14] sm:$0xf]
        %v347 = vld [vmem:[%s329 + $0x18] sm:$0xf]
        %v348 = vld [vmem:[%s329 + $0x1c] sm:$0xf]
        %v349 = vld [vmem:[%s329 + $0x20] sm:$0xf]
        %v350 = vld [vmem:[%s329 + $0x24] sm:$0xf]
        %v351 = vld [vmem:[%s329 + $0x28] sm:$0xf]
        %v352 = vld [vmem:[%s329 + $0x2c] sm:$0xf]
        %v353 = vld [vmem:[%s329 + $0x30] sm:$0xf]
        %v354 = vld [vmem:[%s329 + $0x34] sm:$0xf]
        %v355 = vld [vmem:[%s329 + $0x38] sm:$0xf]
        %v356 = vld [vmem:[%s329 + $0x3c] sm:$0xf]
        %v357 = vld [vmem:[%s329 + $0x40] sm:$0xf]
        %v358 = vld [vmem:[%s329 + $0x44] sm:$0xf]
        %v359 = vld [vmem:[%s329 + $0x48] sm:$0xf]
        %v360 = vld [vmem:[%s329 + $0x4c] sm:$0xf]
        %v361 = vld [vmem:[%s329 + $0x50] sm:$0xf]
        %v362 = vld [vmem:[%s329 + $0x54] sm:$0xf]
        %v363 = vld [vmem:[%s329 + $0x58] sm:$0xf]
        %v364 = vld [vmem:[%s329 + $0x5c] sm:$0xf]
        %v365 = vld [vmem:[%s329 + $0x60] sm:$0xf]
        %v366 = vld [vmem:[%s329 + $0x64] sm:$0xf]
        %v367 = vld [vmem:[%s329 + $0x68] sm:$0xf]
        %v368 = vld [vmem:[%s329 + $0x6c] sm:$0xf]
        %v369 = vld [vmem:[%s329 + $0x70] sm:$0xf]
        %v370 = vld [vmem:[%s329 + $0x74] sm:$0xf]
        %v371 = vld [vmem:[%s329 + $0x78] sm:$0xf]
        %v372 = vld [vmem:[%s329 + $0x7c] sm:$0xf]
        %v373 = vld [vmem:[%s1] sm:$0xf]
        %v374 = vld [vmem:[%s1 + $0x4] sm:$0x1]
        %v375 = vld [vmem:[%s329 + $0x80] sm:$0xf]
        %v376 = vld [vmem:[%s329 + $0x84] sm:$0xf]
        %s377 = scalar_lea.vmem %s1, 8
        %v378 = vld [vmem:[%s377] sm:$0xf]
        %v379 = vld [vmem:[%s377 + $0x4] sm:$0x1]
        %v412 = vunpack.c.l.b16 %v343
        %v413 = vunpack.c.l.b16 %v344
        %v414 = vunpack.c.l.b16 %v345
        %v415 = vunpack.c.l.b16 %v346
        %v416 = vunpack.c.l.b16 %v347
        %v417 = vunpack.c.l.b16 %v348
        %v418 = vunpack.c.l.b16 %v349
        %v419 = vunpack.c.l.b16 %v350
        %v420 = vunpack.c.l.b16 %v351
        %v421 = vunpack.c.l.b16 %v352
        %v422 = vunpack.c.l.b16 %v353
        %v423 = vunpack.c.l.b16 %v354
        %v424 = vunpack.c.l.b16 %v355
        %v425 = vunpack.c.l.b16 %v356
        %v426 = vunpack.c.l.b16 %v357
        %v427 = vunpack.c.l.b16 %v358
        %v428 = vunpack.c.l.b16 %v359
        %v429 = vunpack.c.l.b16 %v360
        %v430 = vunpack.c.l.b16 %v361
        %v431 = vunpack.c.l.b16 %v362
        %v432 = vunpack.c.l.b16 %v363
        %v433 = vunpack.c.l.b16 %v364
        %v434 = vunpack.c.l.b16 %v365
        %v435 = vunpack.c.l.b16 %v366
        %v436 = vunpack.c.l.b16 %v367
        %v437 = vunpack.c.l.b16 %v368
        %v438 = vunpack.c.l.b16 %v369
        %v439 = vunpack.c.l.b16 %v370
        %v440 = vunpack.c.l.b16 %v371
        %v441 = vunpack.c.l.b16 %v372
        %v442 = vunpack.c.l.b16 %v375
        %v443 = vunpack.c.l.b16 %v376
        %v444 = vpack.c.b16 %v413, %v412
        %v445 = vpack.c.b16 %v415, %v414
        %v446 = vpack.c.b16 %v417, %v416
        %v447 = vpack.c.b16 %v419, %v418
        %v448 = vpack.c.b16 %v421, %v420
        %v449 = vpack.c.b16 %v423, %v422
        %v450 = vpack.c.b16 %v425, %v424
        %v451 = vpack.c.b16 %v427, %v426
        %v452 = vpack.c.b16 %v429, %v428
        %v453 = vpack.c.b16 %v431, %v430
        %v454 = vpack.c.b16 %v433, %v432
        %v455 = vpack.c.b16 %v435, %v434
        %v456 = vpack.c.b16 %v437, %v436
        %v457 = vpack.c.b16 %v439, %v438
        %v458 = vpack.c.b16 %v441, %v440
        %v459 = vpack.c.b16 %v443, %v442
        %v462 = vunpack.c.l.b16 %v378
        %v463 = vunpack.c.l.b16 %v379
        %v464 = vpack.c.b16 %v463, %v462
        %vm465 = vcmask 72704
        %v467 = vsel %vm465, %v444, 0
        %v470 = vsel %vm465, %v445, 0
        %v473 = vsel %vm465, %v446, 0
        %v476 = vsel %vm465, %v447, 0
        %v479 = vsel %vm465, %v448, 0
        %v482 = vsel %vm465, %v449, 0
        %v485 = vsel %vm465, %v450, 0
        %v488 = vsel %vm465, %v451, 0
        %v491 = vsel %vm465, %v452, 0
        %v494 = vsel %vm465, %v453, 0
        %v497 = vsel %vm465, %v454, 0
        %v500 = vsel %vm465, %v455, 0
        %v503 = vsel %vm465, %v456, 0
        %v506 = vsel %vm465, %v457, 0
        %v509 = vsel %vm465, %v458, 0
        %v512 = vsel %vm465, %v459, 0
        %vm514 = vcmask 1043456
        %vm515 = vcmask 1044480
        %v516 = vsel %vm514, 4294967295, 65535
        %v517 = vsel %vm515, %v516, 0
        %v519 = vand.u32 %v464, %v517
        %521 = vmatprep.subr.bf16.mxu0 0
        %522 = vmatpush1.bf16.msra.mxu0 %v519
        %523 = vmatprep.subr.bf16.mxu0 0
        %524 = vmatpush1.bf16.msra.mxu0 0
        %525 = vmatprep.subr.bf16.mxu0 0
        %526 = vmatpush1.bf16.msra.mxu0 0
        %527 = vmatprep.subr.bf16.mxu0 0
        %528 = vmatpush1.bf16.msra.mxu0 0
        %529 = vmatprep.subr.bf16.mxu0 0
        %530 = vmatpush1.bf16.msra.mxu0 0
        %531 = vmatprep.subr.bf16.mxu0 0
        %532 = vmatpush1.bf16.msra.mxu0 0
        %533 = vmatprep.subr.bf16.mxu0 0
        %534 = vmatpush1.bf16.msra.mxu0 0
        %535 = vmatprep.subr.bf16.mxu0 0
        %536 = vmatpush1.bf16.msra.mxu0 0
        %537 = vmatprep.subr.bf16.mxu0 0
        %538 = vmatpush1.bf16.msra.mxu0 0
        %539 = vmatprep.subr.bf16.mxu0 0
        %540 = vmatpush1.bf16.msra.mxu0 0
        %541 = vmatprep.subr.bf16.mxu0 0
        %542 = vmatpush1.bf16.msra.mxu0 0
        %543 = vmatprep.subr.bf16.mxu0 0
        %544 = vmatpush1.bf16.msra.mxu0 0
        %545 = vmatprep.subr.bf16.mxu0 0
        %546 = vmatpush1.bf16.msra.mxu0 0
        %547 = vmatprep.subr.bf16.mxu0 0
        %548 = vmatpush1.bf16.msra.mxu0 0
        %549 = vmatprep.subr.bf16.mxu0 0
        %550 = vmatpush1.bf16.msra.mxu0 0
        %551 = vmatprep.subr.bf16.mxu0 0
        %552 = vmatpush1.bf16.msra.mxu0 0
        %553 = vmatprep.mubr.bf16.mxu0 0
        %554 = vmatmul.mubr.bf16.gmra.mrb[0].mxu0 %v467
        %v555 = vpop.f32.mrb[0].mxu0
        %v556 = vadd.f32 0.0, %v555
        %v557 = vpop.f32.mrb[0].mxu0
        %v558 = vpop.f32.mrb[0].mxu0
        %v559 = vadd.f32 0.0, %v558
        %v560 = vpop.f32.mrb[0].mxu0
        %561 = vmatprep.mubr.bf16.mxu0 0
        %562 = vmatmul.mubr.bf16.gmra.mrb[0].mxu0 %v470
        %v563 = vpop.f32.mrb[0].mxu0
        %v564 = vadd.f32 0.0, %v563
        %v565 = vpop.f32.mrb[0].mxu0
        %v566 = vpop.f32.mrb[0].mxu0
        %v567 = vadd.f32 0.0, %v566
        %v568 = vpop.f32.mrb[0].mxu0
        %569 = vmatprep.mubr.bf16.mxu0 0
        %570 = vmatmul.mubr.bf16.gmra.mrb[0].mxu0 %v473
        %v571 = vpop.f32.mrb[0].mxu0
        %v572 = vadd.f32 0.0, %v571
        %v573 = vpop.f32.mrb[0].mxu0
        %v574 = vpop.f32.mrb[0].mxu0
        %v575 = vadd.f32 0.0, %v574
        %v576 = vpop.f32.mrb[0].mxu0
        %577 = vmatprep.mubr.bf16.mxu0 0
        %578 = vmatmul.mubr.bf16.gmra.mrb[0].mxu0 %v476
        %v579 = vpop.f32.mrb[0].mxu0
        %v580 = vadd.f32 0.0, %v579
        %v581 = vpop.f32.mrb[0].mxu0
        %v582 = vpop.f32.mrb[0].mxu0
        %v583 = vadd.f32 0.0, %v582
        %v584 = vpop.f32.mrb[0].mxu0
        %585 = vmatprep.mubr.bf16.mxu0 0
        %586 = vmatmul.mubr.bf16.gmra.mrb[0].mxu0 %v479
        %v587 = vpop.f32.mrb[0].mxu0
        %v588 = vadd.f32 0.0, %v587
        %v589 = vpop.f32.mrb[0].mxu0
        %v590 = vpop.f32.mrb[0].mxu0
        %v591 = vadd.f32 0.0, %v590
        %v592 = vpop.f32.mrb[0].mxu0
        %593 = vmatprep.mubr.bf16.mxu0 0
        %594 = vmatmul.mubr.bf16.gmra.mrb[0].mxu0 %v482
        %v595 = vpop.f32.mrb[0].mxu0
        %v596 = vadd.f32 0.0, %v595
        %v597 = vpop.f32.mrb[0].mxu0
        %v598 = vpop.f32.mrb[0].mxu0
        %v599 = vadd.f32 0.0, %v598
        %v600 = vpop.f32.mrb[0].mxu0
        %601 = vmatprep.mubr.bf16.mxu0 0
        %602 = vmatmul.mubr.bf16.gmra.mrb[0].mxu0 %v485
        %v603 = vpop.f32.mrb[0].mxu0
        %v604 = vadd.f32 0.0, %v603
        %v605 = vpop.f32.mrb[0].mxu0
        %v606 = vpop.f32.mrb[0].mxu0
        %v607 = vadd.f32 0.0, %v606
        %v608 = vpop.f32.mrb[0].mxu0
        %609 = vmatprep.mubr.bf16.mxu0 0
        %610 = vmatmul.mubr.bf16.gmra.mrb[0].mxu0 %v488
        %v611 = vpop.f32.mrb[0].mxu0
        %v612 = vadd.f32 0.0, %v611
        %v613 = vpop.f32.mrb[0].mxu0
        %v614 = vpop.f32.mrb[0].mxu0
        %v615 = vadd.f32 0.0, %v614
        %v616 = vpop.f32.mrb[0].mxu0
        %617 = vmatprep.mubr.bf16.mxu0 0
        %618 = vmatmul.mubr.bf16.gmra.mrb[0].mxu0 %v491
        %v619 = vpop.f32.mrb[0].mxu0
        %v620 = vadd.f32 0.0, %v619
        %v621 = vpop.f32.mrb[0].mxu0
        %v622 = vpop.f32.mrb[0].mxu0
        %v623 = vadd.f32 0.0, %v622
        %v624 = vpop.f32.mrb[0].mxu0
        %625 = vmatprep.mubr.bf16.mxu0 0
        %626 = vmatmul.mubr.bf16.gmra.mrb[0].mxu0 %v494
        %v627 = vpop.f32.mrb[0].mxu0
        %v628 = vadd.f32 0.0, %v627
        %v629 = vpop.f32.mrb[0].mxu0
        %v630 = vpop.f32.mrb[0].mxu0
        %v631 = vadd.f32 0.0, %v630
        %v632 = vpop.f32.mrb[0].mxu0
        %633 = vmatprep.mubr.bf16.mxu0 0
        %634 = vmatmul.mubr.bf16.gmra.mrb[0].mxu0 %v497
        %v635 = vpop.f32.mrb[0].mxu0
        %v636 = vadd.f32 0.0, %v635
        %v637 = vpop.f32.mrb[0].mxu0
        %v638 = vpop.f32.mrb[0].mxu0
        %v639 = vadd.f32 0.0, %v638
        %v640 = vpop.f32.mrb[0].mxu0
        %641 = vmatprep.mubr.bf16.mxu0 0
        %642 = vmatmul.mubr.bf16.gmra.mrb[0].mxu0 %v500
        %v643 = vpop.f32.mrb[0].mxu0
        %v644 = vadd.f32 0.0, %v643
        %v645 = vpop.f32.mrb[0].mxu0
        %v646 = vpop.f32.mrb[0].mxu0
        %v647 = vadd.f32 0.0, %v646
        %v648 = vpop.f32.mrb[0].mxu0
        %649 = vmatprep.mubr.bf16.mxu0 0
        %650 = vmatmul.mubr.bf16.gmra.mrb[0].mxu0 %v503
        %v651 = vpop.f32.mrb[0].mxu0
        %v652 = vadd.f32 0.0, %v651
        %v653 = vpop.f32.mrb[0].mxu0
        %v654 = vpop.f32.mrb[0].mxu0
        %v655 = vadd.f32 0.0, %v654
        %v656 = vpop.f32.mrb[0].mxu0
        %657 = vmatprep.mubr.bf16.mxu0 0
        %658 = vmatmul.mubr.bf16.gmra.mrb[0].mxu0 %v506
        %v659 = vpop.f32.mrb[0].mxu0
        %v660 = vadd.f32 0.0, %v659
        %v661 = vpop.f32.mrb[0].mxu0
        %v662 = vpop.f32.mrb[0].mxu0
        %v663 = vadd.f32 0.0, %v662
        %v664 = vpop.f32.mrb[0].mxu0
        %665 = vmatprep.mubr.bf16.mxu0 0
        %666 = vmatmul.mubr.bf16.gmra.mrb[0].mxu0 %v509
        %v667 = vpop.f32.mrb[0].mxu0
        %v668 = vadd.f32 0.0, %v667
        %v669 = vpop.f32.mrb[0].mxu0
        %v670 = vpop.f32.mrb[0].mxu0
        %v671 = vadd.f32 0.0, %v670
        %v672 = vpop.f32.mrb[0].mxu0
        %673 = vmatprep.mubr.bf16.mxu0 0
        %674 = vmatmul.mubr.bf16.gmra.mrb[0].mxu0 %v512
        %v675 = vpop.f32.mrb[0].mxu0
        %v676 = vadd.f32 0.0, %v675
        %v677 = vpop.f32.mrb[0].mxu0
        %v678 = vpop.f32.mrb[0].mxu0
        %v679 = vadd.f32 0.0, %v678
        %v680 = vpop.f32.mrb[0].mxu0
        %681 = vdwg.mxu0
        %v684 = vunpack.c.l.b16 %v341
        %v685 = vunpack.c.l.b16 %v342
        %v686 = vpack.c.b16 %v685, %v684
        %v689 = vunpack.c.l.b16 %v373
        %v690 = vunpack.c.l.b16 %v374
        %v691 = vpack.c.b16 %v690, %v689
        %v693 = vsel %vm465, %v686, 0
        %v696 = vand.u32 %v691, %v517
        %698 = vmatprep.subr.bf16.mxu0 0
        %699 = vmatpush1.bf16.msra.mxu0 %v696
        %700 = vmatprep.subr.bf16.mxu0 0
        %701 = vmatpush1.bf16.msra.mxu0 0
        %702 = vmatprep.subr.bf16.mxu0 0
        %703 = vmatpush1.bf16.msra.mxu0 0
        %704 = vmatprep.subr.bf16.mxu0 0
        %705 = vmatpush1.bf16.msra.mxu0 0
        %706 = vmatprep.subr.bf16.mxu0 0
        %707 = vmatpush1.bf16.msra.mxu0 0
        %708 = vmatprep.subr.bf16.mxu0 0
        %709 = vmatpush1.bf16.msra.mxu0 0
        %710 = vmatprep.subr.bf16.mxu0 0
        %711 = vmatpush1.bf16.msra.mxu0 0
        %712 = vmatprep.subr.bf16.mxu0 0
        %713 = vmatpush1.bf16.msra.mxu0 0
        %714 = vmatprep.subr.bf16.mxu0 0
        %715 = vmatpush1.bf16.msra.mxu0 0
        %716 = vmatprep.subr.bf16.mxu0 0
        %717 = vmatpush1.bf16.msra.mxu0 0
        %718 = vmatprep.subr.bf16.mxu0 0
        %719 = vmatpush1.bf16.msra.mxu0 0
        %720 = vmatprep.subr.bf16.mxu0 0
        %721 = vmatpush1.bf16.msra.mxu0 0
        %722 = vmatprep.subr.bf16.mxu0 0
        %723 = vmatpush1.bf16.msra.mxu0 0
        %724 = vmatprep.subr.bf16.mxu0 0
        %725 = vmatpush1.bf16.msra.mxu0 0
        %726 = vmatprep.subr.bf16.mxu0 0
        %727 = vmatpush1.bf16.msra.mxu0 0
        %728 = vmatprep.subr.bf16.mxu0 0
        %729 = vmatpush1.bf16.msra.mxu0 0
        %730 = vmatprep.mubr.bf16.mxu0 0
        %731 = vmatmul.mubr.bf16.gmra.mrb[0].mxu0 %v693
        %v732 = vpop.f32.mrb[0].mxu0
        %v733 = vadd.f32 %v556, %v732
        %v734 = vpop.f32.mrb[0].mxu0
        %v735 = vpop.f32.mrb[0].mxu0
        %v736 = vadd.f32 %v559, %v735
        %v737 = vpop.f32.mrb[0].mxu0
        %738 = vmatprep.mubr.bf16.mxu0 0
        %739 = vmatmul.mubr.bf16.gmra.mrb[0].mxu0 %v467
        %v740 = vpop.f32.mrb[0].mxu0
        %v741 = vadd.f32 %v564, %v740
        %v742 = vpop.f32.mrb[0].mxu0
        %v743 = vpop.f32.mrb[0].mxu0
        %v744 = vadd.f32 %v567, %v743
        %v745 = vpop.f32.mrb[0].mxu0
        %746 = vmatprep.mubr.bf16.mxu0 0
        %747 = vmatmul.mubr.bf16.gmra.mrb[0].mxu0 %v470
        %v748 = vpop.f32.mrb[0].mxu0
        %v749 = vadd.f32 %v572, %v748
        %v750 = vpop.f32.mrb[0].mxu0
        %v751 = vpop.f32.mrb[0].mxu0
        %v752 = vadd.f32 %v575, %v751
        %v753 = vpop.f32.mrb[0].mxu0
        %754 = vmatprep.mubr.bf16.mxu0 0
        %755 = vmatmul.mubr.bf16.gmra.mrb[0].mxu0 %v473
        %v756 = vpop.f32.mrb[0].mxu0
        %v757 = vadd.f32 %v580, %v756
        %v758 = vpop.f32.mrb[0].mxu0
        %v759 = vpop.f32.mrb[0].mxu0
        %v760 = vadd.f32 %v583, %v759
        %v761 = vpop.f32.mrb[0].mxu0
        %762 = vmatprep.mubr.bf16.mxu0 0
        %763 = vmatmul.mubr.bf16.gmra.mrb[0].mxu0 %v476
        %v764 = vpop.f32.mrb[0].mxu0
        %v765 = vadd.f32 %v588, %v764
        %v766 = vpop.f32.mrb[0].mxu0
        %v767 = vpop.f32.mrb[0].mxu0
        %v768 = vadd.f32 %v591, %v767
        %v769 = vpop.f32.mrb[0].mxu0
        %770 = vmatprep.mubr.bf16.mxu0 0
        %771 = vmatmul.mubr.bf16.gmra.mrb[0].mxu0 %v479
        %v772 = vpop.f32.mrb[0].mxu0
        %v773 = vadd.f32 %v596, %v772
        %v774 = vpop.f32.mrb[0].mxu0
        %v775 = vpop.f32.mrb[0].mxu0
        %v776 = vadd.f32 %v599, %v775
        %v777 = vpop.f32.mrb[0].mxu0
        %778 = vmatprep.mubr.bf16.mxu0 0
        %779 = vmatmul.mubr.bf16.gmra.mrb[0].mxu0 %v482
        %v780 = vpop.f32.mrb[0].mxu0
        %v781 = vadd.f32 %v604, %v780
        %v782 = vpop.f32.mrb[0].mxu0
        %v783 = vpop.f32.mrb[0].mxu0
        %v784 = vadd.f32 %v607, %v783
        %v785 = vpop.f32.mrb[0].mxu0
        %786 = vmatprep.mubr.bf16.mxu0 0
        %787 = vmatmul.mubr.bf16.gmra.mrb[0].mxu0 %v485
        %v788 = vpop.f32.mrb[0].mxu0
        %v789 = vadd.f32 %v612, %v788
        %v790 = vpop.f32.mrb[0].mxu0
        %v791 = vpop.f32.mrb[0].mxu0
        %v792 = vadd.f32 %v615, %v791
        %v793 = vpop.f32.mrb[0].mxu0
        %794 = vmatprep.mubr.bf16.mxu0 0
        %795 = vmatmul.mubr.bf16.gmra.mrb[0].mxu0 %v488
        %v796 = vpop.f32.mrb[0].mxu0
        %v797 = vadd.f32 %v620, %v796
        %v798 = vpop.f32.mrb[0].mxu0
        %v799 = vpop.f32.mrb[0].mxu0
        %v800 = vadd.f32 %v623, %v799
        %v801 = vpop.f32.mrb[0].mxu0
        %802 = vmatprep.mubr.bf16.mxu0 0
        %803 = vmatmul.mubr.bf16.gmra.mrb[0].mxu0 %v491
        %v804 = vpop.f32.mrb[0].mxu0
        %v805 = vadd.f32 %v628, %v804
        %v806 = vpop.f32.mrb[0].mxu0
        %v807 = vpop.f32.mrb[0].mxu0
        %v808 = vadd.f32 %v631, %v807
        %v809 = vpop.f32.mrb[0].mxu0
        %810 = vmatprep.mubr.bf16.mxu0 0
        %811 = vmatmul.mubr.bf16.gmra.mrb[0].mxu0 %v494
        %v812 = vpop.f32.mrb[0].mxu0
        %v813 = vadd.f32 %v636, %v812
        %v814 = vpop.f32.mrb[0].mxu0
        %v815 = vpop.f32.mrb[0].mxu0
        %v816 = vadd.f32 %v639, %v815
        %v817 = vpop.f32.mrb[0].mxu0
        %818 = vmatprep.mubr.bf16.mxu0 0
        %819 = vmatmul.mubr.bf16.gmra.mrb[0].mxu0 %v497
        %v820 = vpop.f32.mrb[0].mxu0
        %v821 = vadd.f32 %v644, %v820
        %v822 = vpop.f32.mrb[0].mxu0
        %v823 = vpop.f32.mrb[0].mxu0
        %v824 = vadd.f32 %v647, %v823
        %v825 = vpop.f32.mrb[0].mxu0
        %826 = vmatprep.mubr.bf16.mxu0 0
        %827 = vmatmul.mubr.bf16.gmra.mrb[0].mxu0 %v500
        %v828 = vpop.f32.mrb[0].mxu0
        %v829 = vadd.f32 %v652, %v828
        %v830 = vpop.f32.mrb[0].mxu0
        %v831 = vpop.f32.mrb[0].mxu0
        %v832 = vadd.f32 %v655, %v831
        %v833 = vpop.f32.mrb[0].mxu0
        %834 = vmatprep.mubr.bf16.mxu0 0
        %835 = vmatmul.mubr.bf16.gmra.mrb[0].mxu0 %v503
        %v836 = vpop.f32.mrb[0].mxu0
        %v837 = vadd.f32 %v660, %v836
        %v838 = vpop.f32.mrb[0].mxu0
        %v839 = vpop.f32.mrb[0].mxu0
        %v840 = vadd.f32 %v663, %v839
        %v841 = vpop.f32.mrb[0].mxu0
        %842 = vmatprep.mubr.bf16.mxu0 0
        %843 = vmatmul.mubr.bf16.gmra.mrb[0].mxu0 %v506
        %v844 = vpop.f32.mrb[0].mxu0
        %v845 = vadd.f32 %v668, %v844
        %v846 = vpop.f32.mrb[0].mxu0
        %v847 = vpop.f32.mrb[0].mxu0
        %v848 = vadd.f32 %v671, %v847
        %v849 = vpop.f32.mrb[0].mxu0
        %850 = vmatprep.mubr.bf16.mxu0 0
        %851 = vmatmul.mubr.bf16.gmra.mrb[0].mxu0 %v509
        %v852 = vpop.f32.mrb[0].mxu0
        %v853 = vadd.f32 %v676, %v852
        %v854 = vpop.f32.mrb[0].mxu0
        %v855 = vpop.f32.mrb[0].mxu0
        %v856 = vadd.f32 %v679, %v855
        %v857 = vpop.f32.mrb[0].mxu0
        %858 = vdwg.mxu0
        %v859 = vld [vmem:[%s329 + $0x10] sm:$0xf]
        %v860 = vld [vmem:[%s329 + $0x14] sm:$0xf]
        %v861 = vld [vmem:[%s329 + $0x18] sm:$0xf]
        %v862 = vld [vmem:[%s329 + $0x1c] sm:$0xf]
        %v863 = vld [vmem:[%s329 + $0x20] sm:$0xf]
        %v864 = vld [vmem:[%s329 + $0x24] sm:$0xf]
        %v865 = vld [vmem:[%s329 + $0x28] sm:$0xf]
        %v866 = vld [vmem:[%s329 + $0x2c] sm:$0xf]
        %v867 = vld [vmem:[%s329 + $0x30] sm:$0xf]
        %v868 = vld [vmem:[%s329 + $0x34] sm:$0xf]
        %v869 = vld [vmem:[%s329 + $0x38] sm:$0xf]
        %v870 = vld [vmem:[%s329 + $0x3c] sm:$0xf]
        %v871 = vld [vmem:[%s329 + $0x40] sm:$0xf]
        %v872 = vld [vmem:[%s329 + $0x44] sm:$0xf]
        %v873 = vld [vmem:[%s329 + $0x48] sm:$0xf]
        %v874 = vld [vmem:[%s329 + $0x4c] sm:$0xf]
        %v875 = vld [vmem:[%s329 + $0x50] sm:$0xf]
        %v876 = vld [vmem:[%s329 + $0x54] sm:$0xf]
        %v877 = vld [vmem:[%s329 + $0x58] sm:$0xf]
        %v878 = vld [vmem:[%s329 + $0x5c] sm:$0xf]
        %v879 = vld [vmem:[%s329 + $0x60] sm:$0xf]
        %v880 = vld [vmem:[%s329 + $0x64] sm:$0xf]
        %v881 = vld [vmem:[%s329 + $0x68] sm:$0xf]
        %v882 = vld [vmem:[%s329 + $0x6c] sm:$0xf]
        %v883 = vld [vmem:[%s329 + $0x70] sm:$0xf]
        %v884 = vld [vmem:[%s329 + $0x74] sm:$0xf]
        %v885 = vld [vmem:[%s329 + $0x78] sm:$0xf]
        %v886 = vld [vmem:[%s329 + $0x7c] sm:$0xf]
        %v887 = vld [vmem:[%s329 + $0x80] sm:$0xf]
        %v888 = vld [vmem:[%s329 + $0x84] sm:$0xf]
        %v889 = vld [vmem:[%s329 + $0x88] sm:$0xf]
        %v890 = vld [vmem:[%s329 + $0x8c] sm:$0xf]
        %s891 = scalar_lea.vmem %s1, 16
        %v892 = vld [vmem:[%s891] sm:$0xf]
        %v893 = vld [vmem:[%s891 + $0x4] sm:$0x1]
        %v926 = vunpack.c.l.b16 %v859
        %v927 = vunpack.c.l.b16 %v860
        %v928 = vunpack.c.l.b16 %v861
        %v929 = vunpack.c.l.b16 %v862
        %v930 = vunpack.c.l.b16 %v863
        %v931 = vunpack.c.l.b16 %v864
        %v932 = vunpack.c.l.b16 %v865
        %v933 = vunpack.c.l.b16 %v866
        %v934 = vunpack.c.l.b16 %v867
        %v935 = vunpack.c.l.b16 %v868
        %v936 = vunpack.c.l.b16 %v869
        %v937 = vunpack.c.l.b16 %v870
        %v938 = vunpack.c.l.b16 %v871
        %v939 = vunpack.c.l.b16 %v872
        %v940 = vunpack.c.l.b16 %v873
        %v941 = vunpack.c.l.b16 %v874
        %v942 = vunpack.c.l.b16 %v875
        %v943 = vunpack.c.l.b16 %v876
        %v944 = vunpack.c.l.b16 %v877
        %v945 = vunpack.c.l.b16 %v878
        %v946 = vunpack.c.l.b16 %v879
        %v947 = vunpack.c.l.b16 %v880
        %v948 = vunpack.c.l.b16 %v881
        %v949 = vunpack.c.l.b16 %v882
        %v950 = vunpack.c.l.b16 %v883
        %v951 = vunpack.c.l.b16 %v884
        %v952 = vunpack.c.l.b16 %v885
        %v953 = vunpack.c.l.b16 %v886
        %v954 = vunpack.c.l.b16 %v887
        %v955 = vunpack.c.l.b16 %v888
        %v956 = vunpack.c.l.b16 %v889
        %v957 = vunpack.c.l.b16 %v890
        %v958 = vpack.c.b16 %v927, %v926
        %v959 = vpack.c.b16 %v929, %v928
        %v960 = vpack.c.b16 %v931, %v930
        %v961 = vpack.c.b16 %v933, %v932
        %v962 = vpack.c.b16 %v935, %v934
        %v963 = vpack.c.b16 %v937, %v936
        %v964 = vpack.c.b16 %v939, %v938
        %v965 = vpack.c.b16 %v941, %v940
        %v966 = vpack.c.b16 %v943, %v942
        %v967 = vpack.c.b16 %v945, %v944
        %v968 = vpack.c.b16 %v947, %v946
        %v969 = vpack.c.b16 %v949, %v948
        %v970 = vpack.c.b16 %v951, %v950
        %v971 = vpack.c.b16 %v953, %v952
        %v972 = vpack.c.b16 %v955, %v954
        %v973 = vpack.c.b16 %v957, %v956
        %v976 = vunpack.c.l.b16 %v892
        %v977 = vunpack.c.l.b16 %v893
        %v978 = vpack.c.b16 %v977, %v976
        %v980 = vsel %vm465, %v958, 0
        %v983 = vsel %vm465, %v959, 0
        %v986 = vsel %vm465, %v960, 0
        %v989 = vsel %vm465, %v961, 0
        %v992 = vsel %vm465, %v962, 0
        %v995 = vsel %vm465, %v963, 0
        %v998 = vsel %vm465, %v964, 0
        %v1001 = vsel %vm465, %v965, 0
        %v1004 = vsel %vm465, %v966, 0
        %v1007 = vsel %vm465, %v967, 0
        %v1010 = vsel %vm465, %v968, 0
        %v1013 = vsel %vm465, %v969, 0
        %v1016 = vsel %vm465, %v970, 0
        %v1019 = vsel %vm465, %v971, 0
        %v1022 = vsel %vm465, %v972, 0
        %v1025 = vsel %vm465, %v973, 0
        %v1028 = vand.u32 %v978, %v517
        %1030 = vmatprep.subr.bf16.mxu0 0
        %1031 = vmatpush1.bf16.msra.mxu0 %v1028
        %1032 = vmatprep.subr.bf16.mxu0 0
        %1033 = vmatpush1.bf16.msra.mxu0 0
        %1034 = vmatprep.subr.bf16.mxu0 0
        %1035 = vmatpush1.bf16.msra.mxu0 0
        %1036 = vmatprep.subr.bf16.mxu0 0
        %1037 = vmatpush1.bf16.msra.mxu0 0
        %1038 = vmatprep.subr.bf16.mxu0 0
        %1039 = vmatpush1.bf16.msra.mxu0 0
        %1040 = vmatprep.subr.bf16.mxu0 0
        %1041 = vmatpush1.bf16.msra.mxu0 0
        %1042 = vmatprep.subr.bf16.mxu0 0
        %1043 = vmatpush1.bf16.msra.mxu0 0
        %1044 = vmatprep.subr.bf16.mxu0 0
        %1045 = vmatpush1.bf16.msra.mxu0 0
        %1046 = vmatprep.subr.bf16.mxu0 0
        %1047 = vmatpush1.bf16.msra.mxu0 0
        %1048 = vmatprep.subr.bf16.mxu0 0
        %1049 = vmatpush1.bf16.msra.mxu0 0
        %1050 = vmatprep.subr.bf16.mxu0 0
        %1051 = vmatpush1.bf16.msra.mxu0 0
        %1052 = vmatprep.subr.bf16.mxu0 0
        %1053 = vmatpush1.bf16.msra.mxu0 0
        %1054 = vmatprep.subr.bf16.mxu0 0
        %1055 = vmatpush1.bf16.msra.mxu0 0
        %1056 = vmatprep.subr.bf16.mxu0 0
        %1057 = vmatpush1.bf16.msra.mxu0 0
        %1058 = vmatprep.subr.bf16.mxu0 0
        %1059 = vmatpush1.bf16.msra.mxu0 0
        %1060 = vmatprep.subr.bf16.mxu0 0
        %1061 = vmatpush1.bf16.msra.mxu0 0
        %1062 = vmatprep.mubr.bf16.mxu0 0
        %1063 = vmatmul.mubr.bf16.gmra.mrb[0].mxu0 %v980
        %v1064 = vpop.f32.mrb[0].mxu0
        %v1065 = vadd.f32 0.0, %v1064
        %v1066 = vpop.f32.mrb[0].mxu0
        %v1067 = vpop.f32.mrb[0].mxu0
        %v1068 = vadd.f32 0.0, %v1067
        %v1069 = vpop.f32.mrb[0].mxu0
        %1070 = vmatprep.mubr.bf16.mxu0 0
        %1071 = vmatmul.mubr.bf16.gmra.mrb[0].mxu0 %v983
        %v1072 = vpop.f32.mrb[0].mxu0
        %v1073 = vadd.f32 0.0, %v1072
        %v1074 = vpop.f32.mrb[0].mxu0
        %v1075 = vpop.f32.mrb[0].mxu0
        %v1076 = vadd.f32 0.0, %v1075
        %v1077 = vpop.f32.mrb[0].mxu0
        %1078 = vmatprep.mubr.bf16.mxu0 0
        %1079 = vmatmul.mubr.bf16.gmra.mrb[0].mxu0 %v986
        %v1080 = vpop.f32.mrb[0].mxu0
        %v1081 = vadd.f32 0.0, %v1080
        %v1082 = vpop.f32.mrb[0].mxu0
        %v1083 = vpop.f32.mrb[0].mxu0
        %v1084 = vadd.f32 0.0, %v1083
        %v1085 = vpop.f32.mrb[0].mxu0
        %1086 = vmatprep.mubr.bf16.mxu0 0
        %1087 = vmatmul.mubr.bf16.gmra.mrb[0].mxu0 %v989
        %v1088 = vpop.f32.mrb[0].mxu0
        %v1089 = vadd.f32 0.0, %v1088
        %v1090 = vpop.f32.mrb[0].mxu0
        %v1091 = vpop.f32.mrb[0].mxu0
        %v1092 = vadd.f32 0.0, %v1091
        %v1093 = vpop.f32.mrb[0].mxu0
        %1094 = vmatprep.mubr.bf16.mxu0 0
        %1095 = vmatmul.mubr.bf16.gmra.mrb[0].mxu0 %v992
        %v1096 = vpop.f32.mrb[0].mxu0
        %v1097 = vadd.f32 0.0, %v1096
        %v1098 = vpop.f32.mrb[0].mxu0
        %v1099 = vpop.f32.mrb[0].mxu0
        %v1100 = vadd.f32 0.0, %v1099
        %v1101 = vpop.f32.mrb[0].mxu0
        %1102 = vmatprep.mubr.bf16.mxu0 0
        %1103 = vmatmul.mubr.bf16.gmra.mrb[0].mxu0 %v995
        %v1104 = vpop.f32.mrb[0].mxu0
        %v1105 = vadd.f32 0.0, %v1104
        %v1106 = vpop.f32.mrb[0].mxu0
        %v1107 = vpop.f32.mrb[0].mxu0
        %v1108 = vadd.f32 0.0, %v1107
        %v1109 = vpop.f32.mrb[0].mxu0
        %1110 = vmatprep.mubr.bf16.mxu0 0
        %1111 = vmatmul.mubr.bf16.gmra.mrb[0].mxu0 %v998
        %v1112 = vpop.f32.mrb[0].mxu0
        %v1113 = vadd.f32 0.0, %v1112
        %v1114 = vpop.f32.mrb[0].mxu0
        %v1115 = vpop.f32.mrb[0].mxu0
        %v1116 = vadd.f32 0.0, %v1115
        %v1117 = vpop.f32.mrb[0].mxu0
        %1118 = vmatprep.mubr.bf16.mxu0 0
        %1119 = vmatmul.mubr.bf16.gmra.mrb[0].mxu0 %v1001
        %v1120 = vpop.f32.mrb[0].mxu0
        %v1121 = vadd.f32 0.0, %v1120
        %v1122 = vpop.f32.mrb[0].mxu0
        %v1123 = vpop.f32.mrb[0].mxu0
        %v1124 = vadd.f32 0.0, %v1123
        %v1125 = vpop.f32.mrb[0].mxu0
        %1126 = vmatprep.mubr.bf16.mxu0 0
        %1127 = vmatmul.mubr.bf16.gmra.mrb[0].mxu0 %v1004
        %v1128 = vpop.f32.mrb[0].mxu0
        %v1129 = vadd.f32 0.0, %v1128
        %v1130 = vpop.f32.mrb[0].mxu0
        %v1131 = vpop.f32.mrb[0].mxu0
        %v1132 = vadd.f32 0.0, %v1131
        %v1133 = vpop.f32.mrb[0].mxu0
        %1134 = vmatprep.mubr.bf16.mxu0 0
        %1135 = vmatmul.mubr.bf16.gmra.mrb[0].mxu0 %v1007
        %v1136 = vpop.f32.mrb[0].mxu0
        %v1137 = vadd.f32 0.0, %v1136
        %v1138 = vpop.f32.mrb[0].mxu0
        %v1139 = vpop.f32.mrb[0].mxu0
        %v1140 = vadd.f32 0.0, %v1139
        %v1141 = vpop.f32.mrb[0].mxu0
        %1142 = vmatprep.mubr.bf16.mxu0 0
        %1143 = vmatmul.mubr.bf16.gmra.mrb[0].mxu0 %v1010
        %v1144 = vpop.f32.mrb[0].mxu0
        %v1145 = vadd.f32 0.0, %v1144
        %v1146 = vpop.f32.mrb[0].mxu0
        %v1147 = vpop.f32.mrb[0].mxu0
        %v1148 = vadd.f32 0.0, %v1147
        %v1149 = vpop.f32.mrb[0].mxu0
        %1150 = vmatprep.mubr.bf16.mxu0 0
        %1151 = vmatmul.mubr.bf16.gmra.mrb[0].mxu0 %v1013
        %v1152 = vpop.f32.mrb[0].mxu0
        %v1153 = vadd.f32 0.0, %v1152
        %v1154 = vpop.f32.mrb[0].mxu0
        %v1155 = vpop.f32.mrb[0].mxu0
        %v1156 = vadd.f32 0.0, %v1155
        %v1157 = vpop.f32.mrb[0].mxu0
        %1158 = vmatprep.mubr.bf16.mxu0 0
        %1159 = vmatmul.mubr.bf16.gmra.mrb[0].mxu0 %v1016
        %v1160 = vpop.f32.mrb[0].mxu0
        %v1161 = vadd.f32 0.0, %v1160
        %v1162 = vpop.f32.mrb[0].mxu0
        %v1163 = vpop.f32.mrb[0].mxu0
        %v1164 = vadd.f32 0.0, %v1163
        %v1165 = vpop.f32.mrb[0].mxu0
        %1166 = vmatprep.mubr.bf16.mxu0 0
        %1167 = vmatmul.mubr.bf16.gmra.mrb[0].mxu0 %v1019
        %v1168 = vpop.f32.mrb[0].mxu0
        %v1169 = vadd.f32 0.0, %v1168
        %v1170 = vpop.f32.mrb[0].mxu0
        %v1171 = vpop.f32.mrb[0].mxu0
        %v1172 = vadd.f32 0.0, %v1171
        %v1173 = vpop.f32.mrb[0].mxu0
        %1174 = vmatprep.mubr.bf16.mxu0 0
        %1175 = vmatmul.mubr.bf16.gmra.mrb[0].mxu0 %v1022
        %v1176 = vpop.f32.mrb[0].mxu0
        %v1177 = vadd.f32 0.0, %v1176
        %v1178 = vpop.f32.mrb[0].mxu0
        %v1179 = vpop.f32.mrb[0].mxu0
        %v1180 = vadd.f32 0.0, %v1179
        %v1181 = vpop.f32.mrb[0].mxu0
        %1182 = vmatprep.mubr.bf16.mxu0 0
        %1183 = vmatmul.mubr.bf16.gmra.mrb[0].mxu0 %v1025
        %v1184 = vpop.f32.mrb[0].mxu0
        %v1185 = vadd.f32 0.0, %v1184
        %v1186 = vpop.f32.mrb[0].mxu0
        %v1187 = vpop.f32.mrb[0].mxu0
        %v1188 = vadd.f32 0.0, %v1187
        %v1189 = vpop.f32.mrb[0].mxu0
        %1190 = vdwg.mxu0
        %v1191 = vadd.f32 %v733, %v1065
        %v1192 = vadd.f32 %v736, %v1068
        %v1193 = vadd.f32 %v741, %v1073
        %v1194 = vadd.f32 %v744, %v1076
        %v1195 = vadd.f32 %v749, %v1081
        %v1196 = vadd.f32 %v752, %v1084
        %v1197 = vadd.f32 %v757, %v1089
        %v1198 = vadd.f32 %v760, %v1092
        %v1199 = vadd.f32 %v765, %v1097
        %v1200 = vadd.f32 %v768, %v1100
        %v1201 = vadd.f32 %v773, %v1105
        %v1202 = vadd.f32 %v776, %v1108
        %v1203 = vadd.f32 %v781, %v1113
        %v1204 = vadd.f32 %v784, %v1116
        %v1205 = vadd.f32 %v789, %v1121
        %v1206 = vadd.f32 %v792, %v1124
        %v1207 = vadd.f32 %v797, %v1129
        %v1208 = vadd.f32 %v800, %v1132
        %v1209 = vadd.f32 %v805, %v1137
        %v1210 = vadd.f32 %v808, %v1140
        %v1211 = vadd.f32 %v813, %v1145
        %v1212 = vadd.f32 %v816, %v1148
        %v1213 = vadd.f32 %v821, %v1153
        %v1214 = vadd.f32 %v824, %v1156
        %v1215 = vadd.f32 %v829, %v1161
        %v1216 = vadd.f32 %v832, %v1164
        %v1217 = vadd.f32 %v837, %v1169
        %v1218 = vadd.f32 %v840, %v1172
        %v1219 = vadd.f32 %v845, %v1177
        %v1220 = vadd.f32 %v848, %v1180
        %v1221 = vadd.f32 %v853, %v1185
        %v1222 = vadd.f32 %v856, %v1188
        %v1223 = vld [vmem:[%s2] sm:$0x1]
        %v1225 = vlaneseq
        %v1226 = vshrl.u32 %v1225, 7
        %v1227 = vsub.s32 0, %v1226
        %v1228 = vrot.slane %v1223, %v1227
        %v1230 = vadd.f32 %v1191, %v1228
        %v1231 = vadd.f32 %v1192, %v1228
        %v1232 = vadd.f32 %v1193, %v1228
        %v1233 = vadd.f32 %v1194, %v1228
        %v1234 = vadd.f32 %v1195, %v1228
        %v1235 = vadd.f32 %v1196, %v1228
        %v1236 = vadd.f32 %v1197, %v1228
        %v1237 = vadd.f32 %v1198, %v1228
        %v1238 = vadd.f32 %v1199, %v1228
        %v1239 = vadd.f32 %v1200, %v1228
        %v1240 = vadd.f32 %v1201, %v1228
        %v1241 = vadd.f32 %v1202, %v1228
        %v1242 = vadd.f32 %v1203, %v1228
        %v1243 = vadd.f32 %v1204, %v1228
        %v1244 = vadd.f32 %v1205, %v1228
        %v1245 = vadd.f32 %v1206, %v1228
        %v1246 = vadd.f32 %v1207, %v1228
        %v1247 = vadd.f32 %v1208, %v1228
        %v1248 = vadd.f32 %v1209, %v1228
        %v1249 = vadd.f32 %v1210, %v1228
        %v1250 = vadd.f32 %v1211, %v1228
        %v1251 = vadd.f32 %v1212, %v1228
        %v1252 = vadd.f32 %v1213, %v1228
        %v1253 = vadd.f32 %v1214, %v1228
        %v1254 = vadd.f32 %v1215, %v1228
        %v1255 = vadd.f32 %v1216, %v1228
        %v1256 = vadd.f32 %v1217, %v1228
        %v1257 = vadd.f32 %v1218, %v1228
        %v1258 = vadd.f32 %v1219, %v1228
        %v1259 = vadd.f32 %v1220, %v1228
        %v1260 = vadd.f32 %v1221, %v1228
        %v1261 = vadd.f32 %v1222, %v1228
        %v1262 = vmax.f32 %v1230, 0.0
        %v1263 = vmax.f32 %v1231, 0.0
        %v1264 = vmax.f32 %v1232, 0.0
        %v1265 = vmax.f32 %v1233, 0.0
        %v1266 = vmax.f32 %v1234, 0.0
        %v1267 = vmax.f32 %v1235, 0.0
        %v1268 = vmax.f32 %v1236, 0.0
        %v1269 = vmax.f32 %v1237, 0.0
        %v1270 = vmax.f32 %v1238, 0.0
        %v1271 = vmax.f32 %v1239, 0.0
        %v1272 = vmax.f32 %v1240, 0.0
        %v1273 = vmax.f32 %v1241, 0.0
        %v1274 = vmax.f32 %v1242, 0.0
        %v1275 = vmax.f32 %v1243, 0.0
        %v1276 = vmax.f32 %v1244, 0.0
        %v1277 = vmax.f32 %v1245, 0.0
        %v1278 = vmax.f32 %v1246, 0.0
        %v1279 = vmax.f32 %v1247, 0.0
        %v1280 = vmax.f32 %v1248, 0.0
        %v1281 = vmax.f32 %v1249, 0.0
        %v1282 = vmax.f32 %v1250, 0.0
        %v1283 = vmax.f32 %v1251, 0.0
        %v1284 = vmax.f32 %v1252, 0.0
        %v1285 = vmax.f32 %v1253, 0.0
        %v1286 = vmax.f32 %v1254, 0.0
        %v1287 = vmax.f32 %v1255, 0.0
        %v1288 = vmax.f32 %v1256, 0.0
        %v1289 = vmax.f32 %v1257, 0.0
        %v1290 = vmax.f32 %v1258, 0.0
        %v1291 = vmax.f32 %v1259, 0.0
        %v1292 = vmax.f32 %v1260, 0.0
        %v1293 = vmax.f32 %v1261, 0.0
        %vm1294 = vcmask 130048
        %1295 = vst.msk [vmem:[#allocation4] sm:$0xff] %vm1294, %v1262
        %1296 = vst.msk [vmem:[#allocation4 + $0x8] sm:$0xff] %vm1294, %v1263
        %1297 = vst.msk [vmem:[#allocation4 + $0x10] sm:$0xff] %vm1294, %v1264
        %1298 = vst.msk [vmem:[#allocation4 + $0x18] sm:$0xff] %vm1294, %v1265
        %1299 = vst.msk [vmem:[#allocation4 + $0x20] sm:$0xff] %vm1294, %v1266
        %1300 = vst.msk [vmem:[#allocation4 + $0x28] sm:$0xff] %vm1294, %v1267
        %1301 = vst.msk [vmem:[#allocation4 + $0x30] sm:$0xff] %vm1294, %v1268
        %1302 = vst.msk [vmem:[#allocation4 + $0x38] sm:$0xff] %vm1294, %v1269
        %1303 = vst.msk [vmem:[#allocation4 + $0x40] sm:$0xff] %vm1294, %v1270
        %1304 = vst.msk [vmem:[#allocation4 + $0x48] sm:$0xff] %vm1294, %v1271
        %1305 = vst.msk [vmem:[#allocation4 + $0x50] sm:$0xff] %vm1294, %v1272
        %1306 = vst.msk [vmem:[#allocation4 + $0x58] sm:$0xff] %vm1294, %v1273
        %1307 = vst.msk [vmem:[#allocation4 + $0x60] sm:$0xff] %vm1294, %v1274
        %1308 = vst.msk [vmem:[#allocation4 + $0x68] sm:$0xff] %vm1294, %v1275
        %1309 = vst.msk [vmem:[#allocation4 + $0x70] sm:$0xff] %vm1294, %v1276
        %1310 = vst.msk [vmem:[#allocation4 + $0x78] sm:$0xff] %vm1294, %v1277
        %1311 = vst.msk [vmem:[#allocation4 + $0x80] sm:$0xff] %vm1294, %v1278
        %1312 = vst.msk [vmem:[#allocation4 + $0x88] sm:$0xff] %vm1294, %v1279
        %1313 = vst.msk [vmem:[#allocation4 + $0x90] sm:$0xff] %vm1294, %v1280
        %1314 = vst.msk [vmem:[#allocation4 + $0x98] sm:$0xff] %vm1294, %v1281
        %1315 = vst.msk [vmem:[#allocation4 + $0xa0] sm:$0xff] %vm1294, %v1282
        %1316 = vst.msk [vmem:[#allocation4 + $0xa8] sm:$0xff] %vm1294, %v1283
        %1317 = vst.msk [vmem:[#allocation4 + $0xb0] sm:$0xff] %vm1294, %v1284
        %1318 = vst.msk [vmem:[#allocation4 + $0xb8] sm:$0xff] %vm1294, %v1285
        %1319 = vst.msk [vmem:[#allocation4 + $0xc0] sm:$0xff] %vm1294, %v1286
        %1320 = vst.msk [vmem:[#allocation4 + $0xc8] sm:$0xff] %vm1294, %v1287
        %1321 = vst.msk [vmem:[#allocation4 + $0xd0] sm:$0xff] %vm1294, %v1288
        %1322 = vst.msk [vmem:[#allocation4 + $0xd8] sm:$0xff] %vm1294, %v1289
        %1323 = vst.msk [vmem:[#allocation4 + $0xe0] sm:$0xff] %vm1294, %v1290
        %1324 = vst.msk [vmem:[#allocation4 + $0xe8] sm:$0xff] %vm1294, %v1291
        %1325 = vst.msk [vmem:[#allocation4 + $0xf0] sm:$0xff] %vm1294, %v1292
        %1326 = vst.msk [vmem:[#allocation4 + $0xf8] sm:$0xff] %vm1294, %v1293
        %v1327 = vld [vmem:[#allocation4] ss:$2 sm:$0xff]
        %s1328 = scalar_lea.vmem [#allocation4], 16
        %v1329 = vld [vmem:[%s1328] ss:$2 sm:$0xff]
        %s1330 = scalar_lea.vmem [#allocation4], 32
        %v1331 = vld [vmem:[%s1330] ss:$2 sm:$0xff]
        %s1332 = scalar_lea.vmem [#allocation4], 48
        %v1333 = vld [vmem:[%s1332] ss:$2 sm:$0xff]
        %s1334 = scalar_lea.vmem [#allocation4], 64
        %v1335 = vld [vmem:[%s1334] ss:$2 sm:$0xff]
        %s1336 = scalar_lea.vmem [#allocation4], 80
        %v1337 = vld [vmem:[%s1336] ss:$2 sm:$0xff]
        %s1338 = scalar_lea.vmem [#allocation4], 96
        %v1339 = vld [vmem:[%s1338] ss:$2 sm:$0xff]
        %s1340 = scalar_lea.vmem [#allocation4], 112
        %v1341 = vld [vmem:[%s1340] ss:$2 sm:$0xff]
        %s1342 = scalar_lea.vmem [#allocation4], 128
        %v1343 = vld [vmem:[%s1342] ss:$2 sm:$0xff]
        %s1344 = scalar_lea.vmem [#allocation4], 144
        %v1345 = vld [vmem:[%s1344] ss:$2 sm:$0xff]
        %s1346 = scalar_lea.vmem [#allocation4], 160
        %v1347 = vld [vmem:[%s1346] ss:$2 sm:$0xff]
        %s1348 = scalar_lea.vmem [#allocation4], 176
        %v1349 = vld [vmem:[%s1348] ss:$2 sm:$0xff]
        %s1350 = scalar_lea.vmem [#allocation4], 192
        %v1351 = vld [vmem:[%s1350] ss:$2 sm:$0xff]
        %s1352 = scalar_lea.vmem [#allocation4], 208
        %v1353 = vld [vmem:[%s1352] ss:$2 sm:$0xff]
        %s1354 = scalar_lea.vmem [#allocation4], 224
        %v1355 = vld [vmem:[%s1354] ss:$2 sm:$0xff]
        %s1356 = scalar_lea.vmem [#allocation4], 240
        %v1357 = vld [vmem:[%s1356] ss:$2 sm:$0xff]
        %s1358 = scalar_lea.vmem [#allocation4], 1
        %v1359 = vld [vmem:[%s1358] ss:$2 sm:$0xff]
        %s1360 = scalar_lea.vmem [#allocation4], 17
        %v1361 = vld [vmem:[%s1360] ss:$2 sm:$0xff]
        %s1362 = scalar_lea.vmem [#allocation4], 33
        %v1363 = vld [vmem:[%s1362] ss:$2 sm:$0xff]
        %s1364 = scalar_lea.vmem [#allocation4], 49
        %v1365 = vld [vmem:[%s1364] ss:$2 sm:$0xff]
        %s1366 = scalar_lea.vmem [#allocation4], 65
        %v1367 = vld [vmem:[%s1366] ss:$2 sm:$0xff]
        %s1368 = scalar_lea.vmem [#allocation4], 81
        %v1369 = vld [vmem:[%s1368] ss:$2 sm:$0xff]
        %s1370 = scalar_lea.vmem [#allocation4], 97
        %v1371 = vld [vmem:[%s1370] ss:$2 sm:$0xff]
        %s1372 = scalar_lea.vmem [#allocation4], 113
        %v1373 = vld [vmem:[%s1372] ss:$2 sm:$0xff]
        %s1374 = scalar_lea.vmem [#allocation4], 129
        %v1375 = vld [vmem:[%s1374] ss:$2 sm:$0xff]
        %s1376 = scalar_lea.vmem [#allocation4], 145
        %v1377 = vld [vmem:[%s1376] ss:$2 sm:$0xff]
        %s1378 = scalar_lea.vmem [#allocation4], 161
        %v1379 = vld [vmem:[%s1378] ss:$2 sm:$0xff]
        %s1380 = scalar_lea.vmem [#allocation4], 177
        %v1381 = vld [vmem:[%s1380] ss:$2 sm:$0xff]
        %s1382 = scalar_lea.vmem [#allocation4], 193
        %v1383 = vld [vmem:[%s1382] ss:$2 sm:$0xff]
        %s1384 = scalar_lea.vmem [#allocation4], 209
        %v1385 = vld [vmem:[%s1384] ss:$2 sm:$0xff]
        %s1386 = scalar_lea.vmem [#allocation4], 225
        %v1387 = vld [vmem:[%s1386] ss:$2 sm:$0xff]
        %s1388 = scalar_lea.vmem [#allocation4], 241
        %v1389 = vld [vmem:[%s1388] ss:$2 sm:$0xff]
        %v1390 = vmax.f32 %v1327, %v1359
        %v1391 = vmax.f32 %v1329, %v1361
        %v1392 = vmax.f32 %v1331, %v1363
        %v1393 = vmax.f32 %v1333, %v1365
        %v1394 = vmax.f32 %v1335, %v1367
        %v1395 = vmax.f32 %v1337, %v1369
        %v1396 = vmax.f32 %v1339, %v1371
        %v1397 = vmax.f32 %v1341, %v1373
        %v1398 = vmax.f32 %v1343, %v1375
        %v1399 = vmax.f32 %v1345, %v1377
        %v1400 = vmax.f32 %v1347, %v1379
        %v1401 = vmax.f32 %v1349, %v1381
        %v1402 = vmax.f32 %v1351, %v1383
        %v1403 = vmax.f32 %v1353, %v1385
        %v1404 = vmax.f32 %v1355, %v1387
        %v1405 = vmax.f32 %v1357, %v1389
        %v1406 = vmax.f32 %v1390, %v1391
        %v1407 = vmax.f32 %v1392, %v1393
        %v1408 = vmax.f32 %v1394, %v1395
        %v1409 = vmax.f32 %v1396, %v1397
        %v1410 = vmax.f32 %v1398, %v1399
        %v1411 = vmax.f32 %v1400, %v1401
        %v1412 = vmax.f32 %v1402, %v1403
        %v1413 = vmax.f32 %v1404, %v1405
        %v1414 = vpack.c.bf16 %v1406, %v1406
        %v1416 = vrot.slane %v1414, 4
        %1417 = vrot.lane.b32.xlu0 %v1416, 16
        %v1418 = vpop.permute.xlu0 %1417
        %vm1420 = vcmask 261252
        %1421 = vst.msk [vmem:[#allocation2] sm:$0xf0] %vm1420, %v1418
        %v1423 = vshrl.u32 %v1414, 16
        %v1425 = vrot.slane %v1423, 3
        %v1426 = vshll.u32 %v1414, 16
        %v1428 = vrot.slane %v1426, 4
        %v1429 = vor.u32 %v1425, %v1428
        %vm1431 = vcmask 130052
        %vm1432 = vsmask.f32 7954
        %vm1433 = vmand %vm1431, %vm1432
        %v1434 = vld [vmem:[#allocation2] sm:$0xf0]
        %v1435 = vsel %vm1433, %v1429, %v1434
        %1436 = vst [vmem:[#allocation2] sm:$0xf0] %v1435
        %v1437 = vrot.slane %v1423, 4
        %v1438 = vrot.slane %v1426, 5
        %v1439 = vor.u32 %v1437, %v1438
        %1440 = vrot.lane.b32.xlu0 %v1439, 32
        %v1441 = vpop.permute.xlu0 %1440
        %vm1443 = vcmask 392452
        %vm1444 = vsmask.f32 7424
        %vm1445 = vmand %vm1443, %vm1444
        %v1446 = vld [vmem:[#allocation2] sm:$0xf0]
        %v1447 = vsel %vm1445, %v1441, %v1446
        %1448 = vst [vmem:[#allocation2] sm:$0xf0] %v1447
        %v1449 = vpack.c.bf16 %v1407, %v1407
        %1451 = vrot.lane.b32.xlu0 %v1449, 16
        %v1452 = vpop.permute.xlu0 %1451
        %vm1454 = vcmask 257152
        %1455 = vst.msk [vmem:[#allocation2 + $0x8] sm:$0xf] %vm1454, %v1452
        %v1457 = vshrl.u32 %v1449, 16
        %v1459 = vrot.slane %v1457, 7
        %v1460 = vshll.u32 %v1449, 16
        %v1462 = vor.u32 %v1459, %v1460
        %vm1464 = vcmask 125952
        %vm1465 = vsmask.f32 7938
        %vm1466 = vmand %vm1464, %vm1465
        %v1467 = vld [vmem:[#allocation2 + $0x8] sm:$0xf]
        %v1468 = vsel %vm1466, %v1462, %v1467
        %1469 = vst [vmem:[#allocation2 + $0x8] sm:$0xf] %v1468
        %v1470 = vrot.slane %v1460, 1
        %v1471 = vor.u32 %v1457, %v1470
        %1472 = vrot.lane.b32.xlu0 %v1471, 32
        %v1473 = vpop.permute.xlu0 %1472
        %vm1475 = vcmask 388352
        %vm1476 = vsmask.f32 3328
        %vm1477 = vmand %vm1475, %vm1476
        %v1478 = vld [vmem:[#allocation2 + $0x8] sm:$0xf]
        %v1479 = vsel %vm1477, %v1473, %v1478
        %1480 = vst [vmem:[#allocation2 + $0x8] sm:$0xf] %v1479
        %v1481 = vpack.c.bf16 %v1408, %v1408
        %v1483 = vrot.slane %v1481, 4
        %1484 = vrot.lane.b32.xlu0 %v1483, 16
        %v1485 = vpop.permute.xlu0 %1484
        %1487 = vst.msk [vmem:[#allocation2 + $0x8] sm:$0xf0] %vm1420, %v1485
        %v1489 = vshrl.u32 %v1481, 16
        %v1491 = vrot.slane %v1489, 3
        %v1492 = vshll.u32 %v1481, 16
        %v1494 = vrot.slane %v1492, 4
        %v1495 = vor.u32 %v1491, %v1494
        %v1497 = vld [vmem:[#allocation2 + $0x8] sm:$0xf0]
        %v1498 = vsel %vm1433, %v1495, %v1497
        %1499 = vst [vmem:[#allocation2 + $0x8] sm:$0xf0] %v1498
        %v1500 = vrot.slane %v1489, 4
        %v1501 = vrot.slane %v1492, 5
        %v1502 = vor.u32 %v1500, %v1501
        %1503 = vrot.lane.b32.xlu0 %v1502, 32
        %v1504 = vpop.permute.xlu0 %1503
        %v1506 = vld [vmem:[#allocation2 + $0x8] sm:$0xf0]
        %v1507 = vsel %vm1445, %v1504, %v1506
        %1508 = vst [vmem:[#allocation2 + $0x8] sm:$0xf0] %v1507
        %v1509 = vpack.c.bf16 %v1409, %v1409
        %1511 = vrot.lane.b32.xlu0 %v1509, 16
        %v1512 = vpop.permute.xlu0 %1511
        %1514 = vst.msk [vmem:[#allocation2 + $0x10] sm:$0xf] %vm1454, %v1512
        %v1516 = vshrl.u32 %v1509, 16
        %v1518 = vrot.slane %v1516, 7
        %v1519 = vshll.u32 %v1509, 16
        %v1521 = vor.u32 %v1518, %v1519
        %v1523 = vld [vmem:[#allocation2 + $0x10] sm:$0xf]
        %v1524 = vsel %vm1466, %v1521, %v1523
        %1525 = vst [vmem:[#allocation2 + $0x10] sm:$0xf] %v1524
        %v1526 = vrot.slane %v1519, 1
        %v1527 = vor.u32 %v1516, %v1526
        %1528 = vrot.lane.b32.xlu0 %v1527, 32
        %v1529 = vpop.permute.xlu0 %1528
        %v1531 = vld [vmem:[#allocation2 + $0x10] sm:$0xf]
        %v1532 = vsel %vm1477, %v1529, %v1531
        %1533 = vst [vmem:[#allocation2 + $0x10] sm:$0xf] %v1532
        %v1534 = vpack.c.bf16 %v1410, %v1410
        %v1536 = vrot.slane %v1534, 4
        %1537 = vrot.lane.b32.xlu0 %v1536, 16
        %v1538 = vpop.permute.xlu0 %1537
        %1540 = vst.msk [vmem:[#allocation2 + $0x10] sm:$0xf0] %vm1420, %v1538
        %v1542 = vshrl.u32 %v1534, 16
        %v1544 = vrot.slane %v1542, 3
        %v1545 = vshll.u32 %v1534, 16
        %v1547 = vrot.slane %v1545, 4
        %v1548 = vor.u32 %v1544, %v1547
        %v1550 = vld [vmem:[#allocation2 + $0x10] sm:$0xf0]
        %v1551 = vsel %vm1433, %v1548, %v1550
        %1552 = vst [vmem:[#allocation2 + $0x10] sm:$0xf0] %v1551
        %v1553 = vrot.slane %v1542, 4
        %v1554 = vrot.slane %v1545, 5
        %v1555 = vor.u32 %v1553, %v1554
        %1556 = vrot.lane.b32.xlu0 %v1555, 32
        %v1557 = vpop.permute.xlu0 %1556
        %v1559 = vld [vmem:[#allocation2 + $0x10] sm:$0xf0]
        %v1560 = vsel %vm1445, %v1557, %v1559
        %1561 = vst [vmem:[#allocation2 + $0x10] sm:$0xf0] %v1560
        %v1562 = vpack.c.bf16 %v1411, %v1411
        %1564 = vrot.lane.b32.xlu0 %v1562, 16
        %v1565 = vpop.permute.xlu0 %1564
        %1567 = vst.msk [vmem:[#allocation2 + $0x18] sm:$0xf] %vm1454, %v1565
        %v1569 = vshrl.u32 %v1562, 16
        %v1571 = vrot.slane %v1569, 7
        %v1572 = vshll.u32 %v1562, 16
        %v1574 = vor.u32 %v1571, %v1572
        %v1576 = vld [vmem:[#allocation2 + $0x18] sm:$0xf]
        %v1577 = vsel %vm1466, %v1574, %v1576
        %1578 = vst [vmem:[#allocation2 + $0x18] sm:$0xf] %v1577
        %v1579 = vrot.slane %v1572, 1
        %v1580 = vor.u32 %v1569, %v1579
        %1581 = vrot.lane.b32.xlu0 %v1580, 32
        %v1582 = vpop.permute.xlu0 %1581
        %v1584 = vld [vmem:[#allocation2 + $0x18] sm:$0xf]
        %v1585 = vsel %vm1477, %v1582, %v1584
        %1586 = vst [vmem:[#allocation2 + $0x18] sm:$0xf] %v1585
        %v1587 = vpack.c.bf16 %v1412, %v1412
        %v1589 = vrot.slane %v1587, 4
        %1590 = vrot.lane.b32.xlu0 %v1589, 16
        %v1591 = vpop.permute.xlu0 %1590
        %1593 = vst.msk [vmem:[#allocation2 + $0x18] sm:$0xf0] %vm1420, %v1591
        %v1595 = vshrl.u32 %v1587, 16
        %v1597 = vrot.slane %v1595, 3
        %v1598 = vshll.u32 %v1587, 16
        %v1600 = vrot.slane %v1598, 4
        %v1601 = vor.u32 %v1597, %v1600
        %v1603 = vld [vmem:[#allocation2 + $0x18] sm:$0xf0]
        %v1604 = vsel %vm1433, %v1601, %v1603
        %1605 = vst [vmem:[#allocation2 + $0x18] sm:$0xf0] %v1604
        %v1606 = vrot.slane %v1595, 4
        %v1607 = vrot.slane %v1598, 5
        %v1608 = vor.u32 %v1606, %v1607
        %1609 = vrot.lane.b32.xlu0 %v1608, 32
        %v1610 = vpop.permute.xlu0 %1609
        %v1612 = vld [vmem:[#allocation2 + $0x18] sm:$0xf0]
        %v1613 = vsel %vm1445, %v1610, %v1612
        %1614 = vst [vmem:[#allocation2 + $0x18] sm:$0xf0] %v1613
        %v1615 = vpack.c.bf16 %v1413, %v1413
        %1617 = vrot.lane.b32.xlu0 %v1615, 16
        %v1618 = vpop.permute.xlu0 %1617
        %1620 = vst.msk [vmem:[#allocation2 + $0x20] sm:$0xf] %vm1454, %v1618
        %v1622 = vshrl.u32 %v1615, 16
        %v1624 = vrot.slane %v1622, 7
        %v1625 = vshll.u32 %v1615, 16
        %v1627 = vor.u32 %v1624, %v1625
        %v1629 = vld [vmem:[#allocation2 + $0x20] sm:$0xf]
        %v1630 = vsel %vm1466, %v1627, %v1629
        %1631 = vst [vmem:[#allocation2 + $0x20] sm:$0xf] %v1630
        %v1632 = vrot.slane %v1625, 1
        %v1633 = vor.u32 %v1622, %v1632
        %1634 = vrot.lane.b32.xlu0 %v1633, 32
        %v1635 = vpop.permute.xlu0 %1634
        %v1637 = vld [vmem:[#allocation2 + $0x20] sm:$0xf]
        %v1638 = vsel %vm1477, %v1635, %v1637
        %1639 = vst [vmem:[#allocation2 + $0x20] sm:$0xf] %v1638
        %v1640 = vld [vmem:[#allocation2] sm:$0xff]
        %v1641 = vld [vmem:[#allocation2 + $0x8] sm:$0xff]
        %v1642 = vld [vmem:[#allocation2 + $0x10] sm:$0xff]
        %v1643 = vld [vmem:[#allocation2 + $0x18] sm:$0xff]
        %v1644 = vld [vmem:[%s3] sm:$0xf]
        %v1645 = vld [vmem:[%s3 + $0x4] sm:$0xf]
        %v1646 = vld [vmem:[%s3 + $0x8] sm:$0xf]
        %v1647 = vld [vmem:[%s3 + $0xc] sm:$0xf]
        %v1648 = vld [vmem:[%s3 + $0x10] sm:$0xf]
        %v1649 = vld [vmem:[%s3 + $0x14] sm:$0xf]
        %v1650 = vld [vmem:[#allocation2] sm:$0xf0]
        %v1651 = vld [vmem:[#allocation2 + $0x20] sm:$0xf]
        %s1652 = scalar_lea.vmem %s3, 24
        %v1653 = vld [vmem:[%s1652] sm:$0xf]
        %v1654 = vld [vmem:[%s1652 + $0x4] sm:$0xf]
        %v1655 = vld [vmem:[%s1652 + $0x8] sm:$0xf]
        %v1656 = vld [vmem:[%s1652 + $0xc] sm:$0xf]
        %v1657 = vld [vmem:[%s1652 + $0x10] sm:$0xf]
        %v1658 = vld [vmem:[%s1652 + $0x14] sm:$0xf]
        %vm1664 = vcmask 1043456
        %v1665 = vrot.slane %v1650, 4
        %v1666 = vrot.slane %v1641, 4
        %v1667 = vsel %vm1664, %v1665, %v1666
        %v1668 = vrot.slane %v1642, 4
        %v1669 = vsel %vm1664, %v1666, %v1668
        %v1670 = vrot.slane %v1643, 4
        %v1671 = vsel %vm1664, %v1668, %v1670
        %v1672 = vrot.slane %v1651, 4
        %v1673 = vsel %vm1664, %v1670, %v1672
        %v1680 = vunpack.c.l.b16 %v1653
        %v1681 = vunpack.c.l.b16 %v1654
        %v1682 = vunpack.c.l.b16 %v1655
        %v1683 = vunpack.c.l.b16 %v1656
        %v1684 = vunpack.c.l.b16 %v1657
        %v1685 = vunpack.c.l.b16 %v1658
        %v1686 = vpack.c.b16 %v1681, %v1680
        %v1687 = vpack.c.b16 %v1683, %v1682
        %v1688 = vpack.c.b16 %v1685, %v1684
        %v1693 = vsel %vm331, %v1667, 0
        %v1696 = vsel %vm331, %v1669, 0
        %v1699 = vsel %vm331, %v1671, 0
        %v1702 = vsel %vm331, %v1673, 0
        %1704 = vmatprep.subr.bf16.mxu0 0
        %1705 = vmatpush1.bf16.msra.mxu0 %v1686
        %1706 = vmatprep.subr.bf16.mxu0 0
        %1707 = vmatpush1.bf16.msra.mxu0 %v1687
        %1708 = vmatprep.subr.bf16.mxu0 0
        %1709 = vmatpush1.bf16.msra.mxu0 %v1688
        %1710 = vmatprep.subr.bf16.mxu0 0
        %1711 = vmatpush1.bf16.msra.mxu0 0
        %1712 = vmatprep.subr.bf16.mxu0 0
        %1713 = vmatpush1.bf16.msra.mxu0 0
        %1714 = vmatprep.subr.bf16.mxu0 0
        %1715 = vmatpush1.bf16.msra.mxu0 0
        %1716 = vmatprep.subr.bf16.mxu0 0
        %1717 = vmatpush1.bf16.msra.mxu0 0
        %1718 = vmatprep.subr.bf16.mxu0 0
        %1719 = vmatpush1.bf16.msra.mxu0 0
        %1720 = vmatprep.subr.bf16.mxu0 0
        %1721 = vmatpush1.bf16.msra.mxu0 0
        %1722 = vmatprep.subr.bf16.mxu0 0
        %1723 = vmatpush1.bf16.msra.mxu0 0
        %1724 = vmatprep.subr.bf16.mxu0 0
        %1725 = vmatpush1.bf16.msra.mxu0 0
        %1726 = vmatprep.subr.bf16.mxu0 0
        %1727 = vmatpush1.bf16.msra.mxu0 0
        %1728 = vmatprep.subr.bf16.mxu0 0
        %1729 = vmatpush1.bf16.msra.mxu0 0
        %1730 = vmatprep.subr.bf16.mxu0 0
        %1731 = vmatpush1.bf16.msra.mxu0 0
        %1732 = vmatprep.subr.bf16.mxu0 0
        %1733 = vmatpush1.bf16.msra.mxu0 0
        %1734 = vmatprep.subr.bf16.mxu0 0
        %1735 = vmatpush1.bf16.msra.mxu0 0
        %1736 = vmatprep.mubr.bf16.mxu0 0
        %1737 = vmatmul.mubr.bf16.gmra.mrb[0].mxu0 %v1693
        %v1738 = vpop.f32.mrb[0].mxu0
        %v1739 = vadd.f32 0.0, %v1738
        %v1740 = vpop.f32.mrb[0].mxu0
        %v1741 = vpop.f32.mrb[0].mxu0
        %v1742 = vadd.f32 0.0, %v1741
        %v1743 = vpop.f32.mrb[0].mxu0
        %1744 = vmatprep.mubr.bf16.mxu0 0
        %1745 = vmatmul.mubr.bf16.gmra.mrb[0].mxu0 %v1696
        %v1746 = vpop.f32.mrb[0].mxu0
        %v1747 = vadd.f32 0.0, %v1746
        %v1748 = vpop.f32.mrb[0].mxu0
        %v1749 = vpop.f32.mrb[0].mxu0
        %v1750 = vadd.f32 0.0, %v1749
        %v1751 = vpop.f32.mrb[0].mxu0
        %1752 = vmatprep.mubr.bf16.mxu0 0
        %1753 = vmatmul.mubr.bf16.gmra.mrb[0].mxu0 %v1699
        %v1754 = vpop.f32.mrb[0].mxu0
        %v1755 = vadd.f32 0.0, %v1754
        %v1756 = vpop.f32.mrb[0].mxu0
        %v1757 = vpop.f32.mrb[0].mxu0
        %v1758 = vadd.f32 0.0, %v1757
        %v1759 = vpop.f32.mrb[0].mxu0
        %1760 = vmatprep.mubr.bf16.mxu0 0
        %1761 = vmatmul.mubr.bf16.gmra.mrb[0].mxu0 %v1702
        %v1762 = vpop.f32.mrb[0].mxu0
        %v1763 = vadd.f32 0.0, %v1762
        %v1764 = vpop.f32.mrb[0].mxu0
        %v1765 = vpop.f32.mrb[0].mxu0
        %v1766 = vadd.f32 0.0, %v1765
        %v1767 = vpop.f32.mrb[0].mxu0
        %1768 = vdwg.mxu0
        %v1775 = vunpack.c.l.b16 %v1644
        %v1776 = vunpack.c.l.b16 %v1645
        %v1777 = vunpack.c.l.b16 %v1646
        %v1778 = vunpack.c.l.b16 %v1647
        %v1779 = vunpack.c.l.b16 %v1648
        %v1780 = vunpack.c.l.b16 %v1649
        %v1781 = vpack.c.b16 %v1776, %v1775
        %v1782 = vpack.c.b16 %v1778, %v1777
        %v1783 = vpack.c.b16 %v1780, %v1779
        %v1788 = vsel %vm331, %v1640, 0
        %v1791 = vsel %vm331, %v1641, 0
        %v1794 = vsel %vm331, %v1642, 0
        %v1797 = vsel %vm331, %v1643, 0
        %1799 = vmatprep.subr.bf16.mxu0 0
        %1800 = vmatpush1.bf16.msra.mxu0 %v1781
        %1801 = vmatprep.subr.bf16.mxu0 0
        %1802 = vmatpush1.bf16.msra.mxu0 %v1782
        %1803 = vmatprep.subr.bf16.mxu0 0
        %1804 = vmatpush1.bf16.msra.mxu0 %v1783
        %1805 = vmatprep.subr.bf16.mxu0 0
        %1806 = vmatpush1.bf16.msra.mxu0 0
        %1807 = vmatprep.subr.bf16.mxu0 0
        %1808 = vmatpush1.bf16.msra.mxu0 0
        %1809 = vmatprep.subr.bf16.mxu0 0
        %1810 = vmatpush1.bf16.msra.mxu0 0
        %1811 = vmatprep.subr.bf16.mxu0 0
        %1812 = vmatpush1.bf16.msra.mxu0 0
        %1813 = vmatprep.subr.bf16.mxu0 0
        %1814 = vmatpush1.bf16.msra.mxu0 0
        %1815 = vmatprep.subr.bf16.mxu0 0
        %1816 = vmatpush1.bf16.msra.mxu0 0
        %1817 = vmatprep.subr.bf16.mxu0 0
        %1818 = vmatpush1.bf16.msra.mxu0 0
        %1819 = vmatprep.subr.bf16.mxu0 0
        %1820 = vmatpush1.bf16.msra.mxu0 0
        %1821 = vmatprep.subr.bf16.mxu0 0
        %1822 = vmatpush1.bf16.msra.mxu0 0
        %1823 = vmatprep.subr.bf16.mxu0 0
        %1824 = vmatpush1.bf16.msra.mxu0 0
        %1825 = vmatprep.subr.bf16.mxu0 0
        %1826 = vmatpush1.bf16.msra.mxu0 0
        %1827 = vmatprep.subr.bf16.mxu0 0
        %1828 = vmatpush1.bf16.msra.mxu0 0
        %1829 = vmatprep.subr.bf16.mxu0 0
        %1830 = vmatpush1.bf16.msra.mxu0 0
        %1831 = vmatprep.mubr.bf16.mxu0 0
        %1832 = vmatmul.mubr.bf16.gmra.mrb[0].mxu0 %v1788
        %v1833 = vpop.f32.mrb[0].mxu0
        %v1834 = vadd.f32 %v1739, %v1833
        %v1835 = vpop.f32.mrb[0].mxu0
        %v1836 = vpop.f32.mrb[0].mxu0
        %v1837 = vadd.f32 %v1742, %v1836
        %v1838 = vpop.f32.mrb[0].mxu0
        %1839 = vmatprep.mubr.bf16.mxu0 0
        %1840 = vmatmul.mubr.bf16.gmra.mrb[0].mxu0 %v1791
        %v1841 = vpop.f32.mrb[0].mxu0
        %v1842 = vadd.f32 %v1747, %v1841
        %v1843 = vpop.f32.mrb[0].mxu0
        %v1844 = vpop.f32.mrb[0].mxu0
        %v1845 = vadd.f32 %v1750, %v1844
        %v1846 = vpop.f32.mrb[0].mxu0
        %1847 = vmatprep.mubr.bf16.mxu0 0
        %1848 = vmatmul.mubr.bf16.gmra.mrb[0].mxu0 %v1794
        %v1849 = vpop.f32.mrb[0].mxu0
        %v1850 = vadd.f32 %v1755, %v1849
        %v1851 = vpop.f32.mrb[0].mxu0
        %v1852 = vpop.f32.mrb[0].mxu0
        %v1853 = vadd.f32 %v1758, %v1852
        %v1854 = vpop.f32.mrb[0].mxu0
        %1855 = vmatprep.mubr.bf16.mxu0 0
        %1856 = vmatmul.mubr.bf16.gmra.mrb[0].mxu0 %v1797
        %v1857 = vpop.f32.mrb[0].mxu0
        %v1858 = vadd.f32 %v1763, %v1857
        %v1859 = vpop.f32.mrb[0].mxu0
        %v1860 = vpop.f32.mrb[0].mxu0
        %v1861 = vadd.f32 %v1766, %v1860
        %v1862 = vpop.f32.mrb[0].mxu0
        %1863 = vdwg.mxu0
        %v1864 = vld [vmem:[#allocation2 + $0x20] sm:$0xff]
        %s1865 = scalar_lea.vmem %s3, 48
        %v1866 = vld [vmem:[%s1865] sm:$0xf]
        %v1867 = vld [vmem:[%s1865 + $0x4] sm:$0xf]
        %v1868 = vld [vmem:[%s1865 + $0x8] sm:$0xf]
        %v1869 = vld [vmem:[%s1865 + $0xc] sm:$0xf]
        %v1870 = vld [vmem:[%s1865 + $0x10] sm:$0xf]
        %v1871 = vld [vmem:[%s1865 + $0x14] sm:$0xf]
        %v1878 = vunpack.c.l.b16 %v1866
        %v1879 = vunpack.c.l.b16 %v1867
        %v1880 = vunpack.c.l.b16 %v1868
        %v1881 = vunpack.c.l.b16 %v1869
        %v1882 = vunpack.c.l.b16 %v1870
        %v1883 = vunpack.c.l.b16 %v1871
        %v1884 = vpack.c.b16 %v1879, %v1878
        %v1885 = vpack.c.b16 %v1881, %v1880
        %v1886 = vpack.c.b16 %v1883, %v1882
        %v1891 = vsel %vm331, %v1864, 0
        %1893 = vmatprep.subr.bf16.mxu0 0
        %1894 = vmatpush1.bf16.msra.mxu0 %v1884
        %1895 = vmatprep.subr.bf16.mxu0 0
        %1896 = vmatpush1.bf16.msra.mxu0 %v1885
        %1897 = vmatprep.subr.bf16.mxu0 0
        %1898 = vmatpush1.bf16.msra.mxu0 %v1886
        %1899 = vmatprep.subr.bf16.mxu0 0
        %1900 = vmatpush1.bf16.msra.mxu0 0
        %1901 = vmatprep.subr.bf16.mxu0 0
        %1902 = vmatpush1.bf16.msra.mxu0 0
        %1903 = vmatprep.subr.bf16.mxu0 0
        %1904 = vmatpush1.bf16.msra.mxu0 0
        %1905 = vmatprep.subr.bf16.mxu0 0
        %1906 = vmatpush1.bf16.msra.mxu0 0
        %1907 = vmatprep.subr.bf16.mxu0 0
        %1908 = vmatpush1.bf16.msra.mxu0 0
        %1909 = vmatprep.subr.bf16.mxu0 0
        %1910 = vmatpush1.bf16.msra.mxu0 0
        %1911 = vmatprep.subr.bf16.mxu0 0
        %1912 = vmatpush1.bf16.msra.mxu0 0
        %1913 = vmatprep.subr.bf16.mxu0 0
        %1914 = vmatpush1.bf16.msra.mxu0 0
        %1915 = vmatprep.subr.bf16.mxu0 0
        %1916 = vmatpush1.bf16.msra.mxu0 0
        %1917 = vmatprep.subr.bf16.mxu0 0
        %1918 = vmatpush1.bf16.msra.mxu0 0
        %1919 = vmatprep.subr.bf16.mxu0 0
        %1920 = vmatpush1.bf16.msra.mxu0 0
        %1921 = vmatprep.subr.bf16.mxu0 0
        %1922 = vmatpush1.bf16.msra.mxu0 0
        %1923 = vmatprep.subr.bf16.mxu0 0
        %1924 = vmatpush1.bf16.msra.mxu0 0
        %1925 = vmatprep.mubr.bf16.mxu0 0
        %1926 = vmatmul.mubr.bf16.gmra.mrb[0].mxu0 %v1791
        %v1927 = vpop.f32.mrb[0].mxu0
        %v1928 = vadd.f32 0.0, %v1927
        %v1929 = vpop.f32.mrb[0].mxu0
        %v1930 = vpop.f32.mrb[0].mxu0
        %v1931 = vadd.f32 0.0, %v1930
        %v1932 = vpop.f32.mrb[0].mxu0
        %1933 = vmatprep.mubr.bf16.mxu0 0
        %1934 = vmatmul.mubr.bf16.gmra.mrb[0].mxu0 %v1794
        %v1935 = vpop.f32.mrb[0].mxu0
        %v1936 = vadd.f32 0.0, %v1935
        %v1937 = vpop.f32.mrb[0].mxu0
        %v1938 = vpop.f32.mrb[0].mxu0
        %v1939 = vadd.f32 0.0, %v1938
        %v1940 = vpop.f32.mrb[0].mxu0
        %1941 = vmatprep.mubr.bf16.mxu0 0
        %1942 = vmatmul.mubr.bf16.gmra.mrb[0].mxu0 %v1797
        %v1943 = vpop.f32.mrb[0].mxu0
        %v1944 = vadd.f32 0.0, %v1943
        %v1945 = vpop.f32.mrb[0].mxu0
        %v1946 = vpop.f32.mrb[0].mxu0
        %v1947 = vadd.f32 0.0, %v1946
        %v1948 = vpop.f32.mrb[0].mxu0
        %1949 = vmatprep.mubr.bf16.mxu0 0
        %1950 = vmatmul.mubr.bf16.gmra.mrb[0].mxu0 %v1891
        %v1951 = vpop.f32.mrb[0].mxu0
        %v1952 = vadd.f32 0.0, %v1951
        %v1953 = vpop.f32.mrb[0].mxu0
        %v1954 = vpop.f32.mrb[0].mxu0
        %v1955 = vadd.f32 0.0, %v1954
        %v1956 = vpop.f32.mrb[0].mxu0
        %1957 = vdwg.mxu0
        %v1958 = vadd.f32 %v1834, %v1928
        %v1959 = vadd.f32 %v1837, %v1931
        %v1960 = vadd.f32 %v1842, %v1936
        %v1961 = vadd.f32 %v1845, %v1939
        %v1962 = vadd.f32 %v1850, %v1944
        %v1963 = vadd.f32 %v1853, %v1947
        %v1964 = vadd.f32 %v1858, %v1952
        %v1965 = vadd.f32 %v1861, %v1955
        %v1966 = vld [vmem:[%s4] sm:$0x1]
        %v1968 = vlaneseq
        %v1969 = vshrl.u32 %v1968, 7
        %v1970 = vsub.s32 0, %v1969
        %v1971 = vrot.slane %v1966, %v1970
        %v1973 = vadd.f32 %v1958, %v1971
        %v1974 = vadd.f32 %v1959, %v1971
        %v1975 = vadd.f32 %v1960, %v1971
        %v1976 = vadd.f32 %v1961, %v1971
        %v1977 = vadd.f32 %v1962, %v1971
        %v1978 = vadd.f32 %v1963, %v1971
        %v1979 = vadd.f32 %v1964, %v1971
        %v1980 = vadd.f32 %v1965, %v1971
        %v1981 = vmax.f32 %v1973, 0.0
        %v1982 = vmax.f32 %v1974, 0.0
        %v1983 = vmax.f32 %v1975, 0.0
        %v1984 = vmax.f32 %v1976, 0.0
        %v1985 = vmax.f32 %v1977, 0.0
        %v1986 = vmax.f32 %v1978, 0.0
        %v1987 = vmax.f32 %v1979, 0.0
        %v1988 = vmax.f32 %v1980, 0.0
        %vm1989 = vcmask 261120
        %1990 = vst.msk [vmem:[#allocation5] sm:$0xff] %vm1989, %v1981
        %1991 = vst.msk [vmem:[#allocation5 + $0x8] sm:$0xff] %vm1989, %v1982
        %1992 = vst.msk [vmem:[#allocation5 + $0x10] sm:$0xff] %vm1989, %v1983
        %1993 = vst.msk [vmem:[#allocation5 + $0x18] sm:$0xff] %vm1989, %v1984
        %1994 = vst.msk [vmem:[#allocation5 + $0x20] sm:$0xff] %vm1989, %v1985
        %1995 = vst.msk [vmem:[#allocation5 + $0x28] sm:$0xff] %vm1989, %v1986
        %1996 = vst.msk [vmem:[#allocation5 + $0x30] sm:$0xff] %vm1989, %v1987
        %1997 = vst.msk [vmem:[#allocation5 + $0x38] sm:$0xff] %vm1989, %v1988
        %v1998 = vld [vmem:[#allocation5] ss:$2 sm:$0xff]
        %s1999 = scalar_lea.vmem [#allocation5], 16
        %v2000 = vld [vmem:[%s1999] ss:$2 sm:$0xff]
        %s2001 = scalar_lea.vmem [#allocation5], 32
        %v2002 = vld [vmem:[%s2001] ss:$2 sm:$0xff]
        %s2003 = scalar_lea.vmem [#allocation5], 48
        %v2004 = vld [vmem:[%s2003] ss:$2 sm:$0xff]
        %s2005 = scalar_lea.vmem [#allocation5], 1
        %v2006 = vld [vmem:[%s2005] ss:$2 sm:$0xff]
        %s2007 = scalar_lea.vmem [#allocation5], 17
        %v2008 = vld [vmem:[%s2007] ss:$2 sm:$0xff]
        %s2009 = scalar_lea.vmem [#allocation5], 33
        %v2010 = vld [vmem:[%s2009] ss:$2 sm:$0xff]
        %s2011 = scalar_lea.vmem [#allocation5], 49
        %v2012 = vld [vmem:[%s2011] ss:$2 sm:$0xff]
        %v2013 = vmax.f32 %v1998, %v2006
        %v2014 = vmax.f32 %v2000, %v2008
        %v2015 = vmax.f32 %v2002, %v2010
        %v2016 = vmax.f32 %v2004, %v2012
        %v2021 = vrot.slane %v2013, 4
        %v2022 = vrot.slane %v2014, 4
        %v2023 = vsel %vm514, %v2021, %v2022
        %v2024 = vrot.slane %v2015, 4
        %v2025 = vsel %vm514, %v2022, %v2024
        %v2026 = vrot.slane %v2016, 4
        %v2027 = vsel %vm514, %v2024, %v2026
        %v2032 = vmax.f32 %v2013, %v2023
        %v2033 = vmax.f32 %v2014, %v2025
        %v2034 = vmax.f32 %v2015, %v2027
        %v2035 = vmax.f32 %v2016, %v2026
        %v2036 = vpack.c.bf16 %v2032, %v2032
        %v2038 = vunpack.c.l.b16 %v2036
        %v2039 = vpack.c.b16 %v2038, %v2038
        %v2040 = vrot.slane %v2039, 6
        %2041 = vrot.lane.b32.xlu0 %v2040, 32
        %v2042 = vpop.permute.xlu0 %2041
        %vm2044 = vcmask 519426
        %2045 = vst.msk [vmem:[#allocation3] sm:$0xc] %vm2044, %v2042
        %v2047 = vshrl.u32 %v2039, 16
        %v2049 = vrot.slane %v2047, 5
        %v2050 = vshll.u32 %v2039, 16
        %v2052 = vrot.slane %v2050, 6
        %v2053 = vor.u32 %v2049, %v2052
        %vm2055 = vcmask 257026
        %vm2056 = vsmask.f32 7946
        %vm2057 = vmand %vm2055, %vm2056
        %v2058 = vld [vmem:[#allocation3] sm:$0xc]
        %v2059 = vsel %vm2057, %v2053, %v2058
        %2060 = vst [vmem:[#allocation3] sm:$0xc] %v2059
        %v2061 = vrot.slane %v2047, 6
        %v2062 = vrot.slane %v2050, 7
        %v2063 = vor.u32 %v2061, %v2062
        %2064 = vrot.lane.b32.xlu0 %v2063, 64
        %v2065 = vpop.permute.xlu0 %2064
        %vm2067 = vcmask 781826
        %vm2068 = vmand %vm2067, %vm1476
        %v2069 = vld [vmem:[#allocation3] sm:$0xc]
        %v2070 = vsel %vm2068, %v2065, %v2069
        %2071 = vst [vmem:[#allocation3] sm:$0xc] %v2070
        %v2072 = vpack.c.bf16 %v2033, %v2033
        %v2074 = vunpack.c.l.b16 %v2072
        %v2075 = vpack.c.b16 %v2074, %v2074
        %2076 = vrot.lane.b32.xlu0 %v2075, 32
        %v2077 = vpop.permute.xlu0 %2076
        %vm2079 = vcmask 517376
        %2080 = vst.msk [vmem:[#allocation3 + $0x4] sm:$0x3] %vm2079, %v2077
        %v2082 = vshrl.u32 %v2075, 16
        %v2084 = vrot.slane %v2082, 7
        %v2085 = vshll.u32 %v2075, 16
        %v2087 = vor.u32 %v2084, %v2085
        %vm2089 = vcmask 254976
        %vm2090 = vmand %vm2089, %vm1465
        %v2091 = vld [vmem:[#allocation3 + $0x4] sm:$0x3]
        %v2092 = vsel %vm2090, %v2087, %v2091
        %2093 = vst [vmem:[#allocation3 + $0x4] sm:$0x3] %v2092
        %v2094 = vrot.slane %v2082, 4
        %v2095 = vrot.slane %v2085, 5
        %v2096 = vor.u32 %v2094, %v2095
        %v2097 = vrot.slane %v2096, 4
        %2098 = vrot.lane.b32.xlu0 %v2097, 64
        %v2099 = vpop.permute.xlu0 %2098
        %vm2101 = vcmask 779776
        %vm2102 = vsmask.f32 1280
        %vm2103 = vmand %vm2101, %vm2102
        %v2104 = vld [vmem:[#allocation3 + $0x4] sm:$0x3]
        %v2105 = vsel %vm2103, %v2099, %v2104
        %2106 = vst [vmem:[#allocation3 + $0x4] sm:$0x3] %v2105
        %v2107 = vpack.c.bf16 %v2034, %v2034
        %v2109 = vunpack.c.l.b16 %v2107
        %v2110 = vpack.c.b16 %v2109, %v2109
        %v2111 = vrot.slane %v2110, 6
        %2112 = vrot.lane.b32.xlu0 %v2111, 32
        %v2113 = vpop.permute.xlu0 %2112
        %2115 = vst.msk [vmem:[#allocation3 + $0x4] sm:$0xc] %vm2044, %v2113
        %v2117 = vshrl.u32 %v2110, 16
        %v2119 = vrot.slane %v2117, 5
        %v2120 = vshll.u32 %v2110, 16
        %v2122 = vrot.slane %v2120, 6
        %v2123 = vor.u32 %v2119, %v2122
        %v2125 = vld [vmem:[#allocation3 + $0x4] sm:$0xc]
        %v2126 = vsel %vm2057, %v2123, %v2125
        %2127 = vst [vmem:[#allocation3 + $0x4] sm:$0xc] %v2126
        %v2128 = vrot.slane %v2117, 6
        %v2129 = vrot.slane %v2120, 7
        %v2130 = vor.u32 %v2128, %v2129
        %2131 = vrot.lane.b32.xlu0 %v2130, 64
        %v2132 = vpop.permute.xlu0 %2131
        %v2134 = vld [vmem:[#allocation3 + $0x4] sm:$0xc]
        %v2135 = vsel %vm2068, %v2132, %v2134
        %2136 = vst [vmem:[#allocation3 + $0x4] sm:$0xc] %v2135
        %v2137 = vpack.c.bf16 %v2035, %v2035
        %v2139 = vunpack.c.l.b16 %v2137
        %v2140 = vpack.c.b16 %v2139, %v2139
        %2141 = vrot.lane.b32.xlu0 %v2140, 32
        %v2142 = vpop.permute.xlu0 %2141
        %2144 = vst.msk [vmem:[#allocation3 + $0x8] sm:$0x3] %vm2079, %v2142
        %v2146 = vshrl.u32 %v2140, 16
        %v2148 = vrot.slane %v2146, 7
        %v2149 = vshll.u32 %v2140, 16
        %v2151 = vor.u32 %v2148, %v2149
        %v2153 = vld [vmem:[#allocation3 + $0x8] sm:$0x3]
        %v2154 = vsel %vm2090, %v2151, %v2153
        %2155 = vst [vmem:[#allocation3 + $0x8] sm:$0x3] %v2154
        %v2156 = vrot.slane %v2146, 4
        %v2157 = vrot.slane %v2149, 5
        %v2158 = vor.u32 %v2156, %v2157
        %v2159 = vrot.slane %v2158, 4
        %2160 = vrot.lane.b32.xlu0 %v2159, 64
        %v2161 = vpop.permute.xlu0 %2160
        %v2163 = vld [vmem:[#allocation3 + $0x8] sm:$0x3]
        %v2164 = vsel %vm2103, %v2161, %v2163
        %2165 = vst [vmem:[#allocation3 + $0x8] sm:$0x3] %v2164
        %v2166 = vld [vmem:[#allocation3] sm:$0xf]
        %v2167 = vld [vmem:[#allocation3 + $0x4] sm:$0xf]
        %v2168 = vld [vmem:[%s5] sm:$0xf]
        %v2169 = vld [vmem:[%s5 + $0x4] sm:$0xf]
        %v2170 = vld [vmem:[%s5 + $0x8] sm:$0xf]
        %v2171 = vld [vmem:[%s5 + $0xc] sm:$0xf]
        %v2172 = vld [vmem:[%s5 + $0x10] sm:$0xf]
        %v2173 = vld [vmem:[%s5 + $0x14] sm:$0xf]
        %v2174 = vld [vmem:[%s5 + $0x18] sm:$0xf]
        %v2175 = vld [vmem:[%s5 + $0x1c] sm:$0xf]
        %v2176 = vld [vmem:[%s5 + $0x20] sm:$0xf]
        %v2177 = vld [vmem:[%s5 + $0x24] sm:$0xf]
        %v2178 = vld [vmem:[%s5 + $0x28] sm:$0xf]
        %v2179 = vld [vmem:[%s5 + $0x2c] sm:$0xf]
        %v2180 = vld [vmem:[#allocation3] sm:$0xc]
        %v2181 = vld [vmem:[#allocation3 + $0x8] sm:$0x3]
        %s2182 = scalar_lea.vmem %s5, 48
        %v2183 = vld [vmem:[%s2182] sm:$0xf]
        %v2184 = vld [vmem:[%s2182 + $0x4] sm:$0xf]
        %v2185 = vld [vmem:[%s2182 + $0x8] sm:$0xf]
        %v2186 = vld [vmem:[%s2182 + $0xc] sm:$0xf]
        %v2187 = vld [vmem:[%s2182 + $0x10] sm:$0xf]
        %v2188 = vld [vmem:[%s2182 + $0x14] sm:$0xf]
        %v2189 = vld [vmem:[%s2182 + $0x18] sm:$0xf]
        %v2190 = vld [vmem:[%s2182 + $0x1c] sm:$0xf]
        %v2191 = vld [vmem:[%s2182 + $0x20] sm:$0xf]
        %v2192 = vld [vmem:[%s2182 + $0x24] sm:$0xf]
        %v2193 = vld [vmem:[%s2182 + $0x28] sm:$0xf]
        %v2194 = vld [vmem:[%s2182 + $0x2c] sm:$0xf]
        %v2198 = vunpack.c.l.b16 %v2180
        %v2199 = vunpack.c.l.b16 %v2167
        %v2200 = vunpack.c.l.b16 %v2181
        %v2201 = vpack.c.b16 %v2199, %v2198
        %v2202 = vpack.c.b16 %v2200, %v2200
        %vm2203 = vcmask 1045504
        %v2204 = vrot.slane %v2201, 2
        %v2205 = vrot.slane %v2202, 2
        %v2206 = vsel %vm2203, %v2204, %v2205
        %v2219 = vunpack.c.l.b16 %v2183
        %v2220 = vunpack.c.l.b16 %v2184
        %v2221 = vunpack.c.l.b16 %v2185
        %v2222 = vunpack.c.l.b16 %v2186
        %v2223 = vunpack.c.l.b16 %v2187
        %v2224 = vunpack.c.l.b16 %v2188
        %v2225 = vunpack.c.l.b16 %v2189
        %v2226 = vunpack.c.l.b16 %v2190
        %v2227 = vunpack.c.l.b16 %v2191
        %v2228 = vunpack.c.l.b16 %v2192
        %v2229 = vunpack.c.l.b16 %v2193
        %v2230 = vunpack.c.l.b16 %v2194
        %v2231 = vpack.c.b16 %v2220, %v2219
        %v2232 = vpack.c.b16 %v2222, %v2221
        %v2233 = vpack.c.b16 %v2224, %v2223
        %v2234 = vpack.c.b16 %v2226, %v2225
        %v2235 = vpack.c.b16 %v2228, %v2227
        %v2236 = vpack.c.b16 %v2230, %v2229
        %vm2243 = vcmask 785408
        %v2245 = vsel %vm2243, %v2206, 0
        %2247 = vmatprep.subr.bf16.mxu0 0
        %2248 = vmatpush1.bf16.msra.mxu0 %v2231
        %2249 = vmatprep.subr.bf16.mxu0 0
        %2250 = vmatpush1.bf16.msra.mxu0 %v2232
        %2251 = vmatprep.subr.bf16.mxu0 0
        %2252 = vmatpush1.bf16.msra.mxu0 %v2233
        %2253 = vmatprep.subr.bf16.mxu0 0
        %2254 = vmatpush1.bf16.msra.mxu0 %v2234
        %2255 = vmatprep.subr.bf16.mxu0 0
        %2256 = vmatpush1.bf16.msra.mxu0 %v2235
        %2257 = vmatprep.subr.bf16.mxu0 0
        %2258 = vmatpush1.bf16.msra.mxu0 %v2236
        %2259 = vmatprep.subr.bf16.mxu0 0
        %2260 = vmatpush1.bf16.msra.mxu0 0
        %2261 = vmatprep.subr.bf16.mxu0 0
        %2262 = vmatpush1.bf16.msra.mxu0 0
        %2263 = vmatprep.subr.bf16.mxu0 0
        %2264 = vmatpush1.bf16.msra.mxu0 0
        %2265 = vmatprep.subr.bf16.mxu0 0
        %2266 = vmatpush1.bf16.msra.mxu0 0
        %2267 = vmatprep.subr.bf16.mxu0 0
        %2268 = vmatpush1.bf16.msra.mxu0 0
        %2269 = vmatprep.subr.bf16.mxu0 0
        %2270 = vmatpush1.bf16.msra.mxu0 0
        %2271 = vmatprep.subr.bf16.mxu0 0
        %2272 = vmatpush1.bf16.msra.mxu0 0
        %2273 = vmatprep.subr.bf16.mxu0 0
        %2274 = vmatpush1.bf16.msra.mxu0 0
        %2275 = vmatprep.subr.bf16.mxu0 0
        %2276 = vmatpush1.bf16.msra.mxu0 0
        %2277 = vmatprep.subr.bf16.mxu0 0
        %2278 = vmatpush1.bf16.msra.mxu0 0
        %2279 = vmatprep.mubr.bf16.mxu0 0
        %2280 = vmatmul.mubr.bf16.gmra.mrb[0].mxu0 %v2245
        %v2281 = vpop.f32.mrb[0].mxu0
        %v2282 = vadd.f32 0.0, %v2281
        %v2283 = vpop.f32.mrb[0].mxu0
        %v2284 = vpop.f32.mrb[0].mxu0
        %v2285 = vadd.f32 0.0, %v2284
        %v2286 = vpop.f32.mrb[0].mxu0
        %2287 = vdwg.mxu0
        %v2289 = vunpack.c.l.b16 %v2166
        %v2290 = vpack.c.b16 %v2199, %v2289
        %v2303 = vunpack.c.l.b16 %v2168
        %v2304 = vunpack.c.l.b16 %v2169
        %v2305 = vunpack.c.l.b16 %v2170
        %v2306 = vunpack.c.l.b16 %v2171
        %v2307 = vunpack.c.l.b16 %v2172
        %v2308 = vunpack.c.l.b16 %v2173
        %v2309 = vunpack.c.l.b16 %v2174
        %v2310 = vunpack.c.l.b16 %v2175
        %v2311 = vunpack.c.l.b16 %v2176
        %v2312 = vunpack.c.l.b16 %v2177
        %v2313 = vunpack.c.l.b16 %v2178
        %v2314 = vunpack.c.l.b16 %v2179
        %v2315 = vpack.c.b16 %v2304, %v2303
        %v2316 = vpack.c.b16 %v2306, %v2305
        %v2317 = vpack.c.b16 %v2308, %v2307
        %v2318 = vpack.c.b16 %v2310, %v2309
        %v2319 = vpack.c.b16 %v2312, %v2311
        %v2320 = vpack.c.b16 %v2314, %v2313
        %v2328 = vsel %vm2243, %v2290, 0
        %2330 = vmatprep.subr.bf16.mxu0 0
        %2331 = vmatpush1.bf16.msra.mxu0 %v2315
        %2332 = vmatprep.subr.bf16.mxu0 0
        %2333 = vmatpush1.bf16.msra.mxu0 %v2316
        %2334 = vmatprep.subr.bf16.mxu0 0
        %2335 = vmatpush1.bf16.msra.mxu0 %v2317
        %2336 = vmatprep.subr.bf16.mxu0 0
        %2337 = vmatpush1.bf16.msra.mxu0 %v2318
        %2338 = vmatprep.subr.bf16.mxu0 0
        %2339 = vmatpush1.bf16.msra.mxu0 %v2319
        %2340 = vmatprep.subr.bf16.mxu0 0
        %2341 = vmatpush1.bf16.msra.mxu0 %v2320
        %2342 = vmatprep.subr.bf16.mxu0 0
        %2343 = vmatpush1.bf16.msra.mxu0 0
        %2344 = vmatprep.subr.bf16.mxu0 0
        %2345 = vmatpush1.bf16.msra.mxu0 0
        %2346 = vmatprep.subr.bf16.mxu0 0
        %2347 = vmatpush1.bf16.msra.mxu0 0
        %2348 = vmatprep.subr.bf16.mxu0 0
        %2349 = vmatpush1.bf16.msra.mxu0 0
        %2350 = vmatprep.subr.bf16.mxu0 0
        %2351 = vmatpush1.bf16.msra.mxu0 0
        %2352 = vmatprep.subr.bf16.mxu0 0
        %2353 = vmatpush1.bf16.msra.mxu0 0
        %2354 = vmatprep.subr.bf16.mxu0 0
        %2355 = vmatpush1.bf16.msra.mxu0 0
        %2356 = vmatprep.subr.bf16.mxu0 0
        %2357 = vmatpush1.bf16.msra.mxu0 0
        %2358 = vmatprep.subr.bf16.mxu0 0
        %2359 = vmatpush1.bf16.msra.mxu0 0
        %2360 = vmatprep.subr.bf16.mxu0 0
        %2361 = vmatpush1.bf16.msra.mxu0 0
        %2362 = vmatprep.mubr.bf16.mxu0 0
        %2363 = vmatmul.mubr.bf16.gmra.mrb[0].mxu0 %v2328
        %v2364 = vpop.f32.mrb[0].mxu0
        %v2365 = vadd.f32 %v2282, %v2364
        %v2366 = vpop.f32.mrb[0].mxu0
        %v2367 = vpop.f32.mrb[0].mxu0
        %v2368 = vadd.f32 %v2285, %v2367
        %v2369 = vpop.f32.mrb[0].mxu0
        %2370 = vdwg.mxu0
        %v2371 = vld [vmem:[#allocation3 + $0x8] sm:$0xf]
        %s2372 = scalar_lea.vmem %s5, 96
        %v2373 = vld [vmem:[%s2372] sm:$0xf]
        %v2374 = vld [vmem:[%s2372 + $0x4] sm:$0xf]
        %v2375 = vld [vmem:[%s2372 + $0x8] sm:$0xf]
        %v2376 = vld [vmem:[%s2372 + $0xc] sm:$0xf]
        %v2377 = vld [vmem:[%s2372 + $0x10] sm:$0xf]
        %v2378 = vld [vmem:[%s2372 + $0x14] sm:$0xf]
        %v2379 = vld [vmem:[%s2372 + $0x18] sm:$0xf]
        %v2380 = vld [vmem:[%s2372 + $0x1c] sm:$0xf]
        %v2381 = vld [vmem:[%s2372 + $0x20] sm:$0xf]
        %v2382 = vld [vmem:[%s2372 + $0x24] sm:$0xf]
        %v2383 = vld [vmem:[%s2372 + $0x28] sm:$0xf]
        %v2384 = vld [vmem:[%s2372 + $0x2c] sm:$0xf]
        %v2386 = vunpack.c.l.b16 %v2371
        %v2387 = vpack.c.b16 %v2386, %v2199
        %v2400 = vunpack.c.l.b16 %v2373
        %v2401 = vunpack.c.l.b16 %v2374
        %v2402 = vunpack.c.l.b16 %v2375
        %v2403 = vunpack.c.l.b16 %v2376
        %v2404 = vunpack.c.l.b16 %v2377
        %v2405 = vunpack.c.l.b16 %v2378
        %v2406 = vunpack.c.l.b16 %v2379
        %v2407 = vunpack.c.l.b16 %v2380
        %v2408 = vunpack.c.l.b16 %v2381
        %v2409 = vunpack.c.l.b16 %v2382
        %v2410 = vunpack.c.l.b16 %v2383
        %v2411 = vunpack.c.l.b16 %v2384
        %v2412 = vpack.c.b16 %v2401, %v2400
        %v2413 = vpack.c.b16 %v2403, %v2402
        %v2414 = vpack.c.b16 %v2405, %v2404
        %v2415 = vpack.c.b16 %v2407, %v2406
        %v2416 = vpack.c.b16 %v2409, %v2408
        %v2417 = vpack.c.b16 %v2411, %v2410
        %v2425 = vsel %vm2243, %v2387, 0
        %2427 = vmatprep.subr.bf16.mxu0 0
        %2428 = vmatpush1.bf16.msra.mxu0 %v2412
        %2429 = vmatprep.subr.bf16.mxu0 0
        %2430 = vmatpush1.bf16.msra.mxu0 %v2413
        %2431 = vmatprep.subr.bf16.mxu0 0
        %2432 = vmatpush1.bf16.msra.mxu0 %v2414
        %2433 = vmatprep.subr.bf16.mxu0 0
        %2434 = vmatpush1.bf16.msra.mxu0 %v2415
        %2435 = vmatprep.subr.bf16.mxu0 0
        %2436 = vmatpush1.bf16.msra.mxu0 %v2416
        %2437 = vmatprep.subr.bf16.mxu0 0
        %2438 = vmatpush1.bf16.msra.mxu0 %v2417
        %2439 = vmatprep.subr.bf16.mxu0 0
        %2440 = vmatpush1.bf16.msra.mxu0 0
        %2441 = vmatprep.subr.bf16.mxu0 0
        %2442 = vmatpush1.bf16.msra.mxu0 0
        %2443 = vmatprep.subr.bf16.mxu0 0
        %2444 = vmatpush1.bf16.msra.mxu0 0
        %2445 = vmatprep.subr.bf16.mxu0 0
        %2446 = vmatpush1.bf16.msra.mxu0 0
        %2447 = vmatprep.subr.bf16.mxu0 0
        %2448 = vmatpush1.bf16.msra.mxu0 0
        %2449 = vmatprep.subr.bf16.mxu0 0
        %2450 = vmatpush1.bf16.msra.mxu0 0
        %2451 = vmatprep.subr.bf16.mxu0 0
        %2452 = vmatpush1.bf16.msra.mxu0 0
        %2453 = vmatprep.subr.bf16.mxu0 0
        %2454 = vmatpush1.bf16.msra.mxu0 0
        %2455 = vmatprep.subr.bf16.mxu0 0
        %2456 = vmatpush1.bf16.msra.mxu0 0
        %2457 = vmatprep.subr.bf16.mxu0 0
        %2458 = vmatpush1.bf16.msra.mxu0 0
        %2459 = vmatprep.mubr.bf16.mxu0 0
        %2460 = vmatmul.mubr.bf16.gmra.mrb[0].mxu0 %v2425
        %v2461 = vpop.f32.mrb[0].mxu0
        %v2462 = vadd.f32 0.0, %v2461
        %v2463 = vpop.f32.mrb[0].mxu0
        %v2464 = vpop.f32.mrb[0].mxu0
        %v2465 = vadd.f32 0.0, %v2464
        %v2466 = vpop.f32.mrb[0].mxu0
        %2467 = vdwg.mxu0
        %v2468 = vadd.f32 %v2365, %v2462
        %v2469 = vadd.f32 %v2368, %v2465
        %v2470 = vld [vmem:[%s6] sm:$0x1]
        %v2472 = vlaneseq
        %v2473 = vshrl.u32 %v2472, 7
        %v2474 = vsub.s32 0, %v2473
        %v2475 = vrot.slane %v2470, %v2474
        %v2477 = vadd.f32 %v2468, %v2475
        %v2478 = vadd.f32 %v2469, %v2475
        %v2479 = vmax.f32 %v2477, 0.0
        %v2480 = vmax.f32 %v2478, 0.0
        %vm2481 = vcmask 523264
        %2482 = vst.msk [vmem:[#allocation6] sm:$0xff] %vm2481, %v2479
        %2483 = vst.msk [vmem:[#allocation6 + $0x8] sm:$0xff] %vm2481, %v2480
        %v2484 = vld [vmem:[#allocation6] ss:$2 sm:$0xff]
        %s2485 = scalar_lea.vmem [#allocation6], 1
        %v2486 = vld [vmem:[%s2485] ss:$2 sm:$0xff]
        %v2487 = vmax.f32 %v2484, %v2486
        %v2489 = vrot.slane %v2487, 2
        %v2491 = vmax.f32 %v2487, %v2489
        %v2492 = vpack.c.bf16 %v2491, %v2491
        %v2493 = vld [vmem:[%s7] sm:$0xf]
        %v2494 = vld [vmem:[%s7 + $0x4] sm:$0xf]
        %v2495 = vld [vmem:[%s7 + $0x8] sm:$0xf]
        %v2496 = vld [vmem:[%s7 + $0xc] sm:$0xf]
        %v2497 = vld [vmem:[%s7 + $0x10] sm:$0xf]
        %v2498 = vld [vmem:[%s7 + $0x14] sm:$0xf]
        %v2499 = vld [vmem:[%s7 + $0x18] sm:$0xf]
        %v2500 = vld [vmem:[%s7 + $0x1c] sm:$0xf]
        %s2501 = scalar_lea.vmem %s7, 32
        %v2502 = vld [vmem:[%s2501] sm:$0xf]
        %v2503 = vld [vmem:[%s2501 + $0x4] sm:$0xf]
        %v2504 = vld [vmem:[%s2501 + $0x8] sm:$0xf]
        %v2505 = vld [vmem:[%s2501 + $0xc] sm:$0xf]
        %v2506 = vld [vmem:[%s2501 + $0x10] sm:$0xf]
        %v2507 = vld [vmem:[%s2501 + $0x14] sm:$0xf]
        %v2508 = vld [vmem:[%s2501 + $0x18] sm:$0xf]
        %v2509 = vld [vmem:[%s2501 + $0x1c] sm:$0xf]
        %v2511 = vshrl.u32 %v2492, 16
        %v2521 = vunpack.c.l.b16 %v2502
        %v2522 = vunpack.c.l.b16 %v2503
        %v2523 = vunpack.c.l.b16 %v2504
        %v2524 = vunpack.c.l.b16 %v2505
        %v2525 = vunpack.c.l.b16 %v2506
        %v2526 = vunpack.c.l.b16 %v2507
        %v2527 = vunpack.c.l.b16 %v2508
        %v2528 = vunpack.c.l.b16 %v2509
        %v2529 = vpack.c.b16 %v2522, %v2521
        %v2530 = vpack.c.b16 %v2524, %v2523
        %v2531 = vpack.c.b16 %v2526, %v2525
        %v2532 = vpack.c.b16 %v2528, %v2527
        %v2538 = vsel %vm2481, %v2511, 0
        %2540 = vmatprep.subr.bf16.mxu0 0
        %2541 = vmatpush1.bf16.msra.mxu0 %v2529
        %2542 = vmatprep.subr.bf16.mxu0 0
        %2543 = vmatpush1.bf16.msra.mxu0 %v2530
        %2544 = vmatprep.subr.bf16.mxu0 0
        %2545 = vmatpush1.bf16.msra.mxu0 %v2531
        %2546 = vmatprep.subr.bf16.mxu0 0
        %2547 = vmatpush1.bf16.msra.mxu0 %v2532
        %2548 = vmatprep.subr.bf16.mxu0 0
        %2549 = vmatpush1.bf16.msra.mxu0 0
        %2550 = vmatprep.subr.bf16.mxu0 0
        %2551 = vmatpush1.bf16.msra.mxu0 0
        %2552 = vmatprep.subr.bf16.mxu0 0
        %2553 = vmatpush1.bf16.msra.mxu0 0
        %2554 = vmatprep.subr.bf16.mxu0 0
        %2555 = vmatpush1.bf16.msra.mxu0 0
        %2556 = vmatprep.subr.bf16.mxu0 0
        %2557 = vmatpush1.bf16.msra.mxu0 0
        %2558 = vmatprep.subr.bf16.mxu0 0
        %2559 = vmatpush1.bf16.msra.mxu0 0
        %2560 = vmatprep.subr.bf16.mxu0 0
        %2561 = vmatpush1.bf16.msra.mxu0 0
        %2562 = vmatprep.subr.bf16.mxu0 0
        %2563 = vmatpush1.bf16.msra.mxu0 0
        %2564 = vmatprep.subr.bf16.mxu0 0
        %2565 = vmatpush1.bf16.msra.mxu0 0
        %2566 = vmatprep.subr.bf16.mxu0 0
        %2567 = vmatpush1.bf16.msra.mxu0 0
        %2568 = vmatprep.subr.bf16.mxu0 0
        %2569 = vmatpush1.bf16.msra.mxu0 0
        %2570 = vmatprep.subr.bf16.mxu0 0
        %2571 = vmatpush1.bf16.msra.mxu0 0
        %2572 = vmatprep.mubr.bf16.mxu0 0
        %2573 = vmatmul.mubr.bf16.gmra.mrb[0].mxu0 %v2538
        %v2574 = vpop.f32.mrb[0].mxu0
        %v2575 = vadd.f32 0.0, %v2574
        %v2576 = vpop.f32.mrb[0].mxu0
        %v2577 = vpop.f32.mrb[0].mxu0
        %v2578 = vpop.f32.mrb[0].mxu0
        %2579 = vdwg.mxu0
        %v2588 = vunpack.c.l.b16 %v2493
        %v2589 = vunpack.c.l.b16 %v2494
        %v2590 = vunpack.c.l.b16 %v2495
        %v2591 = vunpack.c.l.b16 %v2496
        %v2592 = vunpack.c.l.b16 %v2497
        %v2593 = vunpack.c.l.b16 %v2498
        %v2594 = vunpack.c.l.b16 %v2499
        %v2595 = vunpack.c.l.b16 %v2500
        %v2596 = vpack.c.b16 %v2589, %v2588
        %v2597 = vpack.c.b16 %v2591, %v2590
        %v2598 = vpack.c.b16 %v2593, %v2592
        %v2599 = vpack.c.b16 %v2595, %v2594
        %v2604 = vsel %vm2481, %v2492, 0
        %2606 = vmatprep.subr.bf16.mxu0 0
        %2607 = vmatpush1.bf16.msra.mxu0 %v2596
        %2608 = vmatprep.subr.bf16.mxu0 0
        %2609 = vmatpush1.bf16.msra.mxu0 %v2597
        %2610 = vmatprep.subr.bf16.mxu0 0
        %2611 = vmatpush1.bf16.msra.mxu0 %v2598
        %2612 = vmatprep.subr.bf16.mxu0 0
        %2613 = vmatpush1.bf16.msra.mxu0 %v2599
        %2614 = vmatprep.subr.bf16.mxu0 0
        %2615 = vmatpush1.bf16.msra.mxu0 0
        %2616 = vmatprep.subr.bf16.mxu0 0
        %2617 = vmatpush1.bf16.msra.mxu0 0
        %2618 = vmatprep.subr.bf16.mxu0 0
        %2619 = vmatpush1.bf16.msra.mxu0 0
        %2620 = vmatprep.subr.bf16.mxu0 0
        %2621 = vmatpush1.bf16.msra.mxu0 0
        %2622 = vmatprep.subr.bf16.mxu0 0
        %2623 = vmatpush1.bf16.msra.mxu0 0
        %2624 = vmatprep.subr.bf16.mxu0 0
        %2625 = vmatpush1.bf16.msra.mxu0 0
        %2626 = vmatprep.subr.bf16.mxu0 0
        %2627 = vmatpush1.bf16.msra.mxu0 0
        %2628 = vmatprep.subr.bf16.mxu0 0
        %2629 = vmatpush1.bf16.msra.mxu0 0
        %2630 = vmatprep.subr.bf16.mxu0 0
        %2631 = vmatpush1.bf16.msra.mxu0 0
        %2632 = vmatprep.subr.bf16.mxu0 0
        %2633 = vmatpush1.bf16.msra.mxu0 0
        %2634 = vmatprep.subr.bf16.mxu0 0
        %2635 = vmatpush1.bf16.msra.mxu0 0
        %2636 = vmatprep.subr.bf16.mxu0 0
        %2637 = vmatpush1.bf16.msra.mxu0 0
        %2638 = vmatprep.mubr.bf16.mxu0 0
        %2639 = vmatmul.mubr.bf16.gmra.mrb[0].mxu0 %v2604
        %v2640 = vpop.f32.mrb[0].mxu0
        %v2641 = vadd.f32 %v2575, %v2640
        %v2642 = vpop.f32.mrb[0].mxu0
        %v2643 = vpop.f32.mrb[0].mxu0
        %v2644 = vpop.f32.mrb[0].mxu0
        %2645 = vdwg.mxu0
        %s2646 = scalar_lea.vmem %s7, 64
        %v2647 = vld [vmem:[%s2646] sm:$0xf]
        %v2648 = vld [vmem:[%s2646 + $0x4] sm:$0xf]
        %v2649 = vld [vmem:[%s2646 + $0x8] sm:$0xf]
        %v2650 = vld [vmem:[%s2646 + $0xc] sm:$0xf]
        %v2651 = vld [vmem:[%s2646 + $0x10] sm:$0xf]
        %v2652 = vld [vmem:[%s2646 + $0x14] sm:$0xf]
        %v2653 = vld [vmem:[%s2646 + $0x18] sm:$0xf]
        %v2654 = vld [vmem:[%s2646 + $0x1c] sm:$0xf]
        %v2656 = vrot.slane %v2492, 2
        %v2665 = vunpack.c.l.b16 %v2647
        %v2666 = vunpack.c.l.b16 %v2648
        %v2667 = vunpack.c.l.b16 %v2649
        %v2668 = vunpack.c.l.b16 %v2650
        %v2669 = vunpack.c.l.b16 %v2651
        %v2670 = vunpack.c.l.b16 %v2652
        %v2671 = vunpack.c.l.b16 %v2653
        %v2672 = vunpack.c.l.b16 %v2654
        %v2673 = vpack.c.b16 %v2666, %v2665
        %v2674 = vpack.c.b16 %v2668, %v2667
        %v2675 = vpack.c.b16 %v2670, %v2669
        %v2676 = vpack.c.b16 %v2672, %v2671
        %v2682 = vsel %vm2481, %v2656, 0
        %2684 = vmatprep.subr.bf16.mxu0 0
        %2685 = vmatpush1.bf16.msra.mxu0 %v2673
        %2686 = vmatprep.subr.bf16.mxu0 0
        %2687 = vmatpush1.bf16.msra.mxu0 %v2674
        %2688 = vmatprep.subr.bf16.mxu0 0
        %2689 = vmatpush1.bf16.msra.mxu0 %v2675
        %2690 = vmatprep.subr.bf16.mxu0 0
        %2691 = vmatpush1.bf16.msra.mxu0 %v2676
        %2692 = vmatprep.subr.bf16.mxu0 0
        %2693 = vmatpush1.bf16.msra.mxu0 0
        %2694 = vmatprep.subr.bf16.mxu0 0
        %2695 = vmatpush1.bf16.msra.mxu0 0
        %2696 = vmatprep.subr.bf16.mxu0 0
        %2697 = vmatpush1.bf16.msra.mxu0 0
        %2698 = vmatprep.subr.bf16.mxu0 0
        %2699 = vmatpush1.bf16.msra.mxu0 0
        %2700 = vmatprep.subr.bf16.mxu0 0
        %2701 = vmatpush1.bf16.msra.mxu0 0
        %2702 = vmatprep.subr.bf16.mxu0 0
        %2703 = vmatpush1.bf16.msra.mxu0 0
        %2704 = vmatprep.subr.bf16.mxu0 0
        %2705 = vmatpush1.bf16.msra.mxu0 0
        %2706 = vmatprep.subr.bf16.mxu0 0
        %2707 = vmatpush1.bf16.msra.mxu0 0
        %2708 = vmatprep.subr.bf16.mxu0 0
        %2709 = vmatpush1.bf16.msra.mxu0 0
        %2710 = vmatprep.subr.bf16.mxu0 0
        %2711 = vmatpush1.bf16.msra.mxu0 0
        %2712 = vmatprep.subr.bf16.mxu0 0
        %2713 = vmatpush1.bf16.msra.mxu0 0
        %2714 = vmatprep.subr.bf16.mxu0 0
        %2715 = vmatpush1.bf16.msra.mxu0 0
        %2716 = vmatprep.mubr.bf16.mxu0 0
        %2717 = vmatmul.mubr.bf16.gmra.mrb[0].mxu0 %v2682
        %v2718 = vpop.f32.mrb[0].mxu0
        %v2719 = vadd.f32 0.0, %v2718
        %v2720 = vpop.f32.mrb[0].mxu0
        %v2721 = vpop.f32.mrb[0].mxu0
        %v2722 = vpop.f32.mrb[0].mxu0
        %2723 = vdwg.mxu0
        %v2724 = vadd.f32 %v2641, %v2719
        %s2725 = scalar_lea.vmem %s7, 96
        %v2726 = vld [vmem:[%s2725] sm:$0xf]
        %v2727 = vld [vmem:[%s2725 + $0x4] sm:$0xf]
        %v2728 = vld [vmem:[%s2725 + $0x8] sm:$0xf]
        %v2729 = vld [vmem:[%s2725 + $0xc] sm:$0xf]
        %v2730 = vld [vmem:[%s2725 + $0x10] sm:$0xf]
        %v2731 = vld [vmem:[%s2725 + $0x14] sm:$0xf]
        %v2732 = vld [vmem:[%s2725 + $0x18] sm:$0xf]
        %v2733 = vld [vmem:[%s2725 + $0x1c] sm:$0xf]
        %v2734 = vrot.slane %v2511, 2
        %v2743 = vunpack.c.l.b16 %v2726
        %v2744 = vunpack.c.l.b16 %v2727
        %v2745 = vunpack.c.l.b16 %v2728
        %v2746 = vunpack.c.l.b16 %v2729
        %v2747 = vunpack.c.l.b16 %v2730
        %v2748 = vunpack.c.l.b16 %v2731
        %v2749 = vunpack.c.l.b16 %v2732
        %v2750 = vunpack.c.l.b16 %v2733
        %v2751 = vpack.c.b16 %v2744, %v2743
        %v2752 = vpack.c.b16 %v2746, %v2745
        %v2753 = vpack.c.b16 %v2748, %v2747
        %v2754 = vpack.c.b16 %v2750, %v2749
        %v2760 = vsel %vm2481, %v2734, 0
        %2762 = vmatprep.subr.bf16.mxu0 0
        %2763 = vmatpush1.bf16.msra.mxu0 %v2751
        %2764 = vmatprep.subr.bf16.mxu0 0
        %2765 = vmatpush1.bf16.msra.mxu0 %v2752
        %2766 = vmatprep.subr.bf16.mxu0 0
        %2767 = vmatpush1.bf16.msra.mxu0 %v2753
        %2768 = vmatprep.subr.bf16.mxu0 0
        %2769 = vmatpush1.bf16.msra.mxu0 %v2754
        %2770 = vmatprep.subr.bf16.mxu0 0
        %2771 = vmatpush1.bf16.msra.mxu0 0
        %2772 = vmatprep.subr.bf16.mxu0 0
        %2773 = vmatpush1.bf16.msra.mxu0 0
        %2774 = vmatprep.subr.bf16.mxu0 0
        %2775 = vmatpush1.bf16.msra.mxu0 0
        %2776 = vmatprep.subr.bf16.mxu0 0
        %2777 = vmatpush1.bf16.msra.mxu0 0
        %2778 = vmatprep.subr.bf16.mxu0 0
        %2779 = vmatpush1.bf16.msra.mxu0 0
        %2780 = vmatprep.subr.bf16.mxu0 0
        %2781 = vmatpush1.bf16.msra.mxu0 0
        %2782 = vmatprep.subr.bf16.mxu0 0
        %2783 = vmatpush1.bf16.msra.mxu0 0
        %2784 = vmatprep.subr.bf16.mxu0 0
        %2785 = vmatpush1.bf16.msra.mxu0 0
        %2786 = vmatprep.subr.bf16.mxu0 0
        %2787 = vmatpush1.bf16.msra.mxu0 0
        %2788 = vmatprep.subr.bf16.mxu0 0
        %2789 = vmatpush1.bf16.msra.mxu0 0
        %2790 = vmatprep.subr.bf16.mxu0 0
        %2791 = vmatpush1.bf16.msra.mxu0 0
        %2792 = vmatprep.subr.bf16.mxu0 0
        %2793 = vmatpush1.bf16.msra.mxu0 0
        %2794 = vmatprep.mubr.bf16.mxu0 0
        %2795 = vmatmul.mubr.bf16.gmra.mrb[0].mxu0 %v2760
        %v2796 = vpop.f32.mrb[0].mxu0
        %v2797 = vadd.f32 0.0, %v2796
        %v2798 = vpop.f32.mrb[0].mxu0
        %v2799 = vpop.f32.mrb[0].mxu0
        %v2800 = vpop.f32.mrb[0].mxu0
        %2801 = vdwg.mxu0
        %v2802 = vadd.f32 %v2724, %v2797
        %v2803 = vld [vmem:[%s8] sm:$0x1]
        %v2804 = vadd.f32 %v2802, %v2803
        %v2805 = vxor.u32 %v2804, 2147483648
        %v2806 = vmul.f32 %v2805, 1.442695
        %v2807 = vpow.pop %v2806
        %v2808 = vadd.f32 %v2807, 1.0
        %v2809 = vrcp.pop %v2808
        %v2810 = vmul.f32 1.0, %v2809
        %2811 = vst [vmem:[%s324] sm:$0x1] %v2810
        %s2812 = sand.u32 %s225, 1
        %s2813 = scalar_lea.sflag [#allocation8], %s2812
        %s2814 = sand.u32 %s225, 1
        %s2815 = scalar_lea.vmem [#allocation7], %s2814
        // Predicated region
        $region57: #{simple_cnn_forward.1} parent=55 // pred_check
          %p2816 = pneg %p235
        $region58: #{simple_cnn_forward.1} parent=55 // pred_check_branch
          %2818 = sbr.rel (%p2816) target = $region60
        $region59: #{simple_cnn_forward.1} parent=55 // pred_region
          %s2820 = ssub.s32 16, 16
          %2821 = vsyncadd %s2813, %s2820
          %s2822 = smul.addr %s23, 16
          %s2823 = scalar_lea.hbm %s9, %s2822
          %s2825 = sshll.u32 %s2815, 4
          %s2826 = int_to_ptr.vmem [resolvable:$true] %s2825
          %2828 = dma.vmem_to_hbm [thread:$0]  %s2826, 16, %s2823, %s2813
        $region60: #{simple_cnn_forward.1} parent=55 // pred_fallthru
          _
      $region56: #{simple_cnn_forward.1} parent=5 // pred_fallthru
        _
      %p2829 = scmp.le.s32.totalorder 2, %s18
      // Predicated region
      $region61: #{simple_cnn_forward.1} parent=5 // pred_check
        %p2830 = pneg %p2829
      $region62: #{simple_cnn_forward.1} parent=5 // pred_check_branch
        %2832 = sbr.rel (%p2830) target = $region64
      $region63: #{simple_cnn_forward.1} parent=5 // pred_region
        %s2833 = ssub.s32 %s18, 2
        // Predicated region
        $region65: #{simple_cnn_forward.1} parent=63 // pred_check
          %p2834 = pneg %p241
        $region66: #{simple_cnn_forward.1} parent=63 // pred_check_branch
          %2836 = sbr.rel (%p2834) target = $region68
        $region67: #{simple_cnn_forward.1} parent=63 // pred_region
          %s2837 = sand.u32 %s226, 1
          %s2838 = scalar_lea.sflag [#allocation8], %s2837
          %s2839 = sand.u32 %s226, 1
          %s2840 = scalar_lea.vmem [#allocation7], %s2839
          %2841 = dma.done %s2838, 16
        $region68: #{simple_cnn_forward.1} parent=63 // pred_fallthru
          _
      $region64: #{simple_cnn_forward.1} parent=5 // pred_fallthru
        _
    $region6: #{simple_cnn_forward.1} parent=1 // loop_footer
      %s22 = sadd.s32 1, %s18
    $region7: #{simple_cnn_forward.1} parent=1 // loop_footer_branch
      %17 = sbr.rel target = $region3
    $region8: #{simple_cnn_forward.1} parent=1 // loop_exit
      _
    %2842 = vsyncpa [#allocation8], 1
    %s2843 = scalar_lea.sflag [#allocation8], 1
    %2844 = vsyncpa %s2843, 1

</llo_original>
